<compile_context>
chip_gen: v7x
topology: tpu7x:2x2x1
jax: 0.10.0
libtpu: 0.0.40
codegen_flags: <defaults>
</compile_context>

<pallas_src>
import functools

import jax
import jax.numpy as jnp
from jax.experimental import pallas as pl
from jax.experimental.pallas import tpu as pltpu


def _round_up(n, m):
    return (n + m - 1) // m * m


def _pick_tile_rows(h, w, target_rows=512):
    """Largest TH dividing H with TH*W <= target_rows and TH*W a sublane multiple."""
    th = max(1, min(h, max(1, target_rows // max(w, 1))))
    while th > 0 and (h % th or (th * w) % 8):
        th -= 1
    return th if th > 0 else h


def _aux_kernel(x_ref, w1_ref, scale_ref, bias_ref, w2_ref, b2_ref, out_ref,
                *, th, width):
    """One (batch b, row-strip h) grid step.

    x_ref:     (H+2, W+2, C_in_pad)  zero-padded NHWC image of batch b
                                     (resident across the h axis; compute dtype)
    w1_ref:    (9, C_in_pad, C_mid)  3x3 conv weight, tap-major (compute dtype)
    scale_ref: (1, C_mid) f32        folded BN scale: gamma / sqrt(var+eps)
    bias_ref:  (1, C_mid) f32        folded BN bias:  scale*b1 + beta - scale*mean
    w2_ref:    (C_mid, NC_pad)       1x1 conv weight (zero in pad columns)
    b2_ref:    (1, NC_pad) f32       1x1 conv bias   (zero in pad columns)
    out_ref:   (TH*W, NC_pad)        output strip (out dtype, lane-dense)
    """
    c_in = x_ref.shape[-1]
    c_mid = w1_ref.shape[-1]
    tm = th * width
    row0 = pl.multiple_of(pl.program_id(1) * th, th)

    # 3x3 conv: accumulate the nine taps on the MXU in f32.  The taps are
    # slices of the VMEM-resident image (no extra HBM traffic).
    acc = jnp.zeros((tm, c_mid), jnp.float32)
    for kh in range(3):
        for kw in range(3):
            xs = x_ref[pl.ds(row0 + kh, th), pl.ds(kw, width), :]
            xs = xs.reshape(tm, c_in)
            acc = acc + jnp.dot(xs, w1_ref[kh * 3 + kw],
                                preferred_element_type=jnp.float32)

    # Folded BatchNorm affine + ReLU (VPU epilogue).
    hidden = jnp.maximum(acc * scale_ref[...] + bias_ref[...], 0.0)
    # Dropout2d(0.1) is identity in eval mode (no-op).

    # 1x1 conv == channel matmul with a lane-padded N (unmasked lane-dense store).
    y = jnp.dot(hidden.astype(w2_ref.dtype), w2_ref[...],
                preferred_element_type=jnp.float32)
    out_ref[...] = (y + b2_ref[...]).astype(out_ref.dtype)


def aux_module_forward(x_nchw, params, *, compute_dtype=jnp.bfloat16,
                       out_dtype=jnp.bfloat16, tile_rows=None):
    """x_nchw: (B, C_in, H, W) float32. Returns (B, num_classes, H, W) float32.

    compute_dtype: matmul operand dtype (bf16 recommended on v6e/v7x; f32 exact).
    out_dtype:     kernel store dtype (bf16 halves the padded writeback).
    tile_rows:     rows of H per strip (TM = tile_rows * W); auto if None.
    """
    w1 = params["conv1_w"]            # (C_mid, C_in, 3, 3)  (PyTorch OIHW)
    b1 = params["conv1_b"]            # (C_mid,)
    gamma = params["bn_gamma"]        # (C_mid,)
    beta = params["bn_beta"]          # (C_mid,)
    mean = params["bn_mean"]          # (C_mid,)
    var = params["bn_var"]            # (C_mid,)
    eps = params["bn_eps"]
    w2 = params["conv2_w"]            # (NC, C_mid, 1, 1)
    b2 = params["conv2_b"]            # (NC,)

    B, C_in, H, W = x_nchw.shape
    C_mid = w1.shape[0]
    NC = w2.shape[0]

    C_in_pad = _round_up(C_in, 128)    # lane-dense channel axis / conv1 K per tap
    NC_pad = _round_up(NC, 128)        # lane-dense output / 1x1-conv N axis

    TH = int(tile_rows) if tile_rows is not None else _pick_tile_rows(H, W)
    if H % TH or ((TH * W) % 8 and TH * W != H * W):
        TH = H                         # fall back to one strip (full-dim block is always legal)
    TM = TH * W

    # --- wrapper-side glue: layout + single zero-pad + parameter folding ---
    # Cast BEFORE padding so only the compute-dtype slab is materialized.
    x = jnp.transpose(x_nchw, (0, 2, 3, 1)).astype(compute_dtype)        # (B,H,W,Cin)
    x = jnp.pad(x, ((0, 0), (1, 1), (1, 1), (0, C_in_pad - C_in)))       # (B,H+2,W+2,Cin_pad)

    # (C_mid, C_in, 3, 3) -> (kh, kw, C_in_pad, C_mid) -> (9, C_in_pad, C_mid)
    w1_k = jnp.transpose(w1, (2, 3, 1, 0))
    w1_k = jnp.pad(w1_k, ((0, 0), (0, 0), (0, C_in_pad - C_in), (0, 0)))
    w1_k = w1_k.reshape(9, C_in_pad, C_mid).astype(compute_dtype)

    # Fold BN into a per-channel affine applied after conv1 (+ conv1 bias), in f32.
    scale = gamma / jnp.sqrt(var + eps)
    bias_eff = scale * b1 + beta - scale * mean
    scale2d = scale.reshape(1, C_mid).astype(jnp.float32)
    bias2d = bias_eff.reshape(1, C_mid).astype(jnp.float32)

    # 1x1 conv weight/bias, lane-padded to NC_pad (padded columns are zero).
    w2_k = jnp.transpose(w2.reshape(NC, C_mid))                           # (C_mid, NC)
    w2_k = jnp.pad(w2_k, ((0, 0), (0, NC_pad - NC))).astype(compute_dtype)
    b2_k = jnp.pad(b2.reshape(1, NC), ((0, 0), (0, NC_pad - NC))).astype(jnp.float32)

    # --- VMEM budget (per generation): v5e default scoped 16 MiB (raise it),
    # v6e default 32 MiB, v7x physical 64 MiB (stay <= 48 MiB).
    cbytes = jnp.dtype(compute_dtype).itemsize
    obytes = jnp.dtype(out_dtype).itemsize
    x_block = (H + 2) * (W + 2) * C_in_pad * cbytes
    w_bytes = 9 * C_in_pad * C_mid * cbytes + C_mid * NC_pad * cbytes
    out_block = TM * NC_pad * obytes
    acc_bytes = TM * C_mid * 4
    est = 2 * (x_block + w_bytes + out_block) + 4 * acc_bytes + (4 << 20)
    vmem_limit = int(min(max(est, 32 << 20), 48 << 20))

    grid = (B, H // TH)

    out_flat = pl.pallas_call(
        functools.partial(_aux_kernel, th=TH, width=W),
        out_shape=jax.ShapeDtypeStruct((B, H * W, NC_pad), out_dtype),
        grid_spec=pltpu.PrefetchScalarGridSpec(
            num_scalar_prefetch=0,
            grid=grid,
            in_specs=[
                # Whole padded image of batch b: index_map ignores the h axis,
                # so it is DMA'd once per batch element and reused across strips.
                pl.BlockSpec((None, H + 2, W + 2, C_in_pad),
                             lambda b, h: (b, 0, 0, 0)),
                # Grid-invariant weights / folded-BN params (fetched once).
                pl.BlockSpec((9, C_in_pad, C_mid), lambda b, h: (0, 0, 0)),
                pl.BlockSpec((1, C_mid), lambda b, h: (0, 0)),
                pl.BlockSpec((1, C_mid), lambda b, h: (0, 0)),
                pl.BlockSpec((C_mid, NC_pad), lambda b, h: (0, 0)),
                pl.BlockSpec((1, NC_pad), lambda b, h: (0, 0)),
            ],
            out_specs=pl.BlockSpec((None, TM, NC_pad), lambda b, h: (b, h, 0)),
        ),
        compiler_params=pltpu.CompilerParams(
            dimension_semantics=("parallel", "parallel"),
            vmem_limit_bytes=vmem_limit),
    )(x, w1_k, scale2d, bias2d, w2_k, b2_k)

    # Drop lane padding, un-flatten, and go back to NCHW/f32 outside the kernel.
    out_nhwc = out_flat[..., :NC].reshape(B, H, W, NC)
    return jnp.transpose(out_nhwc, (0, 3, 1, 2)).astype(jnp.float32)


def _reference_forward(x_nchw, params):
    """Pure-JAX reference (eval-mode) for correctness checking."""
    w1, b1 = params["conv1_w"], params["conv1_b"]
    gamma, beta = params["bn_gamma"], params["bn_beta"]
    mean, var, eps = params["bn_mean"], params["bn_var"], params["bn_eps"]
    w2, b2 = params["conv2_w"], params["conv2_b"]

    y = jax.lax.conv_general_dilated(
        x_nchw, w1, window_strides=(1, 1), padding=((1, 1), (1, 1)),
        dimension_numbers=("NCHW", "OIHW", "NCHW"),
        precision=jax.lax.Precision.HIGHEST)
    y = y + b1[None, :, None, None]
    y = (y - mean[None, :, None, None]) / jnp.sqrt(var[None, :, None, None] + eps)
    y = y * gamma[None, :, None, None] + beta[None, :, None, None]
    y = jnp.maximum(y, 0.0)
    # Dropout2d: identity in eval mode.
    y = jax.lax.conv_general_dilated(
        y, w2, window_strides=(1, 1), padding=((0, 0), (0, 0)),
        dimension_numbers=("NCHW", "OIHW", "NCHW"),
        precision=jax.lax.Precision.HIGHEST)
    return y + b2[None, :, None, None]


def make_params(key, in_planes, num_classes, c_mid=256):
    ks = jax.random.split(key, 8)
    return {
        "conv1_w": 0.05 * jax.random.normal(ks[0], (c_mid, in_planes, 3, 3), jnp.float32),
        "conv1_b": 0.05 * jax.random.normal(ks[1], (c_mid,), jnp.float32),
        "bn_gamma": 1.0 + 0.1 * jax.random.normal(ks[2], (c_mid,), jnp.float32),
        "bn_beta": 0.1 * jax.random.normal(ks[3], (c_mid,), jnp.float32),
        "bn_mean": 0.1 * jax.random.normal(ks[4], (c_mid,), jnp.float32),
        "bn_var": jnp.abs(1.0 + 0.1 * jax.random.normal(ks[5], (c_mid,), jnp.float32)),
        "bn_eps": 1e-5,
        "conv2_w": 0.05 * jax.random.normal(ks[6], (num_classes, c_mid, 1, 1), jnp.float32),
        "conv2_b": 0.05 * jax.random.normal(ks[7], (num_classes,), jnp.float32),
    }


if __name__ == "__main__":
    key = jax.random.PRNGKey(0)
    k_x, k_p = jax.random.split(key)

    B, C_in, H, W = 2, 4, 16, 16
    num_classes = 19

    x = jax.random.normal(k_x, (B, C_in, H, W), jnp.float32)
    params = make_params(k_p, C_in, num_classes)

    ref = jax.block_until_ready(_reference_forward(x, params))

    # 1) f32 operand / f32 store path: tight check against the reference.
    out_f32 = jax.block_until_ready(
        aux_module_forward(x, params, compute_dtype=jnp.float32,
                           out_dtype=jnp.float32))
    assert out_f32.shape == (B, num_classes, H, W), out_f32.shape
    err_f32 = float(jnp.max(jnp.abs(out_f32 - ref)))
    assert jnp.allclose(out_f32, ref, atol=2e-3, rtol=2e-3), err_f32

    # 2) Default bf16 operand / bf16 lane-dense store path (fast path on v6e/v7x).
    out_bf16 = jax.block_until_ready(aux_module_forward(x, params))
    err_bf16 = float(jnp.max(jnp.abs(out_bf16 - ref)))
    assert jnp.allclose(out_bf16, ref, atol=2e-2, rtol=2e-2), err_bf16

    # 3) Explicit multi-strip tiling (exercises the dynamic row-offset tap slicing).
    out_strip = jax.block_until_ready(
        aux_module_forward(x, params, tile_rows=4))
    err_strip = float(jnp.max(jnp.abs(out_strip - ref)))
    assert jnp.allclose(out_strip, ref, atol=2e-2, rtol=2e-2), err_strip

    print("KERNEL_OK")
</pallas_src>

<mosaic_0001>
module attributes {stable_mosaic.version = 11 : i64} {
  func.func @_aux_kernel(%arg0: i32, %arg1: i32, %arg2: memref<1x18x18x128xf32, #tpu.memory_space<vmem>>, %arg3: memref<9x128x256xf32, #tpu.memory_space<vmem>>, %arg4: memref<1x256xf32, #tpu.memory_space<vmem>>, %arg5: memref<1x256xf32, #tpu.memory_space<vmem>>, %arg6: memref<256x128xf32, #tpu.memory_space<vmem>>, %arg7: memref<1x128xf32, #tpu.memory_space<vmem>>, %arg8: memref<1x256x128xf32, #tpu.memory_space<vmem>>) attributes {dimension_semantics = [#tpu.dimension_semantics<parallel>, #tpu.dimension_semantics<parallel>], iteration_bounds = array<i64: 2, 1>, scalar_prefetch = 0 : i64, scratch_operands = 0 : i64, tpu.core_type = #tpu.core_type<tc>, window_params = [{transform_indices = @transform_0, window_bounds = array<i64: 1, 18, 18, 128>}, {pipeline_mode = #tpu.pipeline_mode<synchronous>, transform_indices = @transform_1, window_bounds = array<i64: 9, 128, 256>}, {pipeline_mode = #tpu.pipeline_mode<synchronous>, transform_indices = @transform_2, window_bounds = array<i64: 1, 256>}, {pipeline_mode = #tpu.pipeline_mode<synchronous>, transform_indices = @transform_3, window_bounds = array<i64: 1, 256>}, {pipeline_mode = #tpu.pipeline_mode<synchronous>, transform_indices = @transform_4, window_bounds = array<i64: 256, 128>}, {pipeline_mode = #tpu.pipeline_mode<synchronous>, transform_indices = @transform_5, window_bounds = array<i64: 1, 128>}, {transform_indices = @transform_6, window_bounds = array<i64: 1, 256, 128>}]} {
    %c16_i32 = arith.constant 16 : i32
    %0 = arith.muli %arg1, %c16_i32 : i32
    %1 = tpu.assume_multiple %0, 16 : i32
    %cst = arith.constant 0.000000e+00 : f32
    %2 = vector.broadcast %cst : f32 to vector<256x256xf32>
    %c0_i32 = arith.constant 0 : i32
    %3 = arith.addi %1, %c0_i32 : i32
    %c0 = arith.constant 0 : index
    %4 = arith.index_cast %3 : i32 to index
    %c0_0 = arith.constant 0 : index
    %c0_1 = arith.constant 0 : index
    %5 = vector.load %arg2[%c0, %4, %c0_0, %c0_1] : memref<1x18x18x128xf32, #tpu.memory_space<vmem>>, vector<1x16x16x128xf32>
    %6 = vector.shape_cast %5 : vector<1x16x16x128xf32> to vector<16x16x128xf32>
    %7 = vector.shape_cast %6 : vector<16x16x128xf32> to vector<256x128xf32>
    %c0_2 = arith.constant 0 : index
    %c0_3 = arith.constant 0 : index
    %c0_4 = arith.constant 0 : index
    %8 = vector.load %arg3[%c0_2, %c0_3, %c0_4] : memref<9x128x256xf32, #tpu.memory_space<vmem>>, vector<1x128x256xf32>
    %9 = vector.shape_cast %8 : vector<1x128x256xf32> to vector<128x256xf32>
    %cst_5 = arith.constant dense<0.000000e+00> : vector<256x256xf32>
    %10 = tpu.matmul %7, %9, %cst_5 {dimension_numbers = #tpu.dot_dimension_numbers<[1], [0], [0], [1], [0, 0, 1, 1], [], []>} : vector<256x128xf32>, vector<128x256xf32>, vector<256x256xf32> -> vector<256x256xf32>
    %11 = arith.addf %2, %10 : vector<256x256xf32>
    %c0_i32_6 = arith.constant 0 : i32
    %12 = arith.addi %1, %c0_i32_6 : i32
    %c0_7 = arith.constant 0 : index
    %13 = arith.index_cast %12 : i32 to index
    %c1 = arith.constant 1 : index
    %c0_8 = arith.constant 0 : index
    %14 = vector.load %arg2[%c0_7, %13, %c1, %c0_8] : memref<1x18x18x128xf32, #tpu.memory_space<vmem>>, vector<1x16x16x128xf32>
    %15 = vector.shape_cast %14 : vector<1x16x16x128xf32> to vector<16x16x128xf32>
    %16 = vector.shape_cast %15 : vector<16x16x128xf32> to vector<256x128xf32>
    %c1_9 = arith.constant 1 : index
    %c0_10 = arith.constant 0 : index
    %c0_11 = arith.constant 0 : index
    %17 = vector.load %arg3[%c1_9, %c0_10, %c0_11] : memref<9x128x256xf32, #tpu.memory_space<vmem>>, vector<1x128x256xf32>
    %18 = vector.shape_cast %17 : vector<1x128x256xf32> to vector<128x256xf32>
    %cst_12 = arith.constant dense<0.000000e+00> : vector<256x256xf32>
    %19 = tpu.matmul %16, %18, %cst_12 {dimension_numbers = #tpu.dot_dimension_numbers<[1], [0], [0], [1], [0, 0, 1, 1], [], []>} : vector<256x128xf32>, vector<128x256xf32>, vector<256x256xf32> -> vector<256x256xf32>
    %20 = arith.addf %11, %19 : vector<256x256xf32>
    %c0_i32_13 = arith.constant 0 : i32
    %21 = arith.addi %1, %c0_i32_13 : i32
    %c0_14 = arith.constant 0 : index
    %22 = arith.index_cast %21 : i32 to index
    %c2 = arith.constant 2 : index
    %c0_15 = arith.constant 0 : index
    %23 = vector.load %arg2[%c0_14, %22, %c2, %c0_15] : memref<1x18x18x128xf32, #tpu.memory_space<vmem>>, vector<1x16x16x128xf32>
    %24 = vector.shape_cast %23 : vector<1x16x16x128xf32> to vector<16x16x128xf32>
    %25 = vector.shape_cast %24 : vector<16x16x128xf32> to vector<256x128xf32>
    %c2_16 = arith.constant 2 : index
    %c0_17 = arith.constant 0 : index
    %c0_18 = arith.constant 0 : index
    %26 = vector.load %arg3[%c2_16, %c0_17, %c0_18] : memref<9x128x256xf32, #tpu.memory_space<vmem>>, vector<1x128x256xf32>
    %27 = vector.shape_cast %26 : vector<1x128x256xf32> to vector<128x256xf32>
    %cst_19 = arith.constant dense<0.000000e+00> : vector<256x256xf32>
    %28 = tpu.matmul %25, %27, %cst_19 {dimension_numbers = #tpu.dot_dimension_numbers<[1], [0], [0], [1], [0, 0, 1, 1], [], []>} : vector<256x128xf32>, vector<128x256xf32>, vector<256x256xf32> -> vector<256x256xf32>
    %29 = arith.addf %20, %28 : vector<256x256xf32>
    %c1_i32 = arith.constant 1 : i32
    %30 = arith.addi %1, %c1_i32 : i32
    %c0_20 = arith.constant 0 : index
    %31 = arith.index_cast %30 : i32 to index
    %c0_21 = arith.constant 0 : index
    %c0_22 = arith.constant 0 : index
    %32 = vector.load %arg2[%c0_20, %31, %c0_21, %c0_22] : memref<1x18x18x128xf32, #tpu.memory_space<vmem>>, vector<1x16x16x128xf32>
    %33 = vector.shape_cast %32 : vector<1x16x16x128xf32> to vector<16x16x128xf32>
    %34 = vector.shape_cast %33 : vector<16x16x128xf32> to vector<256x128xf32>
    %c3 = arith.constant 3 : index
    %c0_23 = arith.constant 0 : index
    %c0_24 = arith.constant 0 : index
    %35 = vector.load %arg3[%c3, %c0_23, %c0_24] : memref<9x128x256xf32, #tpu.memory_space<vmem>>, vector<1x128x256xf32>
    %36 = vector.shape_cast %35 : vector<1x128x256xf32> to vector<128x256xf32>
    %cst_25 = arith.constant dense<0.000000e+00> : vector<256x256xf32>
    %37 = tpu.matmul %34, %36, %cst_25 {dimension_numbers = #tpu.dot_dimension_numbers<[1], [0], [0], [1], [0, 0, 1, 1], [], []>} : vector<256x128xf32>, vector<128x256xf32>, vector<256x256xf32> -> vector<256x256xf32>
    %38 = arith.addf %29, %37 : vector<256x256xf32>
    %c1_i32_26 = arith.constant 1 : i32
    %39 = arith.addi %1, %c1_i32_26 : i32
    %c0_27 = arith.constant 0 : index
    %40 = arith.index_cast %39 : i32 to index
    %c1_28 = arith.constant 1 : index
    %c0_29 = arith.constant 0 : index
    %41 = vector.load %arg2[%c0_27, %40, %c1_28, %c0_29] : memref<1x18x18x128xf32, #tpu.memory_space<vmem>>, vector<1x16x16x128xf32>
    %42 = vector.shape_cast %41 : vector<1x16x16x128xf32> to vector<16x16x128xf32>
    %43 = vector.shape_cast %42 : vector<16x16x128xf32> to vector<256x128xf32>
    %c4 = arith.constant 4 : index
    %c0_30 = arith.constant 0 : index
    %c0_31 = arith.constant 0 : index
    %44 = vector.load %arg3[%c4, %c0_30, %c0_31] : memref<9x128x256xf32, #tpu.memory_space<vmem>>, vector<1x128x256xf32>
    %45 = vector.shape_cast %44 : vector<1x128x256xf32> to vector<128x256xf32>
    %cst_32 = arith.constant dense<0.000000e+00> : vector<256x256xf32>
    %46 = tpu.matmul %43, %45, %cst_32 {dimension_numbers = #tpu.dot_dimension_numbers<[1], [0], [0], [1], [0, 0, 1, 1], [], []>} : vector<256x128xf32>, vector<128x256xf32>, vector<256x256xf32> -> vector<256x256xf32>
    %47 = arith.addf %38, %46 : vector<256x256xf32>
    %c1_i32_33 = arith.constant 1 : i32
    %48 = arith.addi %1, %c1_i32_33 : i32
    %c0_34 = arith.constant 0 : index
    %49 = arith.index_cast %48 : i32 to index
    %c2_35 = arith.constant 2 : index
    %c0_36 = arith.constant 0 : index
    %50 = vector.load %arg2[%c0_34, %49, %c2_35, %c0_36] : memref<1x18x18x128xf32, #tpu.memory_space<vmem>>, vector<1x16x16x128xf32>
    %51 = vector.shape_cast %50 : vector<1x16x16x128xf32> to vector<16x16x128xf32>
    %52 = vector.shape_cast %51 : vector<16x16x128xf32> to vector<256x128xf32>
    %c5 = arith.constant 5 : index
    %c0_37 = arith.constant 0 : index
    %c0_38 = arith.constant 0 : index
    %53 = vector.load %arg3[%c5, %c0_37, %c0_38] : memref<9x128x256xf32, #tpu.memory_space<vmem>>, vector<1x128x256xf32>
    %54 = vector.shape_cast %53 : vector<1x128x256xf32> to vector<128x256xf32>
    %cst_39 = arith.constant dense<0.000000e+00> : vector<256x256xf32>
    %55 = tpu.matmul %52, %54, %cst_39 {dimension_numbers = #tpu.dot_dimension_numbers<[1], [0], [0], [1], [0, 0, 1, 1], [], []>} : vector<256x128xf32>, vector<128x256xf32>, vector<256x256xf32> -> vector<256x256xf32>
    %56 = arith.addf %47, %55 : vector<256x256xf32>
    %c2_i32 = arith.constant 2 : i32
    %57 = arith.addi %1, %c2_i32 : i32
    %c0_40 = arith.constant 0 : index
    %58 = arith.index_cast %57 : i32 to index
    %c0_41 = arith.constant 0 : index
    %c0_42 = arith.constant 0 : index
    %59 = vector.load %arg2[%c0_40, %58, %c0_41, %c0_42] : memref<1x18x18x128xf32, #tpu.memory_space<vmem>>, vector<1x16x16x128xf32>
    %60 = vector.shape_cast %59 : vector<1x16x16x128xf32> to vector<16x16x128xf32>
    %61 = vector.shape_cast %60 : vector<16x16x128xf32> to vector<256x128xf32>
    %c6 = arith.constant 6 : index
    %c0_43 = arith.constant 0 : index
    %c0_44 = arith.constant 0 : index
    %62 = vector.load %arg3[%c6, %c0_43, %c0_44] : memref<9x128x256xf32, #tpu.memory_space<vmem>>, vector<1x128x256xf32>
    %63 = vector.shape_cast %62 : vector<1x128x256xf32> to vector<128x256xf32>
    %cst_45 = arith.constant dense<0.000000e+00> : vector<256x256xf32>
    %64 = tpu.matmul %61, %63, %cst_45 {dimension_numbers = #tpu.dot_dimension_numbers<[1], [0], [0], [1], [0, 0, 1, 1], [], []>} : vector<256x128xf32>, vector<128x256xf32>, vector<256x256xf32> -> vector<256x256xf32>
    %65 = arith.addf %56, %64 : vector<256x256xf32>
    %c2_i32_46 = arith.constant 2 : i32
    %66 = arith.addi %1, %c2_i32_46 : i32
    %c0_47 = arith.constant 0 : index
    %67 = arith.index_cast %66 : i32 to index
    %c1_48 = arith.constant 1 : index
    %c0_49 = arith.constant 0 : index
    %68 = vector.load %arg2[%c0_47, %67, %c1_48, %c0_49] : memref<1x18x18x128xf32, #tpu.memory_space<vmem>>, vector<1x16x16x128xf32>
    %69 = vector.shape_cast %68 : vector<1x16x16x128xf32> to vector<16x16x128xf32>
    %70 = vector.shape_cast %69 : vector<16x16x128xf32> to vector<256x128xf32>
    %c7 = arith.constant 7 : index
    %c0_50 = arith.constant 0 : index
    %c0_51 = arith.constant 0 : index
    %71 = vector.load %arg3[%c7, %c0_50, %c0_51] : memref<9x128x256xf32, #tpu.memory_space<vmem>>, vector<1x128x256xf32>
    %72 = vector.shape_cast %71 : vector<1x128x256xf32> to vector<128x256xf32>
    %cst_52 = arith.constant dense<0.000000e+00> : vector<256x256xf32>
    %73 = tpu.matmul %70, %72, %cst_52 {dimension_numbers = #tpu.dot_dimension_numbers<[1], [0], [0], [1], [0, 0, 1, 1], [], []>} : vector<256x128xf32>, vector<128x256xf32>, vector<256x256xf32> -> vector<256x256xf32>
    %74 = arith.addf %65, %73 : vector<256x256xf32>
    %c2_i32_53 = arith.constant 2 : i32
    %75 = arith.addi %1, %c2_i32_53 : i32
    %c0_54 = arith.constant 0 : index
    %76 = arith.index_cast %75 : i32 to index
    %c2_55 = arith.constant 2 : index
    %c0_56 = arith.constant 0 : index
    %77 = vector.load %arg2[%c0_54, %76, %c2_55, %c0_56] : memref<1x18x18x128xf32, #tpu.memory_space<vmem>>, vector<1x16x16x128xf32>
    %78 = vector.shape_cast %77 : vector<1x16x16x128xf32> to vector<16x16x128xf32>
    %79 = vector.shape_cast %78 : vector<16x16x128xf32> to vector<256x128xf32>
    %c8 = arith.constant 8 : index
    %c0_57 = arith.constant 0 : index
    %c0_58 = arith.constant 0 : index
    %80 = vector.load %arg3[%c8, %c0_57, %c0_58] : memref<9x128x256xf32, #tpu.memory_space<vmem>>, vector<1x128x256xf32>
    %81 = vector.shape_cast %80 : vector<1x128x256xf32> to vector<128x256xf32>
    %cst_59 = arith.constant dense<0.000000e+00> : vector<256x256xf32>
    %82 = tpu.matmul %79, %81, %cst_59 {dimension_numbers = #tpu.dot_dimension_numbers<[1], [0], [0], [1], [0, 0, 1, 1], [], []>} : vector<256x128xf32>, vector<128x256xf32>, vector<256x256xf32> -> vector<256x256xf32>
    %83 = arith.addf %74, %82 : vector<256x256xf32>
    %c0_60 = arith.constant 0 : index
    %c0_61 = arith.constant 0 : index
    %84 = vector.load %arg4[%c0_60, %c0_61] : memref<1x256xf32, #tpu.memory_space<vmem>>, vector<1x256xf32>
    %85 = vector.broadcast %84 : vector<1x256xf32> to vector<256x256xf32>
    %86 = arith.mulf %83, %85 : vector<256x256xf32>
    %c0_62 = arith.constant 0 : index
    %c0_63 = arith.constant 0 : index
    %87 = vector.load %arg5[%c0_62, %c0_63] : memref<1x256xf32, #tpu.memory_space<vmem>>, vector<1x256xf32>
    %88 = vector.broadcast %87 : vector<1x256xf32> to vector<256x256xf32>
    %89 = arith.addf %86, %88 : vector<256x256xf32>
    %cst_64 = arith.constant 0.000000e+00 : f32
    %90 = vector.broadcast %cst_64 : f32 to vector<256x256xf32>
    %91 = arith.maximumf %89, %90 : vector<256x256xf32>
    %c0_65 = arith.constant 0 : index
    %c0_66 = arith.constant 0 : index
    %92 = vector.load %arg6[%c0_65, %c0_66] : memref<256x128xf32, #tpu.memory_space<vmem>>, vector<256x128xf32>
    %cst_67 = arith.constant dense<0.000000e+00> : vector<256x128xf32>
    %93 = tpu.matmul %91, %92, %cst_67 {dimension_numbers = #tpu.dot_dimension_numbers<[1], [0], [0], [1], [0, 0, 1, 1], [], []>} : vector<256x256xf32>, vector<256x128xf32>, vector<256x128xf32> -> vector<256x128xf32>
    %c0_68 = arith.constant 0 : index
    %c0_69 = arith.constant 0 : index
    %94 = vector.load %arg7[%c0_68, %c0_69] : memref<1x128xf32, #tpu.memory_space<vmem>>, vector<1x128xf32>
    %95 = vector.broadcast %94 : vector<1x128xf32> to vector<256x128xf32>
    %96 = arith.addf %93, %95 : vector<256x128xf32>
    %c0_70 = arith.constant 0 : index
    %c0_71 = arith.constant 0 : index
    %c0_72 = arith.constant 0 : index
    %97 = vector.load %arg8[%c0_70, %c0_71, %c0_72] : memref<1x256x128xf32, #tpu.memory_space<vmem>>, vector<1x256x128xf32>
    %98 = vector.shape_cast %97 : vector<1x256x128xf32> to vector<256x128xf32>
    %99 = vector.shape_cast %96 : vector<256x128xf32> to vector<1x256x128xf32>
    tpu.vector_store %arg8[%c0_70, %c0_71, %c0_72], %99 {strides = array<i32>} : memref<1x256x128xf32, #tpu.memory_space<vmem>>, vector<1x256x128xf32>,
    return
  }
  func.func @transform_0(%arg0: i32, %arg1: i32) -> (i32, i32, i32, i32) {
    %c0_i32 = arith.constant 0 : i32
    %c0_i32_0 = arith.constant 0 : i32
    %c0_i32_1 = arith.constant 0 : i32
    %c0_i32_2 = arith.constant 0 : i32
    return %arg0, %c0_i32, %c0_i32_0, %c0_i32_1 : i32, i32, i32, i32
  }
  func.func @transform_1(%arg0: i32, %arg1: i32) -> (i32, i32, i32) {
    %c0_i32 = arith.constant 0 : i32
    %c0_i32_0 = arith.constant 0 : i32
    %c0_i32_1 = arith.constant 0 : i32
    %c0_i32_2 = arith.constant 0 : i32
    return %c0_i32, %c0_i32_0, %c0_i32_1 : i32, i32, i32
  }
  func.func @transform_2(%arg0: i32, %arg1: i32) -> (i32, i32) {
    %c0_i32 = arith.constant 0 : i32
    %c0_i32_0 = arith.constant 0 : i32
    %c0_i32_1 = arith.constant 0 : i32
    return %c0_i32, %c0_i32_0 : i32, i32
  }
  func.func @transform_3(%arg0: i32, %arg1: i32) -> (i32, i32) {
    %c0_i32 = arith.constant 0 : i32
    %c0_i32_0 = arith.constant 0 : i32
    %c0_i32_1 = arith.constant 0 : i32
    return %c0_i32, %c0_i32_0 : i32, i32
  }
  func.func @transform_4(%arg0: i32, %arg1: i32) -> (i32, i32) {
    %c0_i32 = arith.constant 0 : i32
    %c0_i32_0 = arith.constant 0 : i32
    %c0_i32_1 = arith.constant 0 : i32
    return %c0_i32, %c0_i32_0 : i32, i32
  }
  func.func @transform_5(%arg0: i32, %arg1: i32) -> (i32, i32) {
    %c0_i32 = arith.constant 0 : i32
    %c0_i32_0 = arith.constant 0 : i32
    %c0_i32_1 = arith.constant 0 : i32
    return %c0_i32, %c0_i32_0 : i32, i32
  }
  func.func @transform_6(%arg0: i32, %arg1: i32) -> (i32, i32, i32) {
    %c0_i32 = arith.constant 0 : i32
    %c0_i32_0 = arith.constant 0 : i32
    return %arg0, %arg1, %c0_i32 : i32, i32, i32
  }
}

</mosaic_0001>

<llo_original>
// kernel: tpu_custom_call.1
$region0: #{tpu_custom_call.1}
  #allocation0 [shape = 'u32[]', space=smem, size = 0x4, offset = 0x4, fixed_abs, tag = 'smem constant byte address 0x4 - core index']
  #allocation1 [shape = 'u32[144,128]{1,0:T(1,128)}', space=vmem, size = 0x12000, scoped, tag = 'internal scratch']
  %s0 = inlined_call_operand.vmem [shape: f32[2,18,18,128], index: 0, kind: input, shape index: {}]
  %s1 = inlined_call_operand.hbm [shape: f32[9,128,256], index: 1, kind: input, shape index: {}]
  %s2 = inlined_call_operand.hbm [shape: f32[1,256], index: 2, kind: input, shape index: {}]
  %s3 = inlined_call_operand.hbm [shape: f32[1,256], index: 3, kind: input, shape index: {}]
  %s4 = inlined_call_operand.hbm [shape: f32[256,128], index: 4, kind: input, shape index: {}]
  %s5 = inlined_call_operand.hbm [shape: f32[1,128], index: 5, kind: input, shape index: {}]
  %s6 = inlined_call_operand.hbm [shape: f32[2,256,128], index: 6, kind: output, shape index: {}]
  %s7 = sld [smem:[#allocation0]]
  $region77: #{tpu_custom_call.1} parent=0
    _
  %s9 = ssub.s32 1, %s7
  %s10 = scalar_select 0, %s9, %s7
  $region1: #{tpu_custom_call.1} parent=0
    #allocation2 [shape = 'u8[1179648]{0}', space=vmem, size = 0x120000, scoped, tag = 'input window, operand 1, single buffered']
    #allocation3 [shape = 's32[2]{0}', space=sflag, size = 0x8, scoped, tag = 'scoped memory for tpu_custom_call.1']
    #allocation4 [shape = 's32[2]{0}', space=sflag, size = 0x8, scoped, tag = 'scoped memory for tpu_custom_call.1']
    #allocation5 [shape = 'u8[1024]{0}', space=vmem, size = 0x400, scoped, tag = 'input window, operand 2, single buffered']
    #allocation6 [shape = 's32[1]{0}', space=sflag, size = 0x4, scoped, tag = 'scoped memory for tpu_custom_call.1']
    #allocation7 [shape = 'u8[1024]{0}', space=vmem, size = 0x400, scoped, tag = 'input window, operand 3, single buffered']
    #allocation8 [shape = 'u8[131072]{0}', space=vmem, size = 0x20000, scoped, tag = 'input window, operand 4, single buffered']
    #allocation9 [shape = 's32[1]{0}', space=sflag, size = 0x4, scoped, tag = 'scoped memory for tpu_custom_call.1']
    #allocation10 [shape = 'u8[512]{0}', space=vmem, size = 0x400, scoped, tag = 'input window, operand 5, single buffered']
    #allocation11 [shape = 'u8[262144]{0}', space=vmem, size = 0x40000, scoped, tag = 'output window, operand 0']
    %11 = vsyncpa [#allocation3], 0
    %12 = vsyncpa [#allocation6], 0
    %13 = vsyncpa [#allocation9], 0
    %14 = vsyncpa [#allocation4], 0
    %s15 = scalar_lea.sflag [#allocation4], 1
    %16 = vsyncpa %s15, 0
    loop: start=0, step=1, limit=4
    $region2: #{tpu_custom_call.1} parent=1 // loop_pre_header
      _
    $region3: #{tpu_custom_call.1} parent=1 // loop_header
      %s18 = sphi 0, %s22
      %p19 = scmp.ge.s32.totalorder %s18, 4
      %s25 = sphi 0, %s37
      %s26 = sphi 0, %s33
      %s27 = sphi 0, %s25
      %s28 = sphi 0, %s26
      %s29 = sphi 0, %s27
      %s30 = sphi 0, %s28
      %s40 = sphi 0, %s42
      %s43 = sphi 0, %s40
      %s44 = sphi 0, %s43
      %s60 = sphi 0, %s44
      %s64 = sphi 0, %s64
      %s66 = sphi 0, %s64
      %s67 = sphi 0, %s66
      %s81 = sphi 0, %s67
      %s85 = sphi 0, %s85
      %s87 = sphi 0, %s85
      %s88 = sphi 0, %s87
      %s102 = sphi 0, %s88
      %s106 = sphi 0, %s106
      %s108 = sphi 0, %s106
      %s109 = sphi 0, %s108
      %s123 = sphi 0, %s109
      %s127 = sphi 0, %s127
      %s129 = sphi 0, %s127
      %s130 = sphi 0, %s129
      %s144 = sphi 0, %s130
      %s148 = sphi 0, %s148
      %s150 = sphi 0, %s148
      %s151 = sphi 0, %s150
      %s165 = sphi 0, %s151
      %s173 = sphi 0, %s175
      %s176 = sphi 0, %s173
      %s177 = sphi 0, %s176
      %s193 = sphi 0, %s177
    $region4: #{tpu_custom_call.1} parent=1 // loop_header_branch
      %21 = sbr.rel (%p19) target = $region8
    $region5: #{tpu_custom_call.1} parent=1 // loop_body
      %s23 = ssub.s32 %s18, 1
      %s24 = ssub.s32 %s18, 2
      %s31 = sadd.s32 1, %s26
      %p32 = scmp.ge.s32.totalorder %s31, 1
      %s33 = scalar_select %p32, 0, %s31
      %s34 = sadd.s32 1, %s25
      %s35 = scalar_select %p32, %s34, %s25
      %p36 = scmp.ge.s32.totalorder %s35, 2
      %s37 = scalar_select %p36, 0, %s35
      %s38 = ssub.s32 %s25, %s37
      %p39 = scmp.eq.s32.totalorder %s38, 0
      %s41 = sadd.s32 %s40, 1
      %s42 = scalar_select %p39, %s40, %s41
      %p45 = pneg %p39
      %p46 = scmp.eq.s32.totalorder %s18, 1
      %p47 = por %p45, %p46
      %p48 = scmp.ne.s32.totalorder %s40, %s43
      %p49 = scmp.eq.s32.totalorder %s18, 0
      %p50 = por %p48, %p49
      %p51 = scmp.ne.s32.totalorder %s40, %s43
      %p52 = scmp.eq.s32.totalorder %s23, 1
      %p53 = por %p51, %p52
      %p54 = scmp.ne.s32.totalorder %s43, %s44
      %p55 = scmp.eq.s32.totalorder %s23, 0
      %p56 = por %p54, %p55
      %p57 = scmp.ne.s32.totalorder %s43, %s44
      %p58 = scmp.eq.s32.totalorder %s24, 1
      %p59 = por %p57, %p58
      %p61 = scmp.ne.s32.totalorder %s44, %s60
      %p62 = scmp.eq.s32.totalorder %s24, 0
      %p63 = por %p61, %p62
      %s65 = sadd.s32 %s64, 1
      %p68 = scmp.eq.s32.totalorder %s18, 1
      %p69 = scmp.ne.s32.totalorder %s64, %s66
      %p70 = scmp.eq.s32.totalorder %s18, 0
      %p71 = por %p69, %p70
      %p72 = scmp.ne.s32.totalorder %s64, %s66
      %p73 = scmp.eq.s32.totalorder %s23, 1
      %p74 = por %p72, %p73
      %p75 = scmp.ne.s32.totalorder %s66, %s67
      %p76 = scmp.eq.s32.totalorder %s23, 0
      %p77 = por %p75, %p76
      %p78 = scmp.ne.s32.totalorder %s66, %s67
      %p79 = scmp.eq.s32.totalorder %s24, 1
      %p80 = por %p78, %p79
      %p82 = scmp.ne.s32.totalorder %s67, %s81
      %p83 = scmp.eq.s32.totalorder %s24, 0
      %p84 = por %p82, %p83
      %s86 = sadd.s32 %s85, 1
      %p89 = scmp.eq.s32.totalorder %s18, 1
      %p90 = scmp.ne.s32.totalorder %s85, %s87
      %p91 = scmp.eq.s32.totalorder %s18, 0
      %p92 = por %p90, %p91
      %p93 = scmp.ne.s32.totalorder %s85, %s87
      %p94 = scmp.eq.s32.totalorder %s23, 1
      %p95 = por %p93, %p94
      %p96 = scmp.ne.s32.totalorder %s87, %s88
      %p97 = scmp.eq.s32.totalorder %s23, 0
      %p98 = por %p96, %p97
      %p99 = scmp.ne.s32.totalorder %s87, %s88
      %p100 = scmp.eq.s32.totalorder %s24, 1
      %p101 = por %p99, %p100
      %p103 = scmp.ne.s32.totalorder %s88, %s102
      %p104 = scmp.eq.s32.totalorder %s24, 0
      %p105 = por %p103, %p104
      %s107 = sadd.s32 %s106, 1
      %p110 = scmp.eq.s32.totalorder %s18, 1
      %p111 = scmp.ne.s32.totalorder %s106, %s108
      %p112 = scmp.eq.s32.totalorder %s18, 0
      %p113 = por %p111, %p112
      %p114 = scmp.ne.s32.totalorder %s106, %s108
      %p115 = scmp.eq.s32.totalorder %s23, 1
      %p116 = por %p114, %p115
      %p117 = scmp.ne.s32.totalorder %s108, %s109
      %p118 = scmp.eq.s32.totalorder %s23, 0
      %p119 = por %p117, %p118
      %p120 = scmp.ne.s32.totalorder %s108, %s109
      %p121 = scmp.eq.s32.totalorder %s24, 1
      %p122 = por %p120, %p121
      %p124 = scmp.ne.s32.totalorder %s109, %s123
      %p125 = scmp.eq.s32.totalorder %s24, 0
      %p126 = por %p124, %p125
      %s128 = sadd.s32 %s127, 1
      %p131 = scmp.eq.s32.totalorder %s18, 1
      %p132 = scmp.ne.s32.totalorder %s127, %s129
      %p133 = scmp.eq.s32.totalorder %s18, 0
      %p134 = por %p132, %p133
      %p135 = scmp.ne.s32.totalorder %s127, %s129
      %p136 = scmp.eq.s32.totalorder %s23, 1
      %p137 = por %p135, %p136
      %p138 = scmp.ne.s32.totalorder %s129, %s130
      %p139 = scmp.eq.s32.totalorder %s23, 0
      %p140 = por %p138, %p139
      %p141 = scmp.ne.s32.totalorder %s129, %s130
      %p142 = scmp.eq.s32.totalorder %s24, 1
      %p143 = por %p141, %p142
      %p145 = scmp.ne.s32.totalorder %s130, %s144
      %p146 = scmp.eq.s32.totalorder %s24, 0
      %p147 = por %p145, %p146
      %s149 = sadd.s32 %s148, 1
      %p152 = scmp.eq.s32.totalorder %s18, 1
      %p153 = scmp.ne.s32.totalorder %s148, %s150
      %p154 = scmp.eq.s32.totalorder %s18, 0
      %p155 = por %p153, %p154
      %p156 = scmp.ne.s32.totalorder %s148, %s150
      %p157 = scmp.eq.s32.totalorder %s23, 1
      %p158 = por %p156, %p157
      %p159 = scmp.ne.s32.totalorder %s150, %s151
      %p160 = scmp.eq.s32.totalorder %s23, 0
      %p161 = por %p159, %p160
      %p162 = scmp.ne.s32.totalorder %s150, %s151
      %p163 = scmp.eq.s32.totalorder %s24, 1
      %p164 = por %p162, %p163
      %p166 = scmp.ne.s32.totalorder %s151, %s165
      %p167 = scmp.eq.s32.totalorder %s24, 0
      %p168 = por %p166, %p167
      %s169 = ssub.s32 %s25, %s37
      %s170 = ssub.s32 %s26, %s33
      %s171 = sor.u32 %s169, %s170
      %p172 = scmp.eq.s32.totalorder %s171, 0
      %s174 = sadd.s32 %s173, 1
      %s175 = scalar_select %p172, %s173, %s174
      %p178 = pneg %p172
      %p179 = scmp.eq.s32.totalorder %s18, 1
      %p180 = por %p178, %p179
      %p181 = scmp.ne.s32.totalorder %s173, %s176
      %p182 = scmp.eq.s32.totalorder %s18, 0
      %p183 = por %p181, %p182
      %p184 = scmp.ne.s32.totalorder %s173, %s176
      %p185 = scmp.eq.s32.totalorder %s23, 1
      %p186 = por %p184, %p185
      %p187 = scmp.ne.s32.totalorder %s176, %s177
      %p188 = scmp.eq.s32.totalorder %s23, 0
      %p189 = por %p187, %p188
      %p190 = scmp.ne.s32.totalorder %s176, %s177
      %p191 = scmp.eq.s32.totalorder %s24, 1
      %p192 = por %p190, %p191
      %p194 = scmp.ne.s32.totalorder %s177, %s193
      %p195 = scmp.eq.s32.totalorder %s24, 0
      %p196 = por %p194, %p195
      %p197 = scmp.le.s32.totalorder 1, %s18
      %p198 = scmp.lt.s32.totalorder %s18, 3
      %p199 = pnand %p197, %p198
      %p200 = pneg %p199
      // Predicated region
      $region9: #{tpu_custom_call.1} parent=5 // pred_check
        _
      $region10: #{tpu_custom_call.1} parent=5 // pred_check_branch
        %202 = sbr.rel (%p199) target = $region12
      $region11: #{tpu_custom_call.1} parent=5 // pred_region
        %s203 = ssub.s32 %s18, 1
        // Predicated region
        $region13: #{tpu_custom_call.1} parent=11 // pred_check
          %p204 = pneg %p77
        $region14: #{tpu_custom_call.1} parent=11 // pred_check_branch
          %206 = sbr.rel (%p204) target = $region16
        $region15: #{tpu_custom_call.1} parent=11 // pred_region
          %s208 = ssub.s32 36864, 36864
          %209 = vsyncadd [#allocation3], %s208
          %s210 = sshll.u32 [#allocation2], 4
          %s211 = int_to_ptr.vmem [resolvable:$true] %s210
          %216 = dma.hbm_to_vmem [thread:$0]  %s1, 36864, %s211, [#allocation3], 256, 256, 16
        $region16: #{tpu_custom_call.1} parent=11 // pred_fallthru
          _
        // Predicated region
        $region17: #{tpu_custom_call.1} parent=11 // pred_check
          %p217 = pneg %p98
        $region18: #{tpu_custom_call.1} parent=11 // pred_check_branch
          %219 = sbr.rel (%p217) target = $region20
        $region19: #{tpu_custom_call.1} parent=11 // pred_region
          %s221 = ssub.s32 32, 32
          %222 = vsyncadd [#allocation6], %s221
          %s224 = sshll.u32 [#allocation5], 4
          %s225 = int_to_ptr.vmem [resolvable:$true] %s224
          %227 = dma.hbm_to_vmem [thread:$0]  %s2, 32, %s225, [#allocation6]
        $region20: #{tpu_custom_call.1} parent=11 // pred_fallthru
          _
        // Predicated region
        $region21: #{tpu_custom_call.1} parent=11 // pred_check
          %p228 = pneg %p119
        $region22: #{tpu_custom_call.1} parent=11 // pred_check_branch
          %230 = sbr.rel (%p228) target = $region24
        $region23: #{tpu_custom_call.1} parent=11 // pred_region
          %s232 = ssub.s32 32, 32
          %233 = vsyncadd [#allocation6], %s232
          %s235 = sshll.u32 [#allocation7], 4
          %s236 = int_to_ptr.vmem [resolvable:$true] %s235
          %238 = dma.hbm_to_vmem [thread:$0]  %s3, 32, %s236, [#allocation6]
        $region24: #{tpu_custom_call.1} parent=11 // pred_fallthru
          _
        // Predicated region
        $region25: #{tpu_custom_call.1} parent=11 // pred_check
          %p239 = pneg %p140
        $region26: #{tpu_custom_call.1} parent=11 // pred_check_branch
          %241 = sbr.rel (%p239) target = $region28
        $region27: #{tpu_custom_call.1} parent=11 // pred_region
          %s243 = ssub.s32 4096, 4096
          %244 = vsyncadd [#allocation9], %s243
          %s245 = sshll.u32 [#allocation8], 4
          %s246 = int_to_ptr.vmem [resolvable:$true] %s245
          %251 = dma.hbm_to_vmem [thread:$0]  %s4, 4096, %s246, [#allocation9], 128, 128, 8
        $region28: #{tpu_custom_call.1} parent=11 // pred_fallthru
          _
        // Predicated region
        $region29: #{tpu_custom_call.1} parent=11 // pred_check
          %p252 = pneg %p161
        $region30: #{tpu_custom_call.1} parent=11 // pred_check_branch
          %254 = sbr.rel (%p252) target = $region32
        $region31: #{tpu_custom_call.1} parent=11 // pred_region
          %s256 = ssub.s32 16, 16
          %257 = vsyncadd [#allocation9], %s256
          %s259 = sshll.u32 [#allocation10], 4
          %s260 = int_to_ptr.vmem [resolvable:$true] %s259
          %262 = dma.hbm_to_vmem [thread:$0]  %s5, 16, %s260, [#allocation9]
        $region32: #{tpu_custom_call.1} parent=11 // pred_fallthru
          _
      $region12: #{tpu_custom_call.1} parent=5 // pred_fallthru
        _
      %p263 = scmp.lt.s32.totalorder %s18, 2
      // Predicated region
      $region33: #{tpu_custom_call.1} parent=5 // pred_check
        %p264 = pneg %p263
      $region34: #{tpu_custom_call.1} parent=5 // pred_check_branch
        %266 = sbr.rel (%p264) target = $region36
      $region35: #{tpu_custom_call.1} parent=5 // pred_region
        // Predicated region
        $region37: #{tpu_custom_call.1} parent=35 // pred_check
          %p267 = pneg %p50
        $region38: #{tpu_custom_call.1} parent=35 // pred_check_branch
          %269 = sbr.rel (%p267) target = $region40
        $region39: #{tpu_custom_call.1} parent=35 // pred_region
          %p270 = scmp.lt.s32.totalorder %s25, 1
          %s271 = scalar_select %p270, %s25, 1
          %s272 = smul.addr %s271, 54
          %s273 = smul.addr %s272, 8
          %s274 = scalar_lea.vmem %s0, %s273
        $region40: #{tpu_custom_call.1} parent=35 // pred_fallthru
          _
      $region36: #{tpu_custom_call.1} parent=5 // pred_fallthru
        _
      %p275 = scmp.le.s32.totalorder 1, %s18
      %p276 = scmp.lt.s32.totalorder %s18, 3
      %p277 = pnand %p275, %p276
      %p278 = pneg %p277
      // Predicated region
      $region41: #{tpu_custom_call.1} parent=5 // pred_check
        _
      $region42: #{tpu_custom_call.1} parent=5 // pred_check_branch
        %280 = sbr.rel (%p277) target = $region44
      $region43: #{tpu_custom_call.1} parent=5 // pred_region
        %s281 = ssub.s32 %s18, 1
        // Predicated region
        $region45: #{tpu_custom_call.1} parent=43 // pred_check
          %p282 = pneg %p77
        $region46: #{tpu_custom_call.1} parent=43 // pred_check_branch
          %284 = sbr.rel (%p282) target = $region48
        $region47: #{tpu_custom_call.1} parent=43 // pred_region
          %285 = dma.done [#allocation3], 36864
        $region48: #{tpu_custom_call.1} parent=43 // pred_fallthru
          _
        // Predicated region
        $region49: #{tpu_custom_call.1} parent=43 // pred_check
          %p286 = pneg %p98
        $region50: #{tpu_custom_call.1} parent=43 // pred_check_branch
          %288 = sbr.rel (%p286) target = $region52
        $region51: #{tpu_custom_call.1} parent=43 // pred_region
          %289 = dma.done [#allocation6], 32
        $region52: #{tpu_custom_call.1} parent=43 // pred_fallthru
          _
        // Predicated region
        $region53: #{tpu_custom_call.1} parent=43 // pred_check
          %p290 = pneg %p119
        $region54: #{tpu_custom_call.1} parent=43 // pred_check_branch
          %292 = sbr.rel (%p290) target = $region56
        $region55: #{tpu_custom_call.1} parent=43 // pred_region
          %293 = dma.done [#allocation6], 32
        $region56: #{tpu_custom_call.1} parent=43 // pred_fallthru
          _
        // Predicated region
        $region57: #{tpu_custom_call.1} parent=43 // pred_check
          %p294 = pneg %p140
        $region58: #{tpu_custom_call.1} parent=43 // pred_check_branch
          %296 = sbr.rel (%p294) target = $region60
        $region59: #{tpu_custom_call.1} parent=43 // pred_region
          %297 = dma.done [#allocation9], 4096
        $region60: #{tpu_custom_call.1} parent=43 // pred_fallthru
          _
        // Predicated region
        $region61: #{tpu_custom_call.1} parent=43 // pred_check
          %p298 = pneg %p161
        $region62: #{tpu_custom_call.1} parent=43 // pred_check_branch
          %300 = sbr.rel (%p298) target = $region64
        $region63: #{tpu_custom_call.1} parent=43 // pred_region
          %301 = dma.done [#allocation9], 16
        $region64: #{tpu_custom_call.1} parent=43 // pred_fallthru
          _
        %p302 = scmp.lt.s32.totalorder %s27, 1
        %s303 = scalar_select %p302, %s27, 1
        %s304 = smul.addr %s303, 54
        %s305 = smul.addr %s304, 8
        %s306 = scalar_lea.vmem %s0, %s305
        %p307 = pneg %p56
        %p308 = pneg %p53
        %p309 = pneg %p77
        %p310 = pneg %p74
        %p311 = pneg %p98
        %p312 = pneg %p95
        %p313 = pneg %p119
        %p314 = pneg %p116
        %p315 = pneg %p140
        %p316 = pneg %p137
        %p317 = pneg %p161
        %p318 = pneg %p158
        %p319 = pneg %p189
        %p320 = pneg %p186
        %s321 = sand.u32 %s176, 1
        %s322 = scalar_lea.sflag [#allocation4], %s321
        %s323 = sand.u32 %s176, 1
        %s324 = smul.addr %s323, 256
        %s325 = scalar_lea.vmem [#allocation11], %s324
        %p326 = scmp.lt.s32.totalorder %s27, 1
        %s327 = scalar_select %p326, %s27, 1
        %s328 = smul.addr %s327, 54
        %s329 = smul.addr %s328, 8
        %s330 = scalar_lea.vmem %s0, %s329
        %s331 = smul.u32 32, %s28
        %s332 = smul.u32 %s28, 16
        %s333 = smul.u32 %s332, 24
        %s334 = scalar_lea.vmem %s330, %s333
        %v335 = vld [vmem:[%s334] sm:$0xff]
        %v336 = vld [vmem:[%s334 + $0x8] sm:$0xff]
        %v337 = vld [vmem:[%s334 + $0x18] sm:$0xff]
        %v338 = vld [vmem:[%s334 + $0x20] sm:$0xff]
        %v339 = vld [vmem:[%s334 + $0x30] sm:$0xff]
        %v340 = vld [vmem:[%s334 + $0x38] sm:$0xff]
        %v341 = vld [vmem:[%s334 + $0x48] sm:$0xff]
        %v342 = vld [vmem:[%s334 + $0x50] sm:$0xff]
        %v343 = vld [vmem:[%s334 + $0x60] sm:$0xff]
        %v344 = vld [vmem:[%s334 + $0x68] sm:$0xff]
        %v345 = vld [vmem:[%s334 + $0x78] sm:$0xff]
        %v346 = vld [vmem:[%s334 + $0x80] sm:$0xff]
        %v347 = vld [vmem:[%s334 + $0x90] sm:$0xff]
        %v348 = vld [vmem:[%s334 + $0x98] sm:$0xff]
        %v349 = vld [vmem:[%s334 + $0xa8] sm:$0xff]
        %v350 = vld [vmem:[%s334 + $0xb0] sm:$0xff]
        %v351 = vld [vmem:[%s334 + $0xc0] sm:$0xff]
        %v352 = vld [vmem:[%s334 + $0xc8] sm:$0xff]
        %v353 = vld [vmem:[%s334 + $0xd8] sm:$0xff]
        %v354 = vld [vmem:[%s334 + $0xe0] sm:$0xff]
        %v355 = vld [vmem:[%s334 + $0xf0] sm:$0xff]
        %v356 = vld [vmem:[%s334 + $0xf8] sm:$0xff]
        %v357 = vld [vmem:[%s334 + $0x108] sm:$0xff]
        %v358 = vld [vmem:[%s334 + $0x110] sm:$0xff]
        %v359 = vld [vmem:[%s334 + $0x120] sm:$0xff]
        %v360 = vld [vmem:[%s334 + $0x128] sm:$0xff]
        %v361 = vld [vmem:[%s334 + $0x138] sm:$0xff]
        %v362 = vld [vmem:[%s334 + $0x140] sm:$0xff]
        %v363 = vld [vmem:[%s334 + $0x150] sm:$0xff]
        %v364 = vld [vmem:[%s334 + $0x158] sm:$0xff]
        %v365 = vld [vmem:[%s334 + $0x168] sm:$0xff]
        %v366 = vld [vmem:[%s334 + $0x170] sm:$0xff]
        %v367 = vld [vmem:[#allocation2] sm:$0xff]
        %v368 = vld [vmem:[#allocation2 + $0x8] sm:$0xff]
        %v369 = vld [vmem:[#allocation2 + $0x10] sm:$0xff]
        %v370 = vld [vmem:[#allocation2 + $0x18] sm:$0xff]
        %v371 = vld [vmem:[#allocation2 + $0x20] sm:$0xff]
        %v372 = vld [vmem:[#allocation2 + $0x28] sm:$0xff]
        %v373 = vld [vmem:[#allocation2 + $0x30] sm:$0xff]
        %v374 = vld [vmem:[#allocation2 + $0x38] sm:$0xff]
        %v375 = vld [vmem:[#allocation2 + $0x40] sm:$0xff]
        %v376 = vld [vmem:[#allocation2 + $0x48] sm:$0xff]
        %v377 = vld [vmem:[#allocation2 + $0x50] sm:$0xff]
        %v378 = vld [vmem:[#allocation2 + $0x58] sm:$0xff]
        %v379 = vld [vmem:[#allocation2 + $0x60] sm:$0xff]
        %v380 = vld [vmem:[#allocation2 + $0x68] sm:$0xff]
        %v381 = vld [vmem:[#allocation2 + $0x70] sm:$0xff]
        %v382 = vld [vmem:[#allocation2 + $0x78] sm:$0xff]
        %v383 = vld [vmem:[#allocation2 + $0x80] sm:$0xff]
        %v384 = vld [vmem:[#allocation2 + $0x88] sm:$0xff]
        %v385 = vld [vmem:[#allocation2 + $0x90] sm:$0xff]
        %v386 = vld [vmem:[#allocation2 + $0x98] sm:$0xff]
        %v387 = vld [vmem:[#allocation2 + $0xa0] sm:$0xff]
        %v388 = vld [vmem:[#allocation2 + $0xa8] sm:$0xff]
        %v389 = vld [vmem:[#allocation2 + $0xb0] sm:$0xff]
        %v390 = vld [vmem:[#allocation2 + $0xb8] sm:$0xff]
        %v391 = vld [vmem:[#allocation2 + $0xc0] sm:$0xff]
        %v392 = vld [vmem:[#allocation2 + $0xc8] sm:$0xff]
        %v393 = vld [vmem:[#allocation2 + $0xd0] sm:$0xff]
        %v394 = vld [vmem:[#allocation2 + $0xd8] sm:$0xff]
        %v395 = vld [vmem:[#allocation2 + $0xe0] sm:$0xff]
        %v396 = vld [vmem:[#allocation2 + $0xe8] sm:$0xff]
        %v397 = vld [vmem:[#allocation2 + $0xf0] sm:$0xff]
        %v398 = vld [vmem:[#allocation2 + $0xf8] sm:$0xff]
        %v399 = vld [vmem:[%s334 + $0x1] sm:$0xff]
        %v400 = vld [vmem:[%s334 + $0x9] sm:$0xff]
        %v401 = vld [vmem:[%s334 + $0x19] sm:$0xff]
        %v402 = vld [vmem:[%s334 + $0x21] sm:$0xff]
        %v403 = vld [vmem:[%s334 + $0x31] sm:$0xff]
        %v404 = vld [vmem:[%s334 + $0x39] sm:$0xff]
        %v405 = vld [vmem:[%s334 + $0x49] sm:$0xff]
        %v406 = vld [vmem:[%s334 + $0x51] sm:$0xff]
        %v407 = vld [vmem:[%s334 + $0x61] sm:$0xff]
        %v408 = vld [vmem:[%s334 + $0x69] sm:$0xff]
        %v409 = vld [vmem:[%s334 + $0x79] sm:$0xff]
        %v410 = vld [vmem:[%s334 + $0x81] sm:$0xff]
        %v411 = vld [vmem:[%s334 + $0x91] sm:$0xff]
        %v412 = vld [vmem:[%s334 + $0x99] sm:$0xff]
        %v413 = vld [vmem:[%s334 + $0xa9] sm:$0xff]
        %v414 = vld [vmem:[%s334 + $0xb1] sm:$0xff]
        %v415 = vld [vmem:[%s334 + $0xc1] sm:$0xff]
        %v416 = vld [vmem:[%s334 + $0xc9] sm:$0xff]
        %v417 = vld [vmem:[%s334 + $0xd9] sm:$0xff]
        %v418 = vld [vmem:[%s334 + $0xe1] sm:$0xff]
        %v419 = vld [vmem:[%s334 + $0xf1] sm:$0xff]
        %v420 = vld [vmem:[%s334 + $0xf9] sm:$0xff]
        %v421 = vld [vmem:[%s334 + $0x109] sm:$0xff]
        %v422 = vld [vmem:[%s334 + $0x111] sm:$0xff]
        %v423 = vld [vmem:[%s334 + $0x121] sm:$0xff]
        %v424 = vld [vmem:[%s334 + $0x129] sm:$0xff]
        %v425 = vld [vmem:[%s334 + $0x139] sm:$0xff]
        %v426 = vld [vmem:[%s334 + $0x141] sm:$0xff]
        %v427 = vld [vmem:[%s334 + $0x151] sm:$0xff]
        %v428 = vld [vmem:[%s334 + $0x159] sm:$0xff]
        %v429 = vld [vmem:[%s334 + $0x169] sm:$0xff]
        %v430 = vld [vmem:[%s334 + $0x171] sm:$0xff]
        %s431 = scalar_lea.vmem [#allocation2], 256
        %v432 = vld [vmem:[%s431] sm:$0xff]
        %v433 = vld [vmem:[%s431 + $0x8] sm:$0xff]
        %v434 = vld [vmem:[%s431 + $0x10] sm:$0xff]
        %v435 = vld [vmem:[%s431 + $0x18] sm:$0xff]
        %v436 = vld [vmem:[%s431 + $0x20] sm:$0xff]
        %v437 = vld [vmem:[%s431 + $0x28] sm:$0xff]
        %v438 = vld [vmem:[%s431 + $0x30] sm:$0xff]
        %v439 = vld [vmem:[%s431 + $0x38] sm:$0xff]
        %v440 = vld [vmem:[%s431 + $0x40] sm:$0xff]
        %v441 = vld [vmem:[%s431 + $0x48] sm:$0xff]
        %v442 = vld [vmem:[%s431 + $0x50] sm:$0xff]
        %v443 = vld [vmem:[%s431 + $0x58] sm:$0xff]
        %v444 = vld [vmem:[%s431 + $0x60] sm:$0xff]
        %v445 = vld [vmem:[%s431 + $0x68] sm:$0xff]
        %v446 = vld [vmem:[%s431 + $0x70] sm:$0xff]
        %v447 = vld [vmem:[%s431 + $0x78] sm:$0xff]
        %v448 = vld [vmem:[%s431 + $0x80] sm:$0xff]
        %v449 = vld [vmem:[%s431 + $0x88] sm:$0xff]
        %v450 = vld [vmem:[%s431 + $0x90] sm:$0xff]
        %v451 = vld [vmem:[%s431 + $0x98] sm:$0xff]
        %v452 = vld [vmem:[%s431 + $0xa0] sm:$0xff]
        %v453 = vld [vmem:[%s431 + $0xa8] sm:$0xff]
        %v454 = vld [vmem:[%s431 + $0xb0] sm:$0xff]
        %v455 = vld [vmem:[%s431 + $0xb8] sm:$0xff]
        %v456 = vld [vmem:[%s431 + $0xc0] sm:$0xff]
        %v457 = vld [vmem:[%s431 + $0xc8] sm:$0xff]
        %v458 = vld [vmem:[%s431 + $0xd0] sm:$0xff]
        %v459 = vld [vmem:[%s431 + $0xd8] sm:$0xff]
        %v460 = vld [vmem:[%s431 + $0xe0] sm:$0xff]
        %v461 = vld [vmem:[%s431 + $0xe8] sm:$0xff]
        %v462 = vld [vmem:[%s431 + $0xf0] sm:$0xff]
        %v463 = vld [vmem:[%s431 + $0xf8] sm:$0xff]
        %464 = vmatprep.subr.mxu0 %v433
        %465 = vmatpush1.msra.mxu0 %v432
        %466 = vmatprep.subr.mxu0 %v435
        %467 = vmatpush1.msra.mxu0 %v434
        %468 = vmatprep.subr.mxu0 %v437
        %469 = vmatpush1.msra.mxu0 %v436
        %470 = vmatprep.subr.mxu0 %v439
        %471 = vmatpush1.msra.mxu0 %v438
        %472 = vmatprep.subr.mxu0 %v441
        %473 = vmatpush1.msra.mxu0 %v440
        %474 = vmatprep.subr.mxu0 %v443
        %475 = vmatpush1.msra.mxu0 %v442
        %476 = vmatprep.subr.mxu0 %v445
        %477 = vmatpush1.msra.mxu0 %v444
        %478 = vmatprep.subr.mxu0 %v447
        %479 = vmatpush1.msra.mxu0 %v446
        %480 = vmatprep.subr.mxu0 %v449
        %481 = vmatpush1.msra.mxu0 %v448
        %482 = vmatprep.subr.mxu0 %v451
        %483 = vmatpush1.msra.mxu0 %v450
        %484 = vmatprep.subr.mxu0 %v453
        %485 = vmatpush1.msra.mxu0 %v452
        %486 = vmatprep.subr.mxu0 %v455
        %487 = vmatpush1.msra.mxu0 %v454
        %488 = vmatprep.subr.mxu0 %v457
        %489 = vmatpush1.msra.mxu0 %v456
        %490 = vmatprep.subr.mxu0 %v459
        %491 = vmatpush1.msra.mxu0 %v458
        %492 = vmatprep.subr.mxu0 %v461
        %493 = vmatpush1.msra.mxu0 %v460
        %494 = vmatprep.subr.mxu0 %v463
        %495 = vmatpush1.msra.mxu0 %v462
        %496 = vmatprep.subr.mxu0 0.0
        %497 = vmatpush1.msra.mxu0 0.0
        %498 = vmatprep.subr.mxu0 0.0
        %499 = vmatpush1.msra.mxu0 0.0
        %500 = vmatprep.subr.mxu0 0.0
        %501 = vmatpush1.msra.mxu0 0.0
        %502 = vmatprep.subr.mxu0 0.0
        %503 = vmatpush1.msra.mxu0 0.0
        %504 = vmatprep.subr.mxu0 0.0
        %505 = vmatpush1.msra.mxu0 0.0
        %506 = vmatprep.subr.mxu0 0.0
        %507 = vmatpush1.msra.mxu0 0.0
        %508 = vmatprep.subr.mxu0 0.0
        %509 = vmatpush1.msra.mxu0 0.0
        %510 = vmatprep.subr.mxu0 0.0
        %511 = vmatpush1.msra.mxu0 0.0
        %512 = vmatprep.subr.mxu0 0.0
        %513 = vmatpush1.msra.mxu0 0.0
        %514 = vmatprep.subr.mxu0 0.0
        %515 = vmatpush1.msra.mxu0 0.0
        %516 = vmatprep.subr.mxu0 0.0
        %517 = vmatpush1.msra.mxu0 0.0
        %518 = vmatprep.subr.mxu0 0.0
        %519 = vmatpush1.msra.mxu0 0.0
        %520 = vmatprep.subr.mxu0 0.0
        %521 = vmatpush1.msra.mxu0 0.0
        %522 = vmatprep.subr.mxu0 0.0
        %523 = vmatpush1.msra.mxu0 0.0
        %524 = vmatprep.subr.mxu0 0.0
        %525 = vmatpush1.msra.mxu0 0.0
        %526 = vmatprep.subr.mxu0 0.0
        %527 = vmatpush1.msra.mxu0 0.0
        %528 = vmatprep.mubr.f32.mxu0 0.0
        %529 = vmatmul.mubr.f32.gmra.mrb[0].mxu0 %v399
        %v530 = vpop.f32.mrb[0].mxu0
        %v531 = vadd.f32 0.0, %v530
        %v532 = vpop.f32.mrb[0].mxu0
        %v533 = vadd.f32 0.0, %v532
        %534 = vmatprep.mubr.f32.mxu0 0.0
        %535 = vmatmul.mubr.f32.gmra.mrb[0].mxu0 %v400
        %v536 = vpop.f32.mrb[0].mxu0
        %v537 = vadd.f32 0.0, %v536
        %v538 = vpop.f32.mrb[0].mxu0
        %v539 = vadd.f32 0.0, %v538
        %540 = vmatprep.mubr.f32.mxu0 0.0
        %541 = vmatmul.mubr.f32.gmra.mrb[0].mxu0 %v401
        %v542 = vpop.f32.mrb[0].mxu0
        %v543 = vadd.f32 0.0, %v542
        %v544 = vpop.f32.mrb[0].mxu0
        %v545 = vadd.f32 0.0, %v544
        %546 = vmatprep.mubr.f32.mxu0 0.0
        %547 = vmatmul.mubr.f32.gmra.mrb[0].mxu0 %v402
        %v548 = vpop.f32.mrb[0].mxu0
        %v549 = vadd.f32 0.0, %v548
        %v550 = vpop.f32.mrb[0].mxu0
        %v551 = vadd.f32 0.0, %v550
        %552 = vmatprep.mubr.f32.mxu0 0.0
        %553 = vmatmul.mubr.f32.gmra.mrb[0].mxu0 %v403
        %v554 = vpop.f32.mrb[0].mxu0
        %v555 = vadd.f32 0.0, %v554
        %v556 = vpop.f32.mrb[0].mxu0
        %v557 = vadd.f32 0.0, %v556
        %558 = vmatprep.mubr.f32.mxu0 0.0
        %559 = vmatmul.mubr.f32.gmra.mrb[0].mxu0 %v404
        %v560 = vpop.f32.mrb[0].mxu0
        %v561 = vadd.f32 0.0, %v560
        %v562 = vpop.f32.mrb[0].mxu0
        %v563 = vadd.f32 0.0, %v562
        %564 = vmatprep.mubr.f32.mxu0 0.0
        %565 = vmatmul.mubr.f32.gmra.mrb[0].mxu0 %v405
        %v566 = vpop.f32.mrb[0].mxu0
        %v567 = vadd.f32 0.0, %v566
        %v568 = vpop.f32.mrb[0].mxu0
        %v569 = vadd.f32 0.0, %v568
        %570 = vmatprep.mubr.f32.mxu0 0.0
        %571 = vmatmul.mubr.f32.gmra.mrb[0].mxu0 %v406
        %v572 = vpop.f32.mrb[0].mxu0
        %v573 = vadd.f32 0.0, %v572
        %v574 = vpop.f32.mrb[0].mxu0
        %v575 = vadd.f32 0.0, %v574
        %576 = vmatprep.mubr.f32.mxu0 0.0
        %577 = vmatmul.mubr.f32.gmra.mrb[0].mxu0 %v407
        %v578 = vpop.f32.mrb[0].mxu0
        %v579 = vadd.f32 0.0, %v578
        %v580 = vpop.f32.mrb[0].mxu0
        %v581 = vadd.f32 0.0, %v580
        %582 = vmatprep.mubr.f32.mxu0 0.0
        %583 = vmatmul.mubr.f32.gmra.mrb[0].mxu0 %v408
        %v584 = vpop.f32.mrb[0].mxu0
        %v585 = vadd.f32 0.0, %v584
        %v586 = vpop.f32.mrb[0].mxu0
        %v587 = vadd.f32 0.0, %v586
        %588 = vmatprep.mubr.f32.mxu0 0.0
        %589 = vmatmul.mubr.f32.gmra.mrb[0].mxu0 %v409
        %v590 = vpop.f32.mrb[0].mxu0
        %v591 = vadd.f32 0.0, %v590
        %v592 = vpop.f32.mrb[0].mxu0
        %v593 = vadd.f32 0.0, %v592
        %594 = vmatprep.mubr.f32.mxu0 0.0
        %595 = vmatmul.mubr.f32.gmra.mrb[0].mxu0 %v410
        %v596 = vpop.f32.mrb[0].mxu0
        %v597 = vadd.f32 0.0, %v596
        %v598 = vpop.f32.mrb[0].mxu0
        %v599 = vadd.f32 0.0, %v598
        %600 = vmatprep.mubr.f32.mxu0 0.0
        %601 = vmatmul.mubr.f32.gmra.mrb[0].mxu0 %v411
        %v602 = vpop.f32.mrb[0].mxu0
        %v603 = vadd.f32 0.0, %v602
        %v604 = vpop.f32.mrb[0].mxu0
        %v605 = vadd.f32 0.0, %v604
        %606 = vmatprep.mubr.f32.mxu0 0.0
        %607 = vmatmul.mubr.f32.gmra.mrb[0].mxu0 %v412
        %v608 = vpop.f32.mrb[0].mxu0
        %v609 = vadd.f32 0.0, %v608
        %v610 = vpop.f32.mrb[0].mxu0
        %v611 = vadd.f32 0.0, %v610
        %612 = vmatprep.mubr.f32.mxu0 0.0
        %613 = vmatmul.mubr.f32.gmra.mrb[0].mxu0 %v413
        %v614 = vpop.f32.mrb[0].mxu0
        %v615 = vadd.f32 0.0, %v614
        %v616 = vpop.f32.mrb[0].mxu0
        %v617 = vadd.f32 0.0, %v616
        %618 = vmatprep.mubr.f32.mxu0 0.0
        %619 = vmatmul.mubr.f32.gmra.mrb[0].mxu0 %v414
        %v620 = vpop.f32.mrb[0].mxu0
        %v621 = vadd.f32 0.0, %v620
        %v622 = vpop.f32.mrb[0].mxu0
        %v623 = vadd.f32 0.0, %v622
        %624 = vmatprep.mubr.f32.mxu0 0.0
        %625 = vmatmul.mubr.f32.gmra.mrb[0].mxu0 %v415
        %v626 = vpop.f32.mrb[0].mxu0
        %v627 = vadd.f32 0.0, %v626
        %v628 = vpop.f32.mrb[0].mxu0
        %v629 = vadd.f32 0.0, %v628
        %630 = vmatprep.mubr.f32.mxu0 0.0
        %631 = vmatmul.mubr.f32.gmra.mrb[0].mxu0 %v416
        %v632 = vpop.f32.mrb[0].mxu0
        %v633 = vadd.f32 0.0, %v632
        %v634 = vpop.f32.mrb[0].mxu0
        %v635 = vadd.f32 0.0, %v634
        %636 = vmatprep.mubr.f32.mxu0 0.0
        %637 = vmatmul.mubr.f32.gmra.mrb[0].mxu0 %v417
        %v638 = vpop.f32.mrb[0].mxu0
        %v639 = vadd.f32 0.0, %v638
        %v640 = vpop.f32.mrb[0].mxu0
        %v641 = vadd.f32 0.0, %v640
        %642 = vmatprep.mubr.f32.mxu0 0.0
        %643 = vmatmul.mubr.f32.gmra.mrb[0].mxu0 %v418
        %v644 = vpop.f32.mrb[0].mxu0
        %v645 = vadd.f32 0.0, %v644
        %v646 = vpop.f32.mrb[0].mxu0
        %v647 = vadd.f32 0.0, %v646
        %648 = vmatprep.mubr.f32.mxu0 0.0
        %649 = vmatmul.mubr.f32.gmra.mrb[0].mxu0 %v419
        %v650 = vpop.f32.mrb[0].mxu0
        %v651 = vadd.f32 0.0, %v650
        %v652 = vpop.f32.mrb[0].mxu0
        %v653 = vadd.f32 0.0, %v652
        %654 = vmatprep.mubr.f32.mxu0 0.0
        %655 = vmatmul.mubr.f32.gmra.mrb[0].mxu0 %v420
        %v656 = vpop.f32.mrb[0].mxu0
        %v657 = vadd.f32 0.0, %v656
        %v658 = vpop.f32.mrb[0].mxu0
        %v659 = vadd.f32 0.0, %v658
        %660 = vmatprep.mubr.f32.mxu0 0.0
        %661 = vmatmul.mubr.f32.gmra.mrb[0].mxu0 %v421
        %v662 = vpop.f32.mrb[0].mxu0
        %v663 = vadd.f32 0.0, %v662
        %v664 = vpop.f32.mrb[0].mxu0
        %v665 = vadd.f32 0.0, %v664
        %666 = vmatprep.mubr.f32.mxu0 0.0
        %667 = vmatmul.mubr.f32.gmra.mrb[0].mxu0 %v422
        %v668 = vpop.f32.mrb[0].mxu0
        %v669 = vadd.f32 0.0, %v668
        %v670 = vpop.f32.mrb[0].mxu0
        %v671 = vadd.f32 0.0, %v670
        %672 = vmatprep.mubr.f32.mxu0 0.0
        %673 = vmatmul.mubr.f32.gmra.mrb[0].mxu0 %v423
        %v674 = vpop.f32.mrb[0].mxu0
        %v675 = vadd.f32 0.0, %v674
        %v676 = vpop.f32.mrb[0].mxu0
        %v677 = vadd.f32 0.0, %v676
        %678 = vmatprep.mubr.f32.mxu0 0.0
        %679 = vmatmul.mubr.f32.gmra.mrb[0].mxu0 %v424
        %v680 = vpop.f32.mrb[0].mxu0
        %v681 = vadd.f32 0.0, %v680
        %v682 = vpop.f32.mrb[0].mxu0
        %v683 = vadd.f32 0.0, %v682
        %684 = vmatprep.mubr.f32.mxu0 0.0
        %685 = vmatmul.mubr.f32.gmra.mrb[0].mxu0 %v425
        %v686 = vpop.f32.mrb[0].mxu0
        %v687 = vadd.f32 0.0, %v686
        %v688 = vpop.f32.mrb[0].mxu0
        %v689 = vadd.f32 0.0, %v688
        %690 = vmatprep.mubr.f32.mxu0 0.0
        %691 = vmatmul.mubr.f32.gmra.mrb[0].mxu0 %v426
        %v692 = vpop.f32.mrb[0].mxu0
        %v693 = vadd.f32 0.0, %v692
        %v694 = vpop.f32.mrb[0].mxu0
        %v695 = vadd.f32 0.0, %v694
        %696 = vmatprep.mubr.f32.mxu0 0.0
        %697 = vmatmul.mubr.f32.gmra.mrb[0].mxu0 %v427
        %v698 = vpop.f32.mrb[0].mxu0
        %v699 = vadd.f32 0.0, %v698
        %v700 = vpop.f32.mrb[0].mxu0
        %v701 = vadd.f32 0.0, %v700
        %702 = vmatprep.mubr.f32.mxu0 0.0
        %703 = vmatmul.mubr.f32.gmra.mrb[0].mxu0 %v428
        %v704 = vpop.f32.mrb[0].mxu0
        %v705 = vadd.f32 0.0, %v704
        %v706 = vpop.f32.mrb[0].mxu0
        %v707 = vadd.f32 0.0, %v706
        %708 = vmatprep.mubr.f32.mxu0 0.0
        %709 = vmatmul.mubr.f32.gmra.mrb[0].mxu0 %v429
        %v710 = vpop.f32.mrb[0].mxu0
        %v711 = vadd.f32 0.0, %v710
        %v712 = vpop.f32.mrb[0].mxu0
        %v713 = vadd.f32 0.0, %v712
        %714 = vmatprep.mubr.f32.mxu0 0.0
        %715 = vmatmul.mubr.f32.gmra.mrb[0].mxu0 %v430
        %v716 = vpop.f32.mrb[0].mxu0
        %v717 = vadd.f32 0.0, %v716
        %v718 = vpop.f32.mrb[0].mxu0
        %v719 = vadd.f32 0.0, %v718
        %720 = vdwg.mxu0
        %721 = vmatprep.subr.mxu0 %v368
        %722 = vmatpush1.msra.mxu0 %v367
        %723 = vmatprep.subr.mxu0 %v370
        %724 = vmatpush1.msra.mxu0 %v369
        %725 = vmatprep.subr.mxu0 %v372
        %726 = vmatpush1.msra.mxu0 %v371
        %727 = vmatprep.subr.mxu0 %v374
        %728 = vmatpush1.msra.mxu0 %v373
        %729 = vmatprep.subr.mxu0 %v376
        %730 = vmatpush1.msra.mxu0 %v375
        %731 = vmatprep.subr.mxu0 %v378
        %732 = vmatpush1.msra.mxu0 %v377
        %733 = vmatprep.subr.mxu0 %v380
        %734 = vmatpush1.msra.mxu0 %v379
        %735 = vmatprep.subr.mxu0 %v382
        %736 = vmatpush1.msra.mxu0 %v381
        %737 = vmatprep.subr.mxu0 %v384
        %738 = vmatpush1.msra.mxu0 %v383
        %739 = vmatprep.subr.mxu0 %v386
        %740 = vmatpush1.msra.mxu0 %v385
        %741 = vmatprep.subr.mxu0 %v388
        %742 = vmatpush1.msra.mxu0 %v387
        %743 = vmatprep.subr.mxu0 %v390
        %744 = vmatpush1.msra.mxu0 %v389
        %745 = vmatprep.subr.mxu0 %v392
        %746 = vmatpush1.msra.mxu0 %v391
        %747 = vmatprep.subr.mxu0 %v394
        %748 = vmatpush1.msra.mxu0 %v393
        %749 = vmatprep.subr.mxu0 %v396
        %750 = vmatpush1.msra.mxu0 %v395
        %751 = vmatprep.subr.mxu0 %v398
        %752 = vmatpush1.msra.mxu0 %v397
        %753 = vmatprep.subr.mxu0 0.0
        %754 = vmatpush1.msra.mxu0 0.0
        %755 = vmatprep.subr.mxu0 0.0
        %756 = vmatpush1.msra.mxu0 0.0
        %757 = vmatprep.subr.mxu0 0.0
        %758 = vmatpush1.msra.mxu0 0.0
        %759 = vmatprep.subr.mxu0 0.0
        %760 = vmatpush1.msra.mxu0 0.0
        %761 = vmatprep.subr.mxu0 0.0
        %762 = vmatpush1.msra.mxu0 0.0
        %763 = vmatprep.subr.mxu0 0.0
        %764 = vmatpush1.msra.mxu0 0.0
        %765 = vmatprep.subr.mxu0 0.0
        %766 = vmatpush1.msra.mxu0 0.0
        %767 = vmatprep.subr.mxu0 0.0
        %768 = vmatpush1.msra.mxu0 0.0
        %769 = vmatprep.subr.mxu0 0.0
        %770 = vmatpush1.msra.mxu0 0.0
        %771 = vmatprep.subr.mxu0 0.0
        %772 = vmatpush1.msra.mxu0 0.0
        %773 = vmatprep.subr.mxu0 0.0
        %774 = vmatpush1.msra.mxu0 0.0
        %775 = vmatprep.subr.mxu0 0.0
        %776 = vmatpush1.msra.mxu0 0.0
        %777 = vmatprep.subr.mxu0 0.0
        %778 = vmatpush1.msra.mxu0 0.0
        %779 = vmatprep.subr.mxu0 0.0
        %780 = vmatpush1.msra.mxu0 0.0
        %781 = vmatprep.subr.mxu0 0.0
        %782 = vmatpush1.msra.mxu0 0.0
        %783 = vmatprep.subr.mxu0 0.0
        %784 = vmatpush1.msra.mxu0 0.0
        %785 = vmatprep.mubr.f32.mxu0 0.0
        %786 = vmatmul.mubr.f32.gmra.mrb[0].mxu0 %v335
        %v787 = vpop.f32.mrb[0].mxu0
        %v788 = vadd.f32 %v531, %v787
        %v789 = vpop.f32.mrb[0].mxu0
        %v790 = vadd.f32 %v533, %v789
        %791 = vmatprep.mubr.f32.mxu0 0.0
        %792 = vmatmul.mubr.f32.gmra.mrb[0].mxu0 %v336
        %v793 = vpop.f32.mrb[0].mxu0
        %v794 = vadd.f32 %v537, %v793
        %v795 = vpop.f32.mrb[0].mxu0
        %v796 = vadd.f32 %v539, %v795
        %797 = vmatprep.mubr.f32.mxu0 0.0
        %798 = vmatmul.mubr.f32.gmra.mrb[0].mxu0 %v337
        %v799 = vpop.f32.mrb[0].mxu0
        %v800 = vadd.f32 %v543, %v799
        %v801 = vpop.f32.mrb[0].mxu0
        %v802 = vadd.f32 %v545, %v801
        %803 = vmatprep.mubr.f32.mxu0 0.0
        %804 = vmatmul.mubr.f32.gmra.mrb[0].mxu0 %v338
        %v805 = vpop.f32.mrb[0].mxu0
        %v806 = vadd.f32 %v549, %v805
        %v807 = vpop.f32.mrb[0].mxu0
        %v808 = vadd.f32 %v551, %v807
        %809 = vmatprep.mubr.f32.mxu0 0.0
        %810 = vmatmul.mubr.f32.gmra.mrb[0].mxu0 %v339
        %v811 = vpop.f32.mrb[0].mxu0
        %v812 = vadd.f32 %v555, %v811
        %v813 = vpop.f32.mrb[0].mxu0
        %v814 = vadd.f32 %v557, %v813
        %815 = vmatprep.mubr.f32.mxu0 0.0
        %816 = vmatmul.mubr.f32.gmra.mrb[0].mxu0 %v340
        %v817 = vpop.f32.mrb[0].mxu0
        %v818 = vadd.f32 %v561, %v817
        %v819 = vpop.f32.mrb[0].mxu0
        %v820 = vadd.f32 %v563, %v819
        %821 = vmatprep.mubr.f32.mxu0 0.0
        %822 = vmatmul.mubr.f32.gmra.mrb[0].mxu0 %v341
        %v823 = vpop.f32.mrb[0].mxu0
        %v824 = vadd.f32 %v567, %v823
        %v825 = vpop.f32.mrb[0].mxu0
        %v826 = vadd.f32 %v569, %v825
        %827 = vmatprep.mubr.f32.mxu0 0.0
        %828 = vmatmul.mubr.f32.gmra.mrb[0].mxu0 %v342
        %v829 = vpop.f32.mrb[0].mxu0
        %v830 = vadd.f32 %v573, %v829
        %v831 = vpop.f32.mrb[0].mxu0
        %v832 = vadd.f32 %v575, %v831
        %833 = vmatprep.mubr.f32.mxu0 0.0
        %834 = vmatmul.mubr.f32.gmra.mrb[0].mxu0 %v343
        %v835 = vpop.f32.mrb[0].mxu0
        %v836 = vadd.f32 %v579, %v835
        %v837 = vpop.f32.mrb[0].mxu0
        %v838 = vadd.f32 %v581, %v837
        %839 = vmatprep.mubr.f32.mxu0 0.0
        %840 = vmatmul.mubr.f32.gmra.mrb[0].mxu0 %v344
        %v841 = vpop.f32.mrb[0].mxu0
        %v842 = vadd.f32 %v585, %v841
        %v843 = vpop.f32.mrb[0].mxu0
        %v844 = vadd.f32 %v587, %v843
        %845 = vmatprep.mubr.f32.mxu0 0.0
        %846 = vmatmul.mubr.f32.gmra.mrb[0].mxu0 %v345
        %v847 = vpop.f32.mrb[0].mxu0
        %v848 = vadd.f32 %v591, %v847
        %v849 = vpop.f32.mrb[0].mxu0
        %v850 = vadd.f32 %v593, %v849
        %851 = vmatprep.mubr.f32.mxu0 0.0
        %852 = vmatmul.mubr.f32.gmra.mrb[0].mxu0 %v346
        %v853 = vpop.f32.mrb[0].mxu0
        %v854 = vadd.f32 %v597, %v853
        %v855 = vpop.f32.mrb[0].mxu0
        %v856 = vadd.f32 %v599, %v855
        %857 = vmatprep.mubr.f32.mxu0 0.0
        %858 = vmatmul.mubr.f32.gmra.mrb[0].mxu0 %v347
        %v859 = vpop.f32.mrb[0].mxu0
        %v860 = vadd.f32 %v603, %v859
        %v861 = vpop.f32.mrb[0].mxu0
        %v862 = vadd.f32 %v605, %v861
        %863 = vmatprep.mubr.f32.mxu0 0.0
        %864 = vmatmul.mubr.f32.gmra.mrb[0].mxu0 %v348
        %v865 = vpop.f32.mrb[0].mxu0
        %v866 = vadd.f32 %v609, %v865
        %v867 = vpop.f32.mrb[0].mxu0
        %v868 = vadd.f32 %v611, %v867
        %869 = vmatprep.mubr.f32.mxu0 0.0
        %870 = vmatmul.mubr.f32.gmra.mrb[0].mxu0 %v349
        %v871 = vpop.f32.mrb[0].mxu0
        %v872 = vadd.f32 %v615, %v871
        %v873 = vpop.f32.mrb[0].mxu0
        %v874 = vadd.f32 %v617, %v873
        %875 = vmatprep.mubr.f32.mxu0 0.0
        %876 = vmatmul.mubr.f32.gmra.mrb[0].mxu0 %v350
        %v877 = vpop.f32.mrb[0].mxu0
        %v878 = vadd.f32 %v621, %v877
        %v879 = vpop.f32.mrb[0].mxu0
        %v880 = vadd.f32 %v623, %v879
        %881 = vmatprep.mubr.f32.mxu0 0.0
        %882 = vmatmul.mubr.f32.gmra.mrb[0].mxu0 %v351
        %v883 = vpop.f32.mrb[0].mxu0
        %v884 = vadd.f32 %v627, %v883
        %v885 = vpop.f32.mrb[0].mxu0
        %v886 = vadd.f32 %v629, %v885
        %887 = vmatprep.mubr.f32.mxu0 0.0
        %888 = vmatmul.mubr.f32.gmra.mrb[0].mxu0 %v352
        %v889 = vpop.f32.mrb[0].mxu0
        %v890 = vadd.f32 %v633, %v889
        %v891 = vpop.f32.mrb[0].mxu0
        %v892 = vadd.f32 %v635, %v891
        %893 = vmatprep.mubr.f32.mxu0 0.0
        %894 = vmatmul.mubr.f32.gmra.mrb[0].mxu0 %v353
        %v895 = vpop.f32.mrb[0].mxu0
        %v896 = vadd.f32 %v639, %v895
        %v897 = vpop.f32.mrb[0].mxu0
        %v898 = vadd.f32 %v641, %v897
        %899 = vmatprep.mubr.f32.mxu0 0.0
        %900 = vmatmul.mubr.f32.gmra.mrb[0].mxu0 %v354
        %v901 = vpop.f32.mrb[0].mxu0
        %v902 = vadd.f32 %v645, %v901
        %v903 = vpop.f32.mrb[0].mxu0
        %v904 = vadd.f32 %v647, %v903
        %905 = vmatprep.mubr.f32.mxu0 0.0
        %906 = vmatmul.mubr.f32.gmra.mrb[0].mxu0 %v355
        %v907 = vpop.f32.mrb[0].mxu0
        %v908 = vadd.f32 %v651, %v907
        %v909 = vpop.f32.mrb[0].mxu0
        %v910 = vadd.f32 %v653, %v909
        %911 = vmatprep.mubr.f32.mxu0 0.0
        %912 = vmatmul.mubr.f32.gmra.mrb[0].mxu0 %v356
        %v913 = vpop.f32.mrb[0].mxu0
        %v914 = vadd.f32 %v657, %v913
        %v915 = vpop.f32.mrb[0].mxu0
        %v916 = vadd.f32 %v659, %v915
        %917 = vmatprep.mubr.f32.mxu0 0.0
        %918 = vmatmul.mubr.f32.gmra.mrb[0].mxu0 %v357
        %v919 = vpop.f32.mrb[0].mxu0
        %v920 = vadd.f32 %v663, %v919
        %v921 = vpop.f32.mrb[0].mxu0
        %v922 = vadd.f32 %v665, %v921
        %923 = vmatprep.mubr.f32.mxu0 0.0
        %924 = vmatmul.mubr.f32.gmra.mrb[0].mxu0 %v358
        %v925 = vpop.f32.mrb[0].mxu0
        %v926 = vadd.f32 %v669, %v925
        %v927 = vpop.f32.mrb[0].mxu0
        %v928 = vadd.f32 %v671, %v927
        %929 = vmatprep.mubr.f32.mxu0 0.0
        %930 = vmatmul.mubr.f32.gmra.mrb[0].mxu0 %v359
        %v931 = vpop.f32.mrb[0].mxu0
        %v932 = vadd.f32 %v675, %v931
        %v933 = vpop.f32.mrb[0].mxu0
        %v934 = vadd.f32 %v677, %v933
        %935 = vmatprep.mubr.f32.mxu0 0.0
        %936 = vmatmul.mubr.f32.gmra.mrb[0].mxu0 %v360
        %v937 = vpop.f32.mrb[0].mxu0
        %v938 = vadd.f32 %v681, %v937
        %v939 = vpop.f32.mrb[0].mxu0
        %v940 = vadd.f32 %v683, %v939
        %941 = vmatprep.mubr.f32.mxu0 0.0
        %942 = vmatmul.mubr.f32.gmra.mrb[0].mxu0 %v361
        %v943 = vpop.f32.mrb[0].mxu0
        %v944 = vadd.f32 %v687, %v943
        %v945 = vpop.f32.mrb[0].mxu0
        %v946 = vadd.f32 %v689, %v945
        %947 = vmatprep.mubr.f32.mxu0 0.0
        %948 = vmatmul.mubr.f32.gmra.mrb[0].mxu0 %v362
        %v949 = vpop.f32.mrb[0].mxu0
        %v950 = vadd.f32 %v693, %v949
        %v951 = vpop.f32.mrb[0].mxu0
        %v952 = vadd.f32 %v695, %v951
        %953 = vmatprep.mubr.f32.mxu0 0.0
        %954 = vmatmul.mubr.f32.gmra.mrb[0].mxu0 %v363
        %v955 = vpop.f32.mrb[0].mxu0
        %v956 = vadd.f32 %v699, %v955
        %v957 = vpop.f32.mrb[0].mxu0
        %v958 = vadd.f32 %v701, %v957
        %959 = vmatprep.mubr.f32.mxu0 0.0
        %960 = vmatmul.mubr.f32.gmra.mrb[0].mxu0 %v364
        %v961 = vpop.f32.mrb[0].mxu0
        %v962 = vadd.f32 %v705, %v961
        %v963 = vpop.f32.mrb[0].mxu0
        %v964 = vadd.f32 %v707, %v963
        %965 = vmatprep.mubr.f32.mxu0 0.0
        %966 = vmatmul.mubr.f32.gmra.mrb[0].mxu0 %v365
        %v967 = vpop.f32.mrb[0].mxu0
        %v968 = vadd.f32 %v711, %v967
        %v969 = vpop.f32.mrb[0].mxu0
        %v970 = vadd.f32 %v713, %v969
        %971 = vmatprep.mubr.f32.mxu0 0.0
        %972 = vmatmul.mubr.f32.gmra.mrb[0].mxu0 %v366
        %v973 = vpop.f32.mrb[0].mxu0
        %v974 = vadd.f32 %v717, %v973
        %v975 = vpop.f32.mrb[0].mxu0
        %v976 = vadd.f32 %v719, %v975
        %977 = vdwg.mxu0
        %v978 = vld [vmem:[%s334 + $0x2] sm:$0xff]
        %v979 = vld [vmem:[%s334 + $0xa] sm:$0xff]
        %v980 = vld [vmem:[%s334 + $0x1a] sm:$0xff]
        %v981 = vld [vmem:[%s334 + $0x22] sm:$0xff]
        %v982 = vld [vmem:[%s334 + $0x32] sm:$0xff]
        %v983 = vld [vmem:[%s334 + $0x3a] sm:$0xff]
        %v984 = vld [vmem:[%s334 + $0x4a] sm:$0xff]
        %v985 = vld [vmem:[%s334 + $0x52] sm:$0xff]
        %v986 = vld [vmem:[%s334 + $0x62] sm:$0xff]
        %v987 = vld [vmem:[%s334 + $0x6a] sm:$0xff]
        %v988 = vld [vmem:[%s334 + $0x7a] sm:$0xff]
        %v989 = vld [vmem:[%s334 + $0x82] sm:$0xff]
        %v990 = vld [vmem:[%s334 + $0x92] sm:$0xff]
        %v991 = vld [vmem:[%s334 + $0x9a] sm:$0xff]
        %v992 = vld [vmem:[%s334 + $0xaa] sm:$0xff]
        %v993 = vld [vmem:[%s334 + $0xb2] sm:$0xff]
        %v994 = vld [vmem:[%s334 + $0xc2] sm:$0xff]
        %v995 = vld [vmem:[%s334 + $0xca] sm:$0xff]
        %v996 = vld [vmem:[%s334 + $0xda] sm:$0xff]
        %v997 = vld [vmem:[%s334 + $0xe2] sm:$0xff]
        %v998 = vld [vmem:[%s334 + $0xf2] sm:$0xff]
        %v999 = vld [vmem:[%s334 + $0xfa] sm:$0xff]
        %v1000 = vld [vmem:[%s334 + $0x10a] sm:$0xff]
        %v1001 = vld [vmem:[%s334 + $0x112] sm:$0xff]
        %v1002 = vld [vmem:[%s334 + $0x122] sm:$0xff]
        %v1003 = vld [vmem:[%s334 + $0x12a] sm:$0xff]
        %v1004 = vld [vmem:[%s334 + $0x13a] sm:$0xff]
        %v1005 = vld [vmem:[%s334 + $0x142] sm:$0xff]
        %v1006 = vld [vmem:[%s334 + $0x152] sm:$0xff]
        %v1007 = vld [vmem:[%s334 + $0x15a] sm:$0xff]
        %v1008 = vld [vmem:[%s334 + $0x16a] sm:$0xff]
        %v1009 = vld [vmem:[%s334 + $0x172] sm:$0xff]
        %s1010 = scalar_lea.vmem [#allocation2], 512
        %v1011 = vld [vmem:[%s1010] sm:$0xff]
        %v1012 = vld [vmem:[%s1010 + $0x8] sm:$0xff]
        %v1013 = vld [vmem:[%s1010 + $0x10] sm:$0xff]
        %v1014 = vld [vmem:[%s1010 + $0x18] sm:$0xff]
        %v1015 = vld [vmem:[%s1010 + $0x20] sm:$0xff]
        %v1016 = vld [vmem:[%s1010 + $0x28] sm:$0xff]
        %v1017 = vld [vmem:[%s1010 + $0x30] sm:$0xff]
        %v1018 = vld [vmem:[%s1010 + $0x38] sm:$0xff]
        %v1019 = vld [vmem:[%s1010 + $0x40] sm:$0xff]
        %v1020 = vld [vmem:[%s1010 + $0x48] sm:$0xff]
        %v1021 = vld [vmem:[%s1010 + $0x50] sm:$0xff]
        %v1022 = vld [vmem:[%s1010 + $0x58] sm:$0xff]
        %v1023 = vld [vmem:[%s1010 + $0x60] sm:$0xff]
        %v1024 = vld [vmem:[%s1010 + $0x68] sm:$0xff]
        %v1025 = vld [vmem:[%s1010 + $0x70] sm:$0xff]
        %v1026 = vld [vmem:[%s1010 + $0x78] sm:$0xff]
        %v1027 = vld [vmem:[%s1010 + $0x80] sm:$0xff]
        %v1028 = vld [vmem:[%s1010 + $0x88] sm:$0xff]
        %v1029 = vld [vmem:[%s1010 + $0x90] sm:$0xff]
        %v1030 = vld [vmem:[%s1010 + $0x98] sm:$0xff]
        %v1031 = vld [vmem:[%s1010 + $0xa0] sm:$0xff]
        %v1032 = vld [vmem:[%s1010 + $0xa8] sm:$0xff]
        %v1033 = vld [vmem:[%s1010 + $0xb0] sm:$0xff]
        %v1034 = vld [vmem:[%s1010 + $0xb8] sm:$0xff]
        %v1035 = vld [vmem:[%s1010 + $0xc0] sm:$0xff]
        %v1036 = vld [vmem:[%s1010 + $0xc8] sm:$0xff]
        %v1037 = vld [vmem:[%s1010 + $0xd0] sm:$0xff]
        %v1038 = vld [vmem:[%s1010 + $0xd8] sm:$0xff]
        %v1039 = vld [vmem:[%s1010 + $0xe0] sm:$0xff]
        %v1040 = vld [vmem:[%s1010 + $0xe8] sm:$0xff]
        %v1041 = vld [vmem:[%s1010 + $0xf0] sm:$0xff]
        %v1042 = vld [vmem:[%s1010 + $0xf8] sm:$0xff]
        %1043 = vmatprep.subr.mxu0 %v1012
        %1044 = vmatpush1.msra.mxu0 %v1011
        %1045 = vmatprep.subr.mxu0 %v1014
        %1046 = vmatpush1.msra.mxu0 %v1013
        %1047 = vmatprep.subr.mxu0 %v1016
        %1048 = vmatpush1.msra.mxu0 %v1015
        %1049 = vmatprep.subr.mxu0 %v1018
        %1050 = vmatpush1.msra.mxu0 %v1017
        %1051 = vmatprep.subr.mxu0 %v1020
        %1052 = vmatpush1.msra.mxu0 %v1019
        %1053 = vmatprep.subr.mxu0 %v1022
        %1054 = vmatpush1.msra.mxu0 %v1021
        %1055 = vmatprep.subr.mxu0 %v1024
        %1056 = vmatpush1.msra.mxu0 %v1023
        %1057 = vmatprep.subr.mxu0 %v1026
        %1058 = vmatpush1.msra.mxu0 %v1025
        %1059 = vmatprep.subr.mxu0 %v1028
        %1060 = vmatpush1.msra.mxu0 %v1027
        %1061 = vmatprep.subr.mxu0 %v1030
        %1062 = vmatpush1.msra.mxu0 %v1029
        %1063 = vmatprep.subr.mxu0 %v1032
        %1064 = vmatpush1.msra.mxu0 %v1031
        %1065 = vmatprep.subr.mxu0 %v1034
        %1066 = vmatpush1.msra.mxu0 %v1033
        %1067 = vmatprep.subr.mxu0 %v1036
        %1068 = vmatpush1.msra.mxu0 %v1035
        %1069 = vmatprep.subr.mxu0 %v1038
        %1070 = vmatpush1.msra.mxu0 %v1037
        %1071 = vmatprep.subr.mxu0 %v1040
        %1072 = vmatpush1.msra.mxu0 %v1039
        %1073 = vmatprep.subr.mxu0 %v1042
        %1074 = vmatpush1.msra.mxu0 %v1041
        %1075 = vmatprep.subr.mxu0 0.0
        %1076 = vmatpush1.msra.mxu0 0.0
        %1077 = vmatprep.subr.mxu0 0.0
        %1078 = vmatpush1.msra.mxu0 0.0
        %1079 = vmatprep.subr.mxu0 0.0
        %1080 = vmatpush1.msra.mxu0 0.0
        %1081 = vmatprep.subr.mxu0 0.0
        %1082 = vmatpush1.msra.mxu0 0.0
        %1083 = vmatprep.subr.mxu0 0.0
        %1084 = vmatpush1.msra.mxu0 0.0
        %1085 = vmatprep.subr.mxu0 0.0
        %1086 = vmatpush1.msra.mxu0 0.0
        %1087 = vmatprep.subr.mxu0 0.0
        %1088 = vmatpush1.msra.mxu0 0.0
        %1089 = vmatprep.subr.mxu0 0.0
        %1090 = vmatpush1.msra.mxu0 0.0
        %1091 = vmatprep.subr.mxu0 0.0
        %1092 = vmatpush1.msra.mxu0 0.0
        %1093 = vmatprep.subr.mxu0 0.0
        %1094 = vmatpush1.msra.mxu0 0.0
        %1095 = vmatprep.subr.mxu0 0.0
        %1096 = vmatpush1.msra.mxu0 0.0
        %1097 = vmatprep.subr.mxu0 0.0
        %1098 = vmatpush1.msra.mxu0 0.0
        %1099 = vmatprep.subr.mxu0 0.0
        %1100 = vmatpush1.msra.mxu0 0.0
        %1101 = vmatprep.subr.mxu0 0.0
        %1102 = vmatpush1.msra.mxu0 0.0
        %1103 = vmatprep.subr.mxu0 0.0
        %1104 = vmatpush1.msra.mxu0 0.0
        %1105 = vmatprep.subr.mxu0 0.0
        %1106 = vmatpush1.msra.mxu0 0.0
        %1107 = vmatprep.mubr.f32.mxu0 0.0
        %1108 = vmatmul.mubr.f32.gmra.mrb[0].mxu0 %v978
        %v1109 = vpop.f32.mrb[0].mxu0
        %v1110 = vadd.f32 0.0, %v1109
        %v1111 = vpop.f32.mrb[0].mxu0
        %v1112 = vadd.f32 0.0, %v1111
        %1113 = vmatprep.mubr.f32.mxu0 0.0
        %1114 = vmatmul.mubr.f32.gmra.mrb[0].mxu0 %v979
        %v1115 = vpop.f32.mrb[0].mxu0
        %v1116 = vadd.f32 0.0, %v1115
        %v1117 = vpop.f32.mrb[0].mxu0
        %v1118 = vadd.f32 0.0, %v1117
        %1119 = vmatprep.mubr.f32.mxu0 0.0
        %1120 = vmatmul.mubr.f32.gmra.mrb[0].mxu0 %v980
        %v1121 = vpop.f32.mrb[0].mxu0
        %v1122 = vadd.f32 0.0, %v1121
        %v1123 = vpop.f32.mrb[0].mxu0
        %v1124 = vadd.f32 0.0, %v1123
        %1125 = vmatprep.mubr.f32.mxu0 0.0
        %1126 = vmatmul.mubr.f32.gmra.mrb[0].mxu0 %v981
        %v1127 = vpop.f32.mrb[0].mxu0
        %v1128 = vadd.f32 0.0, %v1127
        %v1129 = vpop.f32.mrb[0].mxu0
        %v1130 = vadd.f32 0.0, %v1129
        %1131 = vmatprep.mubr.f32.mxu0 0.0
        %1132 = vmatmul.mubr.f32.gmra.mrb[0].mxu0 %v982
        %v1133 = vpop.f32.mrb[0].mxu0
        %v1134 = vadd.f32 0.0, %v1133
        %v1135 = vpop.f32.mrb[0].mxu0
        %v1136 = vadd.f32 0.0, %v1135
        %1137 = vmatprep.mubr.f32.mxu0 0.0
        %1138 = vmatmul.mubr.f32.gmra.mrb[0].mxu0 %v983
        %v1139 = vpop.f32.mrb[0].mxu0
        %v1140 = vadd.f32 0.0, %v1139
        %v1141 = vpop.f32.mrb[0].mxu0
        %v1142 = vadd.f32 0.0, %v1141
        %1143 = vmatprep.mubr.f32.mxu0 0.0
        %1144 = vmatmul.mubr.f32.gmra.mrb[0].mxu0 %v984
        %v1145 = vpop.f32.mrb[0].mxu0
        %v1146 = vadd.f32 0.0, %v1145
        %v1147 = vpop.f32.mrb[0].mxu0
        %v1148 = vadd.f32 0.0, %v1147
        %1149 = vmatprep.mubr.f32.mxu0 0.0
        %1150 = vmatmul.mubr.f32.gmra.mrb[0].mxu0 %v985
        %v1151 = vpop.f32.mrb[0].mxu0
        %v1152 = vadd.f32 0.0, %v1151
        %v1153 = vpop.f32.mrb[0].mxu0
        %v1154 = vadd.f32 0.0, %v1153
        %1155 = vmatprep.mubr.f32.mxu0 0.0
        %1156 = vmatmul.mubr.f32.gmra.mrb[0].mxu0 %v986
        %v1157 = vpop.f32.mrb[0].mxu0
        %v1158 = vadd.f32 0.0, %v1157
        %v1159 = vpop.f32.mrb[0].mxu0
        %v1160 = vadd.f32 0.0, %v1159
        %1161 = vmatprep.mubr.f32.mxu0 0.0
        %1162 = vmatmul.mubr.f32.gmra.mrb[0].mxu0 %v987
        %v1163 = vpop.f32.mrb[0].mxu0
        %v1164 = vadd.f32 0.0, %v1163
        %v1165 = vpop.f32.mrb[0].mxu0
        %v1166 = vadd.f32 0.0, %v1165
        %1167 = vmatprep.mubr.f32.mxu0 0.0
        %1168 = vmatmul.mubr.f32.gmra.mrb[0].mxu0 %v988
        %v1169 = vpop.f32.mrb[0].mxu0
        %v1170 = vadd.f32 0.0, %v1169
        %v1171 = vpop.f32.mrb[0].mxu0
        %v1172 = vadd.f32 0.0, %v1171
        %1173 = vmatprep.mubr.f32.mxu0 0.0
        %1174 = vmatmul.mubr.f32.gmra.mrb[0].mxu0 %v989
        %v1175 = vpop.f32.mrb[0].mxu0
        %v1176 = vadd.f32 0.0, %v1175
        %v1177 = vpop.f32.mrb[0].mxu0
        %v1178 = vadd.f32 0.0, %v1177
        %1179 = vmatprep.mubr.f32.mxu0 0.0
        %1180 = vmatmul.mubr.f32.gmra.mrb[0].mxu0 %v990
        %v1181 = vpop.f32.mrb[0].mxu0
        %v1182 = vadd.f32 0.0, %v1181
        %v1183 = vpop.f32.mrb[0].mxu0
        %v1184 = vadd.f32 0.0, %v1183
        %1185 = vmatprep.mubr.f32.mxu0 0.0
        %1186 = vmatmul.mubr.f32.gmra.mrb[0].mxu0 %v991
        %v1187 = vpop.f32.mrb[0].mxu0
        %v1188 = vadd.f32 0.0, %v1187
        %v1189 = vpop.f32.mrb[0].mxu0
        %v1190 = vadd.f32 0.0, %v1189
        %1191 = vmatprep.mubr.f32.mxu0 0.0
        %1192 = vmatmul.mubr.f32.gmra.mrb[0].mxu0 %v992
        %v1193 = vpop.f32.mrb[0].mxu0
        %v1194 = vadd.f32 0.0, %v1193
        %v1195 = vpop.f32.mrb[0].mxu0
        %v1196 = vadd.f32 0.0, %v1195
        %1197 = vmatprep.mubr.f32.mxu0 0.0
        %1198 = vmatmul.mubr.f32.gmra.mrb[0].mxu0 %v993
        %v1199 = vpop.f32.mrb[0].mxu0
        %v1200 = vadd.f32 0.0, %v1199
        %v1201 = vpop.f32.mrb[0].mxu0
        %v1202 = vadd.f32 0.0, %v1201
        %1203 = vmatprep.mubr.f32.mxu0 0.0
        %1204 = vmatmul.mubr.f32.gmra.mrb[0].mxu0 %v994
        %v1205 = vpop.f32.mrb[0].mxu0
        %v1206 = vadd.f32 0.0, %v1205
        %v1207 = vpop.f32.mrb[0].mxu0
        %v1208 = vadd.f32 0.0, %v1207
        %1209 = vmatprep.mubr.f32.mxu0 0.0
        %1210 = vmatmul.mubr.f32.gmra.mrb[0].mxu0 %v995
        %v1211 = vpop.f32.mrb[0].mxu0
        %v1212 = vadd.f32 0.0, %v1211
        %v1213 = vpop.f32.mrb[0].mxu0
        %v1214 = vadd.f32 0.0, %v1213
        %1215 = vmatprep.mubr.f32.mxu0 0.0
        %1216 = vmatmul.mubr.f32.gmra.mrb[0].mxu0 %v996
        %v1217 = vpop.f32.mrb[0].mxu0
        %v1218 = vadd.f32 0.0, %v1217
        %v1219 = vpop.f32.mrb[0].mxu0
        %v1220 = vadd.f32 0.0, %v1219
        %1221 = vmatprep.mubr.f32.mxu0 0.0
        %1222 = vmatmul.mubr.f32.gmra.mrb[0].mxu0 %v997
        %v1223 = vpop.f32.mrb[0].mxu0
        %v1224 = vadd.f32 0.0, %v1223
        %v1225 = vpop.f32.mrb[0].mxu0
        %v1226 = vadd.f32 0.0, %v1225
        %1227 = vmatprep.mubr.f32.mxu0 0.0
        %1228 = vmatmul.mubr.f32.gmra.mrb[0].mxu0 %v998
        %v1229 = vpop.f32.mrb[0].mxu0
        %v1230 = vadd.f32 0.0, %v1229
        %v1231 = vpop.f32.mrb[0].mxu0
        %v1232 = vadd.f32 0.0, %v1231
        %1233 = vmatprep.mubr.f32.mxu0 0.0
        %1234 = vmatmul.mubr.f32.gmra.mrb[0].mxu0 %v999
        %v1235 = vpop.f32.mrb[0].mxu0
        %v1236 = vadd.f32 0.0, %v1235
        %v1237 = vpop.f32.mrb[0].mxu0
        %v1238 = vadd.f32 0.0, %v1237
        %1239 = vmatprep.mubr.f32.mxu0 0.0
        %1240 = vmatmul.mubr.f32.gmra.mrb[0].mxu0 %v1000
        %v1241 = vpop.f32.mrb[0].mxu0
        %v1242 = vadd.f32 0.0, %v1241
        %v1243 = vpop.f32.mrb[0].mxu0
        %v1244 = vadd.f32 0.0, %v1243
        %1245 = vmatprep.mubr.f32.mxu0 0.0
        %1246 = vmatmul.mubr.f32.gmra.mrb[0].mxu0 %v1001
        %v1247 = vpop.f32.mrb[0].mxu0
        %v1248 = vadd.f32 0.0, %v1247
        %v1249 = vpop.f32.mrb[0].mxu0
        %v1250 = vadd.f32 0.0, %v1249
        %1251 = vmatprep.mubr.f32.mxu0 0.0
        %1252 = vmatmul.mubr.f32.gmra.mrb[0].mxu0 %v1002
        %v1253 = vpop.f32.mrb[0].mxu0
        %v1254 = vadd.f32 0.0, %v1253
        %v1255 = vpop.f32.mrb[0].mxu0
        %v1256 = vadd.f32 0.0, %v1255
        %1257 = vmatprep.mubr.f32.mxu0 0.0
        %1258 = vmatmul.mubr.f32.gmra.mrb[0].mxu0 %v1003
        %v1259 = vpop.f32.mrb[0].mxu0
        %v1260 = vadd.f32 0.0, %v1259
        %v1261 = vpop.f32.mrb[0].mxu0
        %v1262 = vadd.f32 0.0, %v1261
        %1263 = vmatprep.mubr.f32.mxu0 0.0
        %1264 = vmatmul.mubr.f32.gmra.mrb[0].mxu0 %v1004
        %v1265 = vpop.f32.mrb[0].mxu0
        %v1266 = vadd.f32 0.0, %v1265
        %v1267 = vpop.f32.mrb[0].mxu0
        %v1268 = vadd.f32 0.0, %v1267
        %1269 = vmatprep.mubr.f32.mxu0 0.0
        %1270 = vmatmul.mubr.f32.gmra.mrb[0].mxu0 %v1005
        %v1271 = vpop.f32.mrb[0].mxu0
        %v1272 = vadd.f32 0.0, %v1271
        %v1273 = vpop.f32.mrb[0].mxu0
        %v1274 = vadd.f32 0.0, %v1273
        %1275 = vmatprep.mubr.f32.mxu0 0.0
        %1276 = vmatmul.mubr.f32.gmra.mrb[0].mxu0 %v1006
        %v1277 = vpop.f32.mrb[0].mxu0
        %v1278 = vadd.f32 0.0, %v1277
        %v1279 = vpop.f32.mrb[0].mxu0
        %v1280 = vadd.f32 0.0, %v1279
        %1281 = vmatprep.mubr.f32.mxu0 0.0
        %1282 = vmatmul.mubr.f32.gmra.mrb[0].mxu0 %v1007
        %v1283 = vpop.f32.mrb[0].mxu0
        %v1284 = vadd.f32 0.0, %v1283
        %v1285 = vpop.f32.mrb[0].mxu0
        %v1286 = vadd.f32 0.0, %v1285
        %1287 = vmatprep.mubr.f32.mxu0 0.0
        %1288 = vmatmul.mubr.f32.gmra.mrb[0].mxu0 %v1008
        %v1289 = vpop.f32.mrb[0].mxu0
        %v1290 = vadd.f32 0.0, %v1289
        %v1291 = vpop.f32.mrb[0].mxu0
        %v1292 = vadd.f32 0.0, %v1291
        %1293 = vmatprep.mubr.f32.mxu0 0.0
        %1294 = vmatmul.mubr.f32.gmra.mrb[0].mxu0 %v1009
        %v1295 = vpop.f32.mrb[0].mxu0
        %v1296 = vadd.f32 0.0, %v1295
        %v1297 = vpop.f32.mrb[0].mxu0
        %v1298 = vadd.f32 0.0, %v1297
        %1299 = vdwg.mxu0
        %v1300 = vadd.f32 %v788, %v1110
        %v1301 = vadd.f32 %v790, %v1112
        %v1302 = vadd.f32 %v794, %v1116
        %v1303 = vadd.f32 %v796, %v1118
        %v1304 = vadd.f32 %v800, %v1122
        %v1305 = vadd.f32 %v802, %v1124
        %v1306 = vadd.f32 %v806, %v1128
        %v1307 = vadd.f32 %v808, %v1130
        %v1308 = vadd.f32 %v812, %v1134
        %v1309 = vadd.f32 %v814, %v1136
        %v1310 = vadd.f32 %v818, %v1140
        %v1311 = vadd.f32 %v820, %v1142
        %v1312 = vadd.f32 %v824, %v1146
        %v1313 = vadd.f32 %v826, %v1148
        %v1314 = vadd.f32 %v830, %v1152
        %v1315 = vadd.f32 %v832, %v1154
        %v1316 = vadd.f32 %v836, %v1158
        %v1317 = vadd.f32 %v838, %v1160
        %v1318 = vadd.f32 %v842, %v1164
        %v1319 = vadd.f32 %v844, %v1166
        %v1320 = vadd.f32 %v848, %v1170
        %v1321 = vadd.f32 %v850, %v1172
        %v1322 = vadd.f32 %v854, %v1176
        %v1323 = vadd.f32 %v856, %v1178
        %v1324 = vadd.f32 %v860, %v1182
        %v1325 = vadd.f32 %v862, %v1184
        %v1326 = vadd.f32 %v866, %v1188
        %v1327 = vadd.f32 %v868, %v1190
        %v1328 = vadd.f32 %v872, %v1194
        %v1329 = vadd.f32 %v874, %v1196
        %v1330 = vadd.f32 %v878, %v1200
        %v1331 = vadd.f32 %v880, %v1202
        %v1332 = vadd.f32 %v884, %v1206
        %v1333 = vadd.f32 %v886, %v1208
        %v1334 = vadd.f32 %v890, %v1212
        %v1335 = vadd.f32 %v892, %v1214
        %v1336 = vadd.f32 %v896, %v1218
        %v1337 = vadd.f32 %v898, %v1220
        %v1338 = vadd.f32 %v902, %v1224
        %v1339 = vadd.f32 %v904, %v1226
        %v1340 = vadd.f32 %v908, %v1230
        %v1341 = vadd.f32 %v910, %v1232
        %v1342 = vadd.f32 %v914, %v1236
        %v1343 = vadd.f32 %v916, %v1238
        %v1344 = vadd.f32 %v920, %v1242
        %v1345 = vadd.f32 %v922, %v1244
        %v1346 = vadd.f32 %v926, %v1248
        %v1347 = vadd.f32 %v928, %v1250
        %v1348 = vadd.f32 %v932, %v1254
        %v1349 = vadd.f32 %v934, %v1256
        %v1350 = vadd.f32 %v938, %v1260
        %v1351 = vadd.f32 %v940, %v1262
        %v1352 = vadd.f32 %v944, %v1266
        %v1353 = vadd.f32 %v946, %v1268
        %v1354 = vadd.f32 %v950, %v1272
        %v1355 = vadd.f32 %v952, %v1274
        %v1356 = vadd.f32 %v956, %v1278
        %v1357 = vadd.f32 %v958, %v1280
        %v1358 = vadd.f32 %v962, %v1284
        %v1359 = vadd.f32 %v964, %v1286
        %v1360 = vadd.f32 %v968, %v1290
        %v1361 = vadd.f32 %v970, %v1292
        %v1362 = vadd.f32 %v974, %v1296
        %v1363 = vadd.f32 %v976, %v1298
        %s1364 = sadd.s32 %s332, 1
        %s1365 = smul.u32 %s1364, 24
        %s1366 = scalar_lea.vmem %s330, %s1365
        %v1367 = vld [vmem:[%s1366] sm:$0xff]
        %v1368 = vld [vmem:[%s1366 + $0x8] sm:$0xff]
        %v1369 = vld [vmem:[%s1366 + $0x18] sm:$0xff]
        %v1370 = vld [vmem:[%s1366 + $0x20] sm:$0xff]
        %v1371 = vld [vmem:[%s1366 + $0x30] sm:$0xff]
        %v1372 = vld [vmem:[%s1366 + $0x38] sm:$0xff]
        %v1373 = vld [vmem:[%s1366 + $0x48] sm:$0xff]
        %v1374 = vld [vmem:[%s1366 + $0x50] sm:$0xff]
        %v1375 = vld [vmem:[%s1366 + $0x60] sm:$0xff]
        %v1376 = vld [vmem:[%s1366 + $0x68] sm:$0xff]
        %v1377 = vld [vmem:[%s1366 + $0x78] sm:$0xff]
        %v1378 = vld [vmem:[%s1366 + $0x80] sm:$0xff]
        %v1379 = vld [vmem:[%s1366 + $0x90] sm:$0xff]
        %v1380 = vld [vmem:[%s1366 + $0x98] sm:$0xff]
        %v1381 = vld [vmem:[%s1366 + $0xa8] sm:$0xff]
        %v1382 = vld [vmem:[%s1366 + $0xb0] sm:$0xff]
        %v1383 = vld [vmem:[%s1366 + $0xc0] sm:$0xff]
        %v1384 = vld [vmem:[%s1366 + $0xc8] sm:$0xff]
        %v1385 = vld [vmem:[%s1366 + $0xd8] sm:$0xff]
        %v1386 = vld [vmem:[%s1366 + $0xe0] sm:$0xff]
        %v1387 = vld [vmem:[%s1366 + $0xf0] sm:$0xff]
        %v1388 = vld [vmem:[%s1366 + $0xf8] sm:$0xff]
        %v1389 = vld [vmem:[%s1366 + $0x108] sm:$0xff]
        %v1390 = vld [vmem:[%s1366 + $0x110] sm:$0xff]
        %v1391 = vld [vmem:[%s1366 + $0x120] sm:$0xff]
        %v1392 = vld [vmem:[%s1366 + $0x128] sm:$0xff]
        %v1393 = vld [vmem:[%s1366 + $0x138] sm:$0xff]
        %v1394 = vld [vmem:[%s1366 + $0x140] sm:$0xff]
        %v1395 = vld [vmem:[%s1366 + $0x150] sm:$0xff]
        %v1396 = vld [vmem:[%s1366 + $0x158] sm:$0xff]
        %v1397 = vld [vmem:[%s1366 + $0x168] sm:$0xff]
        %v1398 = vld [vmem:[%s1366 + $0x170] sm:$0xff]
        %s1399 = scalar_lea.vmem [#allocation2], 768
        %v1400 = vld [vmem:[%s1399] sm:$0xff]
        %v1401 = vld [vmem:[%s1399 + $0x8] sm:$0xff]
        %v1402 = vld [vmem:[%s1399 + $0x10] sm:$0xff]
        %v1403 = vld [vmem:[%s1399 + $0x18] sm:$0xff]
        %v1404 = vld [vmem:[%s1399 + $0x20] sm:$0xff]
        %v1405 = vld [vmem:[%s1399 + $0x28] sm:$0xff]
        %v1406 = vld [vmem:[%s1399 + $0x30] sm:$0xff]
        %v1407 = vld [vmem:[%s1399 + $0x38] sm:$0xff]
        %v1408 = vld [vmem:[%s1399 + $0x40] sm:$0xff]
        %v1409 = vld [vmem:[%s1399 + $0x48] sm:$0xff]
        %v1410 = vld [vmem:[%s1399 + $0x50] sm:$0xff]
        %v1411 = vld [vmem:[%s1399 + $0x58] sm:$0xff]
        %v1412 = vld [vmem:[%s1399 + $0x60] sm:$0xff]
        %v1413 = vld [vmem:[%s1399 + $0x68] sm:$0xff]
        %v1414 = vld [vmem:[%s1399 + $0x70] sm:$0xff]
        %v1415 = vld [vmem:[%s1399 + $0x78] sm:$0xff]
        %v1416 = vld [vmem:[%s1399 + $0x80] sm:$0xff]
        %v1417 = vld [vmem:[%s1399 + $0x88] sm:$0xff]
        %v1418 = vld [vmem:[%s1399 + $0x90] sm:$0xff]
        %v1419 = vld [vmem:[%s1399 + $0x98] sm:$0xff]
        %v1420 = vld [vmem:[%s1399 + $0xa0] sm:$0xff]
        %v1421 = vld [vmem:[%s1399 + $0xa8] sm:$0xff]
        %v1422 = vld [vmem:[%s1399 + $0xb0] sm:$0xff]
        %v1423 = vld [vmem:[%s1399 + $0xb8] sm:$0xff]
        %v1424 = vld [vmem:[%s1399 + $0xc0] sm:$0xff]
        %v1425 = vld [vmem:[%s1399 + $0xc8] sm:$0xff]
        %v1426 = vld [vmem:[%s1399 + $0xd0] sm:$0xff]
        %v1427 = vld [vmem:[%s1399 + $0xd8] sm:$0xff]
        %v1428 = vld [vmem:[%s1399 + $0xe0] sm:$0xff]
        %v1429 = vld [vmem:[%s1399 + $0xe8] sm:$0xff]
        %v1430 = vld [vmem:[%s1399 + $0xf0] sm:$0xff]
        %v1431 = vld [vmem:[%s1399 + $0xf8] sm:$0xff]
        %1432 = vmatprep.subr.mxu0 %v1401
        %1433 = vmatpush1.msra.mxu0 %v1400
        %1434 = vmatprep.subr.mxu0 %v1403
        %1435 = vmatpush1.msra.mxu0 %v1402
        %1436 = vmatprep.subr.mxu0 %v1405
        %1437 = vmatpush1.msra.mxu0 %v1404
        %1438 = vmatprep.subr.mxu0 %v1407
        %1439 = vmatpush1.msra.mxu0 %v1406
        %1440 = vmatprep.subr.mxu0 %v1409
        %1441 = vmatpush1.msra.mxu0 %v1408
        %1442 = vmatprep.subr.mxu0 %v1411
        %1443 = vmatpush1.msra.mxu0 %v1410
        %1444 = vmatprep.subr.mxu0 %v1413
        %1445 = vmatpush1.msra.mxu0 %v1412
        %1446 = vmatprep.subr.mxu0 %v1415
        %1447 = vmatpush1.msra.mxu0 %v1414
        %1448 = vmatprep.subr.mxu0 %v1417
        %1449 = vmatpush1.msra.mxu0 %v1416
        %1450 = vmatprep.subr.mxu0 %v1419
        %1451 = vmatpush1.msra.mxu0 %v1418
        %1452 = vmatprep.subr.mxu0 %v1421
        %1453 = vmatpush1.msra.mxu0 %v1420
        %1454 = vmatprep.subr.mxu0 %v1423
        %1455 = vmatpush1.msra.mxu0 %v1422
        %1456 = vmatprep.subr.mxu0 %v1425
        %1457 = vmatpush1.msra.mxu0 %v1424
        %1458 = vmatprep.subr.mxu0 %v1427
        %1459 = vmatpush1.msra.mxu0 %v1426
        %1460 = vmatprep.subr.mxu0 %v1429
        %1461 = vmatpush1.msra.mxu0 %v1428
        %1462 = vmatprep.subr.mxu0 %v1431
        %1463 = vmatpush1.msra.mxu0 %v1430
        %1464 = vmatprep.subr.mxu0 0.0
        %1465 = vmatpush1.msra.mxu0 0.0
        %1466 = vmatprep.subr.mxu0 0.0
        %1467 = vmatpush1.msra.mxu0 0.0
        %1468 = vmatprep.subr.mxu0 0.0
        %1469 = vmatpush1.msra.mxu0 0.0
        %1470 = vmatprep.subr.mxu0 0.0
        %1471 = vmatpush1.msra.mxu0 0.0
        %1472 = vmatprep.subr.mxu0 0.0
        %1473 = vmatpush1.msra.mxu0 0.0
        %1474 = vmatprep.subr.mxu0 0.0
        %1475 = vmatpush1.msra.mxu0 0.0
        %1476 = vmatprep.subr.mxu0 0.0
        %1477 = vmatpush1.msra.mxu0 0.0
        %1478 = vmatprep.subr.mxu0 0.0
        %1479 = vmatpush1.msra.mxu0 0.0
        %1480 = vmatprep.subr.mxu0 0.0
        %1481 = vmatpush1.msra.mxu0 0.0
        %1482 = vmatprep.subr.mxu0 0.0
        %1483 = vmatpush1.msra.mxu0 0.0
        %1484 = vmatprep.subr.mxu0 0.0
        %1485 = vmatpush1.msra.mxu0 0.0
        %1486 = vmatprep.subr.mxu0 0.0
        %1487 = vmatpush1.msra.mxu0 0.0
        %1488 = vmatprep.subr.mxu0 0.0
        %1489 = vmatpush1.msra.mxu0 0.0
        %1490 = vmatprep.subr.mxu0 0.0
        %1491 = vmatpush1.msra.mxu0 0.0
        %1492 = vmatprep.subr.mxu0 0.0
        %1493 = vmatpush1.msra.mxu0 0.0
        %1494 = vmatprep.subr.mxu0 0.0
        %1495 = vmatpush1.msra.mxu0 0.0
        %1496 = vmatprep.mubr.f32.mxu0 0.0
        %1497 = vmatmul.mubr.f32.gmra.mrb[0].mxu0 %v1367
        %v1498 = vpop.f32.mrb[0].mxu0
        %v1499 = vadd.f32 0.0, %v1498
        %v1500 = vpop.f32.mrb[0].mxu0
        %v1501 = vadd.f32 0.0, %v1500
        %1502 = vmatprep.mubr.f32.mxu0 0.0
        %1503 = vmatmul.mubr.f32.gmra.mrb[0].mxu0 %v1368
        %v1504 = vpop.f32.mrb[0].mxu0
        %v1505 = vadd.f32 0.0, %v1504
        %v1506 = vpop.f32.mrb[0].mxu0
        %v1507 = vadd.f32 0.0, %v1506
        %1508 = vmatprep.mubr.f32.mxu0 0.0
        %1509 = vmatmul.mubr.f32.gmra.mrb[0].mxu0 %v1369
        %v1510 = vpop.f32.mrb[0].mxu0
        %v1511 = vadd.f32 0.0, %v1510
        %v1512 = vpop.f32.mrb[0].mxu0
        %v1513 = vadd.f32 0.0, %v1512
        %1514 = vmatprep.mubr.f32.mxu0 0.0
        %1515 = vmatmul.mubr.f32.gmra.mrb[0].mxu0 %v1370
        %v1516 = vpop.f32.mrb[0].mxu0
        %v1517 = vadd.f32 0.0, %v1516
        %v1518 = vpop.f32.mrb[0].mxu0
        %v1519 = vadd.f32 0.0, %v1518
        %1520 = vmatprep.mubr.f32.mxu0 0.0
        %1521 = vmatmul.mubr.f32.gmra.mrb[0].mxu0 %v1371
        %v1522 = vpop.f32.mrb[0].mxu0
        %v1523 = vadd.f32 0.0, %v1522
        %v1524 = vpop.f32.mrb[0].mxu0
        %v1525 = vadd.f32 0.0, %v1524
        %1526 = vmatprep.mubr.f32.mxu0 0.0
        %1527 = vmatmul.mubr.f32.gmra.mrb[0].mxu0 %v1372
        %v1528 = vpop.f32.mrb[0].mxu0
        %v1529 = vadd.f32 0.0, %v1528
        %v1530 = vpop.f32.mrb[0].mxu0
        %v1531 = vadd.f32 0.0, %v1530
        %1532 = vmatprep.mubr.f32.mxu0 0.0
        %1533 = vmatmul.mubr.f32.gmra.mrb[0].mxu0 %v1373
        %v1534 = vpop.f32.mrb[0].mxu0
        %v1535 = vadd.f32 0.0, %v1534
        %v1536 = vpop.f32.mrb[0].mxu0
        %v1537 = vadd.f32 0.0, %v1536
        %1538 = vmatprep.mubr.f32.mxu0 0.0
        %1539 = vmatmul.mubr.f32.gmra.mrb[0].mxu0 %v1374
        %v1540 = vpop.f32.mrb[0].mxu0
        %v1541 = vadd.f32 0.0, %v1540
        %v1542 = vpop.f32.mrb[0].mxu0
        %v1543 = vadd.f32 0.0, %v1542
        %1544 = vmatprep.mubr.f32.mxu0 0.0
        %1545 = vmatmul.mubr.f32.gmra.mrb[0].mxu0 %v1375
        %v1546 = vpop.f32.mrb[0].mxu0
        %v1547 = vadd.f32 0.0, %v1546
        %v1548 = vpop.f32.mrb[0].mxu0
        %v1549 = vadd.f32 0.0, %v1548
        %1550 = vmatprep.mubr.f32.mxu0 0.0
        %1551 = vmatmul.mubr.f32.gmra.mrb[0].mxu0 %v1376
        %v1552 = vpop.f32.mrb[0].mxu0
        %v1553 = vadd.f32 0.0, %v1552
        %v1554 = vpop.f32.mrb[0].mxu0
        %v1555 = vadd.f32 0.0, %v1554
        %1556 = vmatprep.mubr.f32.mxu0 0.0
        %1557 = vmatmul.mubr.f32.gmra.mrb[0].mxu0 %v1377
        %v1558 = vpop.f32.mrb[0].mxu0
        %v1559 = vadd.f32 0.0, %v1558
        %v1560 = vpop.f32.mrb[0].mxu0
        %v1561 = vadd.f32 0.0, %v1560
        %1562 = vmatprep.mubr.f32.mxu0 0.0
        %1563 = vmatmul.mubr.f32.gmra.mrb[0].mxu0 %v1378
        %v1564 = vpop.f32.mrb[0].mxu0
        %v1565 = vadd.f32 0.0, %v1564
        %v1566 = vpop.f32.mrb[0].mxu0
        %v1567 = vadd.f32 0.0, %v1566
        %1568 = vmatprep.mubr.f32.mxu0 0.0
        %1569 = vmatmul.mubr.f32.gmra.mrb[0].mxu0 %v1379
        %v1570 = vpop.f32.mrb[0].mxu0
        %v1571 = vadd.f32 0.0, %v1570
        %v1572 = vpop.f32.mrb[0].mxu0
        %v1573 = vadd.f32 0.0, %v1572
        %1574 = vmatprep.mubr.f32.mxu0 0.0
        %1575 = vmatmul.mubr.f32.gmra.mrb[0].mxu0 %v1380
        %v1576 = vpop.f32.mrb[0].mxu0
        %v1577 = vadd.f32 0.0, %v1576
        %v1578 = vpop.f32.mrb[0].mxu0
        %v1579 = vadd.f32 0.0, %v1578
        %1580 = vmatprep.mubr.f32.mxu0 0.0
        %1581 = vmatmul.mubr.f32.gmra.mrb[0].mxu0 %v1381
        %v1582 = vpop.f32.mrb[0].mxu0
        %v1583 = vadd.f32 0.0, %v1582
        %v1584 = vpop.f32.mrb[0].mxu0
        %v1585 = vadd.f32 0.0, %v1584
        %1586 = vmatprep.mubr.f32.mxu0 0.0
        %1587 = vmatmul.mubr.f32.gmra.mrb[0].mxu0 %v1382
        %v1588 = vpop.f32.mrb[0].mxu0
        %v1589 = vadd.f32 0.0, %v1588
        %v1590 = vpop.f32.mrb[0].mxu0
        %v1591 = vadd.f32 0.0, %v1590
        %1592 = vmatprep.mubr.f32.mxu0 0.0
        %1593 = vmatmul.mubr.f32.gmra.mrb[0].mxu0 %v1383
        %v1594 = vpop.f32.mrb[0].mxu0
        %v1595 = vadd.f32 0.0, %v1594
        %v1596 = vpop.f32.mrb[0].mxu0
        %v1597 = vadd.f32 0.0, %v1596
        %1598 = vmatprep.mubr.f32.mxu0 0.0
        %1599 = vmatmul.mubr.f32.gmra.mrb[0].mxu0 %v1384
        %v1600 = vpop.f32.mrb[0].mxu0
        %v1601 = vadd.f32 0.0, %v1600
        %v1602 = vpop.f32.mrb[0].mxu0
        %v1603 = vadd.f32 0.0, %v1602
        %1604 = vmatprep.mubr.f32.mxu0 0.0
        %1605 = vmatmul.mubr.f32.gmra.mrb[0].mxu0 %v1385
        %v1606 = vpop.f32.mrb[0].mxu0
        %v1607 = vadd.f32 0.0, %v1606
        %v1608 = vpop.f32.mrb[0].mxu0
        %v1609 = vadd.f32 0.0, %v1608
        %1610 = vmatprep.mubr.f32.mxu0 0.0
        %1611 = vmatmul.mubr.f32.gmra.mrb[0].mxu0 %v1386
        %v1612 = vpop.f32.mrb[0].mxu0
        %v1613 = vadd.f32 0.0, %v1612
        %v1614 = vpop.f32.mrb[0].mxu0
        %v1615 = vadd.f32 0.0, %v1614
        %1616 = vmatprep.mubr.f32.mxu0 0.0
        %1617 = vmatmul.mubr.f32.gmra.mrb[0].mxu0 %v1387
        %v1618 = vpop.f32.mrb[0].mxu0
        %v1619 = vadd.f32 0.0, %v1618
        %v1620 = vpop.f32.mrb[0].mxu0
        %v1621 = vadd.f32 0.0, %v1620
        %1622 = vmatprep.mubr.f32.mxu0 0.0
        %1623 = vmatmul.mubr.f32.gmra.mrb[0].mxu0 %v1388
        %v1624 = vpop.f32.mrb[0].mxu0
        %v1625 = vadd.f32 0.0, %v1624
        %v1626 = vpop.f32.mrb[0].mxu0
        %v1627 = vadd.f32 0.0, %v1626
        %1628 = vmatprep.mubr.f32.mxu0 0.0
        %1629 = vmatmul.mubr.f32.gmra.mrb[0].mxu0 %v1389
        %v1630 = vpop.f32.mrb[0].mxu0
        %v1631 = vadd.f32 0.0, %v1630
        %v1632 = vpop.f32.mrb[0].mxu0
        %v1633 = vadd.f32 0.0, %v1632
        %1634 = vmatprep.mubr.f32.mxu0 0.0
        %1635 = vmatmul.mubr.f32.gmra.mrb[0].mxu0 %v1390
        %v1636 = vpop.f32.mrb[0].mxu0
        %v1637 = vadd.f32 0.0, %v1636
        %v1638 = vpop.f32.mrb[0].mxu0
        %v1639 = vadd.f32 0.0, %v1638
        %1640 = vmatprep.mubr.f32.mxu0 0.0
        %1641 = vmatmul.mubr.f32.gmra.mrb[0].mxu0 %v1391
        %v1642 = vpop.f32.mrb[0].mxu0
        %v1643 = vadd.f32 0.0, %v1642
        %v1644 = vpop.f32.mrb[0].mxu0
        %v1645 = vadd.f32 0.0, %v1644
        %1646 = vmatprep.mubr.f32.mxu0 0.0
        %1647 = vmatmul.mubr.f32.gmra.mrb[0].mxu0 %v1392
        %v1648 = vpop.f32.mrb[0].mxu0
        %v1649 = vadd.f32 0.0, %v1648
        %v1650 = vpop.f32.mrb[0].mxu0
        %v1651 = vadd.f32 0.0, %v1650
        %1652 = vmatprep.mubr.f32.mxu0 0.0
        %1653 = vmatmul.mubr.f32.gmra.mrb[0].mxu0 %v1393
        %v1654 = vpop.f32.mrb[0].mxu0
        %v1655 = vadd.f32 0.0, %v1654
        %v1656 = vpop.f32.mrb[0].mxu0
        %v1657 = vadd.f32 0.0, %v1656
        %1658 = vmatprep.mubr.f32.mxu0 0.0
        %1659 = vmatmul.mubr.f32.gmra.mrb[0].mxu0 %v1394
        %v1660 = vpop.f32.mrb[0].mxu0
        %v1661 = vadd.f32 0.0, %v1660
        %v1662 = vpop.f32.mrb[0].mxu0
        %v1663 = vadd.f32 0.0, %v1662
        %1664 = vmatprep.mubr.f32.mxu0 0.0
        %1665 = vmatmul.mubr.f32.gmra.mrb[0].mxu0 %v1395
        %v1666 = vpop.f32.mrb[0].mxu0
        %v1667 = vadd.f32 0.0, %v1666
        %v1668 = vpop.f32.mrb[0].mxu0
        %v1669 = vadd.f32 0.0, %v1668
        %1670 = vmatprep.mubr.f32.mxu0 0.0
        %1671 = vmatmul.mubr.f32.gmra.mrb[0].mxu0 %v1396
        %v1672 = vpop.f32.mrb[0].mxu0
        %v1673 = vadd.f32 0.0, %v1672
        %v1674 = vpop.f32.mrb[0].mxu0
        %v1675 = vadd.f32 0.0, %v1674
        %1676 = vmatprep.mubr.f32.mxu0 0.0
        %1677 = vmatmul.mubr.f32.gmra.mrb[0].mxu0 %v1397
        %v1678 = vpop.f32.mrb[0].mxu0
        %v1679 = vadd.f32 0.0, %v1678
        %v1680 = vpop.f32.mrb[0].mxu0
        %v1681 = vadd.f32 0.0, %v1680
        %1682 = vmatprep.mubr.f32.mxu0 0.0
        %1683 = vmatmul.mubr.f32.gmra.mrb[0].mxu0 %v1398
        %v1684 = vpop.f32.mrb[0].mxu0
        %v1685 = vadd.f32 0.0, %v1684
        %v1686 = vpop.f32.mrb[0].mxu0
        %v1687 = vadd.f32 0.0, %v1686
        %1688 = vdwg.mxu0
        %v1689 = vadd.f32 %v1300, %v1499
        %v1690 = vadd.f32 %v1301, %v1501
        %v1691 = vadd.f32 %v1302, %v1505
        %v1692 = vadd.f32 %v1303, %v1507
        %v1693 = vadd.f32 %v1304, %v1511
        %v1694 = vadd.f32 %v1305, %v1513
        %v1695 = vadd.f32 %v1306, %v1517
        %v1696 = vadd.f32 %v1307, %v1519
        %v1697 = vadd.f32 %v1308, %v1523
        %v1698 = vadd.f32 %v1309, %v1525
        %v1699 = vadd.f32 %v1310, %v1529
        %v1700 = vadd.f32 %v1311, %v1531
        %v1701 = vadd.f32 %v1312, %v1535
        %v1702 = vadd.f32 %v1313, %v1537
        %v1703 = vadd.f32 %v1314, %v1541
        %v1704 = vadd.f32 %v1315, %v1543
        %v1705 = vadd.f32 %v1316, %v1547
        %v1706 = vadd.f32 %v1317, %v1549
        %v1707 = vadd.f32 %v1318, %v1553
        %v1708 = vadd.f32 %v1319, %v1555
        %v1709 = vadd.f32 %v1320, %v1559
        %v1710 = vadd.f32 %v1321, %v1561
        %v1711 = vadd.f32 %v1322, %v1565
        %v1712 = vadd.f32 %v1323, %v1567
        %v1713 = vadd.f32 %v1324, %v1571
        %v1714 = vadd.f32 %v1325, %v1573
        %v1715 = vadd.f32 %v1326, %v1577
        %v1716 = vadd.f32 %v1327, %v1579
        %v1717 = vadd.f32 %v1328, %v1583
        %v1718 = vadd.f32 %v1329, %v1585
        %v1719 = vadd.f32 %v1330, %v1589
        %v1720 = vadd.f32 %v1331, %v1591
        %v1721 = vadd.f32 %v1332, %v1595
        %v1722 = vadd.f32 %v1333, %v1597
        %v1723 = vadd.f32 %v1334, %v1601
        %v1724 = vadd.f32 %v1335, %v1603
        %v1725 = vadd.f32 %v1336, %v1607
        %v1726 = vadd.f32 %v1337, %v1609
        %v1727 = vadd.f32 %v1338, %v1613
        %v1728 = vadd.f32 %v1339, %v1615
        %v1729 = vadd.f32 %v1340, %v1619
        %v1730 = vadd.f32 %v1341, %v1621
        %v1731 = vadd.f32 %v1342, %v1625
        %v1732 = vadd.f32 %v1343, %v1627
        %v1733 = vadd.f32 %v1344, %v1631
        %v1734 = vadd.f32 %v1345, %v1633
        %v1735 = vadd.f32 %v1346, %v1637
        %v1736 = vadd.f32 %v1347, %v1639
        %v1737 = vadd.f32 %v1348, %v1643
        %v1738 = vadd.f32 %v1349, %v1645
        %v1739 = vadd.f32 %v1350, %v1649
        %v1740 = vadd.f32 %v1351, %v1651
        %v1741 = vadd.f32 %v1352, %v1655
        %v1742 = vadd.f32 %v1353, %v1657
        %v1743 = vadd.f32 %v1354, %v1661
        %v1744 = vadd.f32 %v1355, %v1663
        %v1745 = vadd.f32 %v1356, %v1667
        %v1746 = vadd.f32 %v1357, %v1669
        %v1747 = vadd.f32 %v1358, %v1673
        %v1748 = vadd.f32 %v1359, %v1675
        %v1749 = vadd.f32 %v1360, %v1679
        %v1750 = vadd.f32 %v1361, %v1681
        %v1751 = vadd.f32 %v1362, %v1685
        %v1752 = vadd.f32 %v1363, %v1687
        %v1753 = vld [vmem:[%s1366 + $0x1] sm:$0xff]
        %v1754 = vld [vmem:[%s1366 + $0x9] sm:$0xff]
        %v1755 = vld [vmem:[%s1366 + $0x19] sm:$0xff]
        %v1756 = vld [vmem:[%s1366 + $0x21] sm:$0xff]
        %v1757 = vld [vmem:[%s1366 + $0x31] sm:$0xff]
        %v1758 = vld [vmem:[%s1366 + $0x39] sm:$0xff]
        %v1759 = vld [vmem:[%s1366 + $0x49] sm:$0xff]
        %v1760 = vld [vmem:[%s1366 + $0x51] sm:$0xff]
        %v1761 = vld [vmem:[%s1366 + $0x61] sm:$0xff]
        %v1762 = vld [vmem:[%s1366 + $0x69] sm:$0xff]
        %v1763 = vld [vmem:[%s1366 + $0x79] sm:$0xff]
        %v1764 = vld [vmem:[%s1366 + $0x81] sm:$0xff]
        %v1765 = vld [vmem:[%s1366 + $0x91] sm:$0xff]
        %v1766 = vld [vmem:[%s1366 + $0x99] sm:$0xff]
        %v1767 = vld [vmem:[%s1366 + $0xa9] sm:$0xff]
        %v1768 = vld [vmem:[%s1366 + $0xb1] sm:$0xff]
        %v1769 = vld [vmem:[%s1366 + $0xc1] sm:$0xff]
        %v1770 = vld [vmem:[%s1366 + $0xc9] sm:$0xff]
        %v1771 = vld [vmem:[%s1366 + $0xd9] sm:$0xff]
        %v1772 = vld [vmem:[%s1366 + $0xe1] sm:$0xff]
        %v1773 = vld [vmem:[%s1366 + $0xf1] sm:$0xff]
        %v1774 = vld [vmem:[%s1366 + $0xf9] sm:$0xff]
        %v1775 = vld [vmem:[%s1366 + $0x109] sm:$0xff]
        %v1776 = vld [vmem:[%s1366 + $0x111] sm:$0xff]
        %v1777 = vld [vmem:[%s1366 + $0x121] sm:$0xff]
        %v1778 = vld [vmem:[%s1366 + $0x129] sm:$0xff]
        %v1779 = vld [vmem:[%s1366 + $0x139] sm:$0xff]
        %v1780 = vld [vmem:[%s1366 + $0x141] sm:$0xff]
        %v1781 = vld [vmem:[%s1366 + $0x151] sm:$0xff]
        %v1782 = vld [vmem:[%s1366 + $0x159] sm:$0xff]
        %v1783 = vld [vmem:[%s1366 + $0x169] sm:$0xff]
        %v1784 = vld [vmem:[%s1366 + $0x171] sm:$0xff]
        %s1785 = scalar_lea.vmem [#allocation2], 1024
        %v1786 = vld [vmem:[%s1785] sm:$0xff]
        %v1787 = vld [vmem:[%s1785 + $0x8] sm:$0xff]
        %v1788 = vld [vmem:[%s1785 + $0x10] sm:$0xff]
        %v1789 = vld [vmem:[%s1785 + $0x18] sm:$0xff]
        %v1790 = vld [vmem:[%s1785 + $0x20] sm:$0xff]
        %v1791 = vld [vmem:[%s1785 + $0x28] sm:$0xff]
        %v1792 = vld [vmem:[%s1785 + $0x30] sm:$0xff]
        %v1793 = vld [vmem:[%s1785 + $0x38] sm:$0xff]
        %v1794 = vld [vmem:[%s1785 + $0x40] sm:$0xff]
        %v1795 = vld [vmem:[%s1785 + $0x48] sm:$0xff]
        %v1796 = vld [vmem:[%s1785 + $0x50] sm:$0xff]
        %v1797 = vld [vmem:[%s1785 + $0x58] sm:$0xff]
        %v1798 = vld [vmem:[%s1785 + $0x60] sm:$0xff]
        %v1799 = vld [vmem:[%s1785 + $0x68] sm:$0xff]
        %v1800 = vld [vmem:[%s1785 + $0x70] sm:$0xff]
        %v1801 = vld [vmem:[%s1785 + $0x78] sm:$0xff]
        %v1802 = vld [vmem:[%s1785 + $0x80] sm:$0xff]
        %v1803 = vld [vmem:[%s1785 + $0x88] sm:$0xff]
        %v1804 = vld [vmem:[%s1785 + $0x90] sm:$0xff]
        %v1805 = vld [vmem:[%s1785 + $0x98] sm:$0xff]
        %v1806 = vld [vmem:[%s1785 + $0xa0] sm:$0xff]
        %v1807 = vld [vmem:[%s1785 + $0xa8] sm:$0xff]
        %v1808 = vld [vmem:[%s1785 + $0xb0] sm:$0xff]
        %v1809 = vld [vmem:[%s1785 + $0xb8] sm:$0xff]
        %v1810 = vld [vmem:[%s1785 + $0xc0] sm:$0xff]
        %v1811 = vld [vmem:[%s1785 + $0xc8] sm:$0xff]
        %v1812 = vld [vmem:[%s1785 + $0xd0] sm:$0xff]
        %v1813 = vld [vmem:[%s1785 + $0xd8] sm:$0xff]
        %v1814 = vld [vmem:[%s1785 + $0xe0] sm:$0xff]
        %v1815 = vld [vmem:[%s1785 + $0xe8] sm:$0xff]
        %v1816 = vld [vmem:[%s1785 + $0xf0] sm:$0xff]
        %v1817 = vld [vmem:[%s1785 + $0xf8] sm:$0xff]
        %1818 = vmatprep.subr.mxu0 %v1787
        %1819 = vmatpush1.msra.mxu0 %v1786
        %1820 = vmatprep.subr.mxu0 %v1789
        %1821 = vmatpush1.msra.mxu0 %v1788
        %1822 = vmatprep.subr.mxu0 %v1791
        %1823 = vmatpush1.msra.mxu0 %v1790
        %1824 = vmatprep.subr.mxu0 %v1793
        %1825 = vmatpush1.msra.mxu0 %v1792
        %1826 = vmatprep.subr.mxu0 %v1795
        %1827 = vmatpush1.msra.mxu0 %v1794
        %1828 = vmatprep.subr.mxu0 %v1797
        %1829 = vmatpush1.msra.mxu0 %v1796
        %1830 = vmatprep.subr.mxu0 %v1799
        %1831 = vmatpush1.msra.mxu0 %v1798
        %1832 = vmatprep.subr.mxu0 %v1801
        %1833 = vmatpush1.msra.mxu0 %v1800
        %1834 = vmatprep.subr.mxu0 %v1803
        %1835 = vmatpush1.msra.mxu0 %v1802
        %1836 = vmatprep.subr.mxu0 %v1805
        %1837 = vmatpush1.msra.mxu0 %v1804
        %1838 = vmatprep.subr.mxu0 %v1807
        %1839 = vmatpush1.msra.mxu0 %v1806
        %1840 = vmatprep.subr.mxu0 %v1809
        %1841 = vmatpush1.msra.mxu0 %v1808
        %1842 = vmatprep.subr.mxu0 %v1811
        %1843 = vmatpush1.msra.mxu0 %v1810
        %1844 = vmatprep.subr.mxu0 %v1813
        %1845 = vmatpush1.msra.mxu0 %v1812
        %1846 = vmatprep.subr.mxu0 %v1815
        %1847 = vmatpush1.msra.mxu0 %v1814
        %1848 = vmatprep.subr.mxu0 %v1817
        %1849 = vmatpush1.msra.mxu0 %v1816
        %1850 = vmatprep.subr.mxu0 0.0
        %1851 = vmatpush1.msra.mxu0 0.0
        %1852 = vmatprep.subr.mxu0 0.0
        %1853 = vmatpush1.msra.mxu0 0.0
        %1854 = vmatprep.subr.mxu0 0.0
        %1855 = vmatpush1.msra.mxu0 0.0
        %1856 = vmatprep.subr.mxu0 0.0
        %1857 = vmatpush1.msra.mxu0 0.0
        %1858 = vmatprep.subr.mxu0 0.0
        %1859 = vmatpush1.msra.mxu0 0.0
        %1860 = vmatprep.subr.mxu0 0.0
        %1861 = vmatpush1.msra.mxu0 0.0
        %1862 = vmatprep.subr.mxu0 0.0
        %1863 = vmatpush1.msra.mxu0 0.0
        %1864 = vmatprep.subr.mxu0 0.0
        %1865 = vmatpush1.msra.mxu0 0.0
        %1866 = vmatprep.subr.mxu0 0.0
        %1867 = vmatpush1.msra.mxu0 0.0
        %1868 = vmatprep.subr.mxu0 0.0
        %1869 = vmatpush1.msra.mxu0 0.0
        %1870 = vmatprep.subr.mxu0 0.0
        %1871 = vmatpush1.msra.mxu0 0.0
        %1872 = vmatprep.subr.mxu0 0.0
        %1873 = vmatpush1.msra.mxu0 0.0
        %1874 = vmatprep.subr.mxu0 0.0
        %1875 = vmatpush1.msra.mxu0 0.0
        %1876 = vmatprep.subr.mxu0 0.0
        %1877 = vmatpush1.msra.mxu0 0.0
        %1878 = vmatprep.subr.mxu0 0.0
        %1879 = vmatpush1.msra.mxu0 0.0
        %1880 = vmatprep.subr.mxu0 0.0
        %1881 = vmatpush1.msra.mxu0 0.0
        %1882 = vmatprep.mubr.f32.mxu0 0.0
        %1883 = vmatmul.mubr.f32.gmra.mrb[0].mxu0 %v1753
        %v1884 = vpop.f32.mrb[0].mxu0
        %v1885 = vadd.f32 0.0, %v1884
        %v1886 = vpop.f32.mrb[0].mxu0
        %v1887 = vadd.f32 0.0, %v1886
        %1888 = vmatprep.mubr.f32.mxu0 0.0
        %1889 = vmatmul.mubr.f32.gmra.mrb[0].mxu0 %v1754
        %v1890 = vpop.f32.mrb[0].mxu0
        %v1891 = vadd.f32 0.0, %v1890
        %v1892 = vpop.f32.mrb[0].mxu0
        %v1893 = vadd.f32 0.0, %v1892
        %1894 = vmatprep.mubr.f32.mxu0 0.0
        %1895 = vmatmul.mubr.f32.gmra.mrb[0].mxu0 %v1755
        %v1896 = vpop.f32.mrb[0].mxu0
        %v1897 = vadd.f32 0.0, %v1896
        %v1898 = vpop.f32.mrb[0].mxu0
        %v1899 = vadd.f32 0.0, %v1898
        %1900 = vmatprep.mubr.f32.mxu0 0.0
        %1901 = vmatmul.mubr.f32.gmra.mrb[0].mxu0 %v1756
        %v1902 = vpop.f32.mrb[0].mxu0
        %v1903 = vadd.f32 0.0, %v1902
        %v1904 = vpop.f32.mrb[0].mxu0
        %v1905 = vadd.f32 0.0, %v1904
        %1906 = vmatprep.mubr.f32.mxu0 0.0
        %1907 = vmatmul.mubr.f32.gmra.mrb[0].mxu0 %v1757
        %v1908 = vpop.f32.mrb[0].mxu0
        %v1909 = vadd.f32 0.0, %v1908
        %v1910 = vpop.f32.mrb[0].mxu0
        %v1911 = vadd.f32 0.0, %v1910
        %1912 = vmatprep.mubr.f32.mxu0 0.0
        %1913 = vmatmul.mubr.f32.gmra.mrb[0].mxu0 %v1758
        %v1914 = vpop.f32.mrb[0].mxu0
        %v1915 = vadd.f32 0.0, %v1914
        %v1916 = vpop.f32.mrb[0].mxu0
        %v1917 = vadd.f32 0.0, %v1916
        %1918 = vmatprep.mubr.f32.mxu0 0.0
        %1919 = vmatmul.mubr.f32.gmra.mrb[0].mxu0 %v1759
        %v1920 = vpop.f32.mrb[0].mxu0
        %v1921 = vadd.f32 0.0, %v1920
        %v1922 = vpop.f32.mrb[0].mxu0
        %v1923 = vadd.f32 0.0, %v1922
        %1924 = vmatprep.mubr.f32.mxu0 0.0
        %1925 = vmatmul.mubr.f32.gmra.mrb[0].mxu0 %v1760
        %v1926 = vpop.f32.mrb[0].mxu0
        %v1927 = vadd.f32 0.0, %v1926
        %v1928 = vpop.f32.mrb[0].mxu0
        %v1929 = vadd.f32 0.0, %v1928
        %1930 = vmatprep.mubr.f32.mxu0 0.0
        %1931 = vmatmul.mubr.f32.gmra.mrb[0].mxu0 %v1761
        %v1932 = vpop.f32.mrb[0].mxu0
        %v1933 = vadd.f32 0.0, %v1932
        %v1934 = vpop.f32.mrb[0].mxu0
        %v1935 = vadd.f32 0.0, %v1934
        %1936 = vmatprep.mubr.f32.mxu0 0.0
        %1937 = vmatmul.mubr.f32.gmra.mrb[0].mxu0 %v1762
        %v1938 = vpop.f32.mrb[0].mxu0
        %v1939 = vadd.f32 0.0, %v1938
        %v1940 = vpop.f32.mrb[0].mxu0
        %v1941 = vadd.f32 0.0, %v1940
        %1942 = vmatprep.mubr.f32.mxu0 0.0
        %1943 = vmatmul.mubr.f32.gmra.mrb[0].mxu0 %v1763
        %v1944 = vpop.f32.mrb[0].mxu0
        %v1945 = vadd.f32 0.0, %v1944
        %v1946 = vpop.f32.mrb[0].mxu0
        %v1947 = vadd.f32 0.0, %v1946
        %1948 = vmatprep.mubr.f32.mxu0 0.0
        %1949 = vmatmul.mubr.f32.gmra.mrb[0].mxu0 %v1764
        %v1950 = vpop.f32.mrb[0].mxu0
        %v1951 = vadd.f32 0.0, %v1950
        %v1952 = vpop.f32.mrb[0].mxu0
        %v1953 = vadd.f32 0.0, %v1952
        %1954 = vmatprep.mubr.f32.mxu0 0.0
        %1955 = vmatmul.mubr.f32.gmra.mrb[0].mxu0 %v1765
        %v1956 = vpop.f32.mrb[0].mxu0
        %v1957 = vadd.f32 0.0, %v1956
        %v1958 = vpop.f32.mrb[0].mxu0
        %v1959 = vadd.f32 0.0, %v1958
        %1960 = vmatprep.mubr.f32.mxu0 0.0
        %1961 = vmatmul.mubr.f32.gmra.mrb[0].mxu0 %v1766
        %v1962 = vpop.f32.mrb[0].mxu0
        %v1963 = vadd.f32 0.0, %v1962
        %v1964 = vpop.f32.mrb[0].mxu0
        %v1965 = vadd.f32 0.0, %v1964
        %1966 = vmatprep.mubr.f32.mxu0 0.0
        %1967 = vmatmul.mubr.f32.gmra.mrb[0].mxu0 %v1767
        %v1968 = vpop.f32.mrb[0].mxu0
        %v1969 = vadd.f32 0.0, %v1968
        %v1970 = vpop.f32.mrb[0].mxu0
        %v1971 = vadd.f32 0.0, %v1970
        %1972 = vmatprep.mubr.f32.mxu0 0.0
        %1973 = vmatmul.mubr.f32.gmra.mrb[0].mxu0 %v1768
        %v1974 = vpop.f32.mrb[0].mxu0
        %v1975 = vadd.f32 0.0, %v1974
        %v1976 = vpop.f32.mrb[0].mxu0
        %v1977 = vadd.f32 0.0, %v1976
        %1978 = vmatprep.mubr.f32.mxu0 0.0
        %1979 = vmatmul.mubr.f32.gmra.mrb[0].mxu0 %v1769
        %v1980 = vpop.f32.mrb[0].mxu0
        %v1981 = vadd.f32 0.0, %v1980
        %v1982 = vpop.f32.mrb[0].mxu0
        %v1983 = vadd.f32 0.0, %v1982
        %1984 = vmatprep.mubr.f32.mxu0 0.0
        %1985 = vmatmul.mubr.f32.gmra.mrb[0].mxu0 %v1770
        %v1986 = vpop.f32.mrb[0].mxu0
        %v1987 = vadd.f32 0.0, %v1986
        %v1988 = vpop.f32.mrb[0].mxu0
        %v1989 = vadd.f32 0.0, %v1988
        %1990 = vmatprep.mubr.f32.mxu0 0.0
        %1991 = vmatmul.mubr.f32.gmra.mrb[0].mxu0 %v1771
        %v1992 = vpop.f32.mrb[0].mxu0
        %v1993 = vadd.f32 0.0, %v1992
        %v1994 = vpop.f32.mrb[0].mxu0
        %v1995 = vadd.f32 0.0, %v1994
        %1996 = vmatprep.mubr.f32.mxu0 0.0
        %1997 = vmatmul.mubr.f32.gmra.mrb[0].mxu0 %v1772
        %v1998 = vpop.f32.mrb[0].mxu0
        %v1999 = vadd.f32 0.0, %v1998
        %v2000 = vpop.f32.mrb[0].mxu0
        %v2001 = vadd.f32 0.0, %v2000
        %2002 = vmatprep.mubr.f32.mxu0 0.0
        %2003 = vmatmul.mubr.f32.gmra.mrb[0].mxu0 %v1773
        %v2004 = vpop.f32.mrb[0].mxu0
        %v2005 = vadd.f32 0.0, %v2004
        %v2006 = vpop.f32.mrb[0].mxu0
        %v2007 = vadd.f32 0.0, %v2006
        %2008 = vmatprep.mubr.f32.mxu0 0.0
        %2009 = vmatmul.mubr.f32.gmra.mrb[0].mxu0 %v1774
        %v2010 = vpop.f32.mrb[0].mxu0
        %v2011 = vadd.f32 0.0, %v2010
        %v2012 = vpop.f32.mrb[0].mxu0
        %v2013 = vadd.f32 0.0, %v2012
        %2014 = vmatprep.mubr.f32.mxu0 0.0
        %2015 = vmatmul.mubr.f32.gmra.mrb[0].mxu0 %v1775
        %v2016 = vpop.f32.mrb[0].mxu0
        %v2017 = vadd.f32 0.0, %v2016
        %v2018 = vpop.f32.mrb[0].mxu0
        %v2019 = vadd.f32 0.0, %v2018
        %2020 = vmatprep.mubr.f32.mxu0 0.0
        %2021 = vmatmul.mubr.f32.gmra.mrb[0].mxu0 %v1776
        %v2022 = vpop.f32.mrb[0].mxu0
        %v2023 = vadd.f32 0.0, %v2022
        %v2024 = vpop.f32.mrb[0].mxu0
        %v2025 = vadd.f32 0.0, %v2024
        %2026 = vmatprep.mubr.f32.mxu0 0.0
        %2027 = vmatmul.mubr.f32.gmra.mrb[0].mxu0 %v1777
        %v2028 = vpop.f32.mrb[0].mxu0
        %v2029 = vadd.f32 0.0, %v2028
        %v2030 = vpop.f32.mrb[0].mxu0
        %v2031 = vadd.f32 0.0, %v2030
        %2032 = vmatprep.mubr.f32.mxu0 0.0
        %2033 = vmatmul.mubr.f32.gmra.mrb[0].mxu0 %v1778
        %v2034 = vpop.f32.mrb[0].mxu0
        %v2035 = vadd.f32 0.0, %v2034
        %v2036 = vpop.f32.mrb[0].mxu0
        %v2037 = vadd.f32 0.0, %v2036
        %2038 = vmatprep.mubr.f32.mxu0 0.0
        %2039 = vmatmul.mubr.f32.gmra.mrb[0].mxu0 %v1779
        %v2040 = vpop.f32.mrb[0].mxu0
        %v2041 = vadd.f32 0.0, %v2040
        %v2042 = vpop.f32.mrb[0].mxu0
        %v2043 = vadd.f32 0.0, %v2042
        %2044 = vmatprep.mubr.f32.mxu0 0.0
        %2045 = vmatmul.mubr.f32.gmra.mrb[0].mxu0 %v1780
        %v2046 = vpop.f32.mrb[0].mxu0
        %v2047 = vadd.f32 0.0, %v2046
        %v2048 = vpop.f32.mrb[0].mxu0
        %v2049 = vadd.f32 0.0, %v2048
        %2050 = vmatprep.mubr.f32.mxu0 0.0
        %2051 = vmatmul.mubr.f32.gmra.mrb[0].mxu0 %v1781
        %v2052 = vpop.f32.mrb[0].mxu0
        %v2053 = vadd.f32 0.0, %v2052
        %v2054 = vpop.f32.mrb[0].mxu0
        %v2055 = vadd.f32 0.0, %v2054
        %2056 = vmatprep.mubr.f32.mxu0 0.0
        %2057 = vmatmul.mubr.f32.gmra.mrb[0].mxu0 %v1782
        %v2058 = vpop.f32.mrb[0].mxu0
        %v2059 = vadd.f32 0.0, %v2058
        %v2060 = vpop.f32.mrb[0].mxu0
        %v2061 = vadd.f32 0.0, %v2060
        %2062 = vmatprep.mubr.f32.mxu0 0.0
        %2063 = vmatmul.mubr.f32.gmra.mrb[0].mxu0 %v1783
        %v2064 = vpop.f32.mrb[0].mxu0
        %v2065 = vadd.f32 0.0, %v2064
        %v2066 = vpop.f32.mrb[0].mxu0
        %v2067 = vadd.f32 0.0, %v2066
        %2068 = vmatprep.mubr.f32.mxu0 0.0
        %2069 = vmatmul.mubr.f32.gmra.mrb[0].mxu0 %v1784
        %v2070 = vpop.f32.mrb[0].mxu0
        %v2071 = vadd.f32 0.0, %v2070
        %v2072 = vpop.f32.mrb[0].mxu0
        %v2073 = vadd.f32 0.0, %v2072
        %2074 = vdwg.mxu0
        %v2075 = vadd.f32 %v1689, %v1885
        %v2076 = vadd.f32 %v1690, %v1887
        %v2077 = vadd.f32 %v1691, %v1891
        %v2078 = vadd.f32 %v1692, %v1893
        %v2079 = vadd.f32 %v1693, %v1897
        %v2080 = vadd.f32 %v1694, %v1899
        %v2081 = vadd.f32 %v1695, %v1903
        %v2082 = vadd.f32 %v1696, %v1905
        %v2083 = vadd.f32 %v1697, %v1909
        %v2084 = vadd.f32 %v1698, %v1911
        %v2085 = vadd.f32 %v1699, %v1915
        %v2086 = vadd.f32 %v1700, %v1917
        %v2087 = vadd.f32 %v1701, %v1921
        %v2088 = vadd.f32 %v1702, %v1923
        %v2089 = vadd.f32 %v1703, %v1927
        %v2090 = vadd.f32 %v1704, %v1929
        %v2091 = vadd.f32 %v1705, %v1933
        %v2092 = vadd.f32 %v1706, %v1935
        %v2093 = vadd.f32 %v1707, %v1939
        %v2094 = vadd.f32 %v1708, %v1941
        %v2095 = vadd.f32 %v1709, %v1945
        %v2096 = vadd.f32 %v1710, %v1947
        %v2097 = vadd.f32 %v1711, %v1951
        %v2098 = vadd.f32 %v1712, %v1953
        %v2099 = vadd.f32 %v1713, %v1957
        %v2100 = vadd.f32 %v1714, %v1959
        %v2101 = vadd.f32 %v1715, %v1963
        %v2102 = vadd.f32 %v1716, %v1965
        %v2103 = vadd.f32 %v1717, %v1969
        %v2104 = vadd.f32 %v1718, %v1971
        %v2105 = vadd.f32 %v1719, %v1975
        %v2106 = vadd.f32 %v1720, %v1977
        %v2107 = vadd.f32 %v1721, %v1981
        %v2108 = vadd.f32 %v1722, %v1983
        %v2109 = vadd.f32 %v1723, %v1987
        %v2110 = vadd.f32 %v1724, %v1989
        %v2111 = vadd.f32 %v1725, %v1993
        %v2112 = vadd.f32 %v1726, %v1995
        %v2113 = vadd.f32 %v1727, %v1999
        %v2114 = vadd.f32 %v1728, %v2001
        %v2115 = vadd.f32 %v1729, %v2005
        %v2116 = vadd.f32 %v1730, %v2007
        %v2117 = vadd.f32 %v1731, %v2011
        %v2118 = vadd.f32 %v1732, %v2013
        %v2119 = vadd.f32 %v1733, %v2017
        %v2120 = vadd.f32 %v1734, %v2019
        %v2121 = vadd.f32 %v1735, %v2023
        %v2122 = vadd.f32 %v1736, %v2025
        %v2123 = vadd.f32 %v1737, %v2029
        %v2124 = vadd.f32 %v1738, %v2031
        %v2125 = vadd.f32 %v1739, %v2035
        %v2126 = vadd.f32 %v1740, %v2037
        %v2127 = vadd.f32 %v1741, %v2041
        %v2128 = vadd.f32 %v1742, %v2043
        %v2129 = vadd.f32 %v1743, %v2047
        %v2130 = vadd.f32 %v1744, %v2049
        %v2131 = vadd.f32 %v1745, %v2053
        %v2132 = vadd.f32 %v1746, %v2055
        %v2133 = vadd.f32 %v1747, %v2059
        %v2134 = vadd.f32 %v1748, %v2061
        %v2135 = vadd.f32 %v1749, %v2065
        %v2136 = vadd.f32 %v1750, %v2067
        %v2137 = vadd.f32 %v1751, %v2071
        %v2138 = vadd.f32 %v1752, %v2073
        %v2139 = vld [vmem:[%s1366 + $0x2] sm:$0xff]
        %v2140 = vld [vmem:[%s1366 + $0xa] sm:$0xff]
        %v2141 = vld [vmem:[%s1366 + $0x1a] sm:$0xff]
        %v2142 = vld [vmem:[%s1366 + $0x22] sm:$0xff]
        %v2143 = vld [vmem:[%s1366 + $0x32] sm:$0xff]
        %v2144 = vld [vmem:[%s1366 + $0x3a] sm:$0xff]
        %v2145 = vld [vmem:[%s1366 + $0x4a] sm:$0xff]
        %v2146 = vld [vmem:[%s1366 + $0x52] sm:$0xff]
        %v2147 = vld [vmem:[%s1366 + $0x62] sm:$0xff]
        %v2148 = vld [vmem:[%s1366 + $0x6a] sm:$0xff]
        %v2149 = vld [vmem:[%s1366 + $0x7a] sm:$0xff]
        %v2150 = vld [vmem:[%s1366 + $0x82] sm:$0xff]
        %v2151 = vld [vmem:[%s1366 + $0x92] sm:$0xff]
        %v2152 = vld [vmem:[%s1366 + $0x9a] sm:$0xff]
        %v2153 = vld [vmem:[%s1366 + $0xaa] sm:$0xff]
        %v2154 = vld [vmem:[%s1366 + $0xb2] sm:$0xff]
        %v2155 = vld [vmem:[%s1366 + $0xc2] sm:$0xff]
        %v2156 = vld [vmem:[%s1366 + $0xca] sm:$0xff]
        %v2157 = vld [vmem:[%s1366 + $0xda] sm:$0xff]
        %v2158 = vld [vmem:[%s1366 + $0xe2] sm:$0xff]
        %v2159 = vld [vmem:[%s1366 + $0xf2] sm:$0xff]
        %v2160 = vld [vmem:[%s1366 + $0xfa] sm:$0xff]
        %v2161 = vld [vmem:[%s1366 + $0x10a] sm:$0xff]
        %v2162 = vld [vmem:[%s1366 + $0x112] sm:$0xff]
        %v2163 = vld [vmem:[%s1366 + $0x122] sm:$0xff]
        %v2164 = vld [vmem:[%s1366 + $0x12a] sm:$0xff]
        %v2165 = vld [vmem:[%s1366 + $0x13a] sm:$0xff]
        %v2166 = vld [vmem:[%s1366 + $0x142] sm:$0xff]
        %v2167 = vld [vmem:[%s1366 + $0x152] sm:$0xff]
        %v2168 = vld [vmem:[%s1366 + $0x15a] sm:$0xff]
        %v2169 = vld [vmem:[%s1366 + $0x16a] sm:$0xff]
        %v2170 = vld [vmem:[%s1366 + $0x172] sm:$0xff]
        %s2171 = scalar_lea.vmem [#allocation2], 1280
        %v2172 = vld [vmem:[%s2171] sm:$0xff]
        %v2173 = vld [vmem:[%s2171 + $0x8] sm:$0xff]
        %v2174 = vld [vmem:[%s2171 + $0x10] sm:$0xff]
        %v2175 = vld [vmem:[%s2171 + $0x18] sm:$0xff]
        %v2176 = vld [vmem:[%s2171 + $0x20] sm:$0xff]
        %v2177 = vld [vmem:[%s2171 + $0x28] sm:$0xff]
        %v2178 = vld [vmem:[%s2171 + $0x30] sm:$0xff]
        %v2179 = vld [vmem:[%s2171 + $0x38] sm:$0xff]
        %v2180 = vld [vmem:[%s2171 + $0x40] sm:$0xff]
        %v2181 = vld [vmem:[%s2171 + $0x48] sm:$0xff]
        %v2182 = vld [vmem:[%s2171 + $0x50] sm:$0xff]
        %v2183 = vld [vmem:[%s2171 + $0x58] sm:$0xff]
        %v2184 = vld [vmem:[%s2171 + $0x60] sm:$0xff]
        %v2185 = vld [vmem:[%s2171 + $0x68] sm:$0xff]
        %v2186 = vld [vmem:[%s2171 + $0x70] sm:$0xff]
        %v2187 = vld [vmem:[%s2171 + $0x78] sm:$0xff]
        %v2188 = vld [vmem:[%s2171 + $0x80] sm:$0xff]
        %v2189 = vld [vmem:[%s2171 + $0x88] sm:$0xff]
        %v2190 = vld [vmem:[%s2171 + $0x90] sm:$0xff]
        %v2191 = vld [vmem:[%s2171 + $0x98] sm:$0xff]
        %v2192 = vld [vmem:[%s2171 + $0xa0] sm:$0xff]
        %v2193 = vld [vmem:[%s2171 + $0xa8] sm:$0xff]
        %v2194 = vld [vmem:[%s2171 + $0xb0] sm:$0xff]
        %v2195 = vld [vmem:[%s2171 + $0xb8] sm:$0xff]
        %v2196 = vld [vmem:[%s2171 + $0xc0] sm:$0xff]
        %v2197 = vld [vmem:[%s2171 + $0xc8] sm:$0xff]
        %v2198 = vld [vmem:[%s2171 + $0xd0] sm:$0xff]
        %v2199 = vld [vmem:[%s2171 + $0xd8] sm:$0xff]
        %v2200 = vld [vmem:[%s2171 + $0xe0] sm:$0xff]
        %v2201 = vld [vmem:[%s2171 + $0xe8] sm:$0xff]
        %v2202 = vld [vmem:[%s2171 + $0xf0] sm:$0xff]
        %v2203 = vld [vmem:[%s2171 + $0xf8] sm:$0xff]
        %2204 = vmatprep.subr.mxu0 %v2173
        %2205 = vmatpush1.msra.mxu0 %v2172
        %2206 = vmatprep.subr.mxu0 %v2175
        %2207 = vmatpush1.msra.mxu0 %v2174
        %2208 = vmatprep.subr.mxu0 %v2177
        %2209 = vmatpush1.msra.mxu0 %v2176
        %2210 = vmatprep.subr.mxu0 %v2179
        %2211 = vmatpush1.msra.mxu0 %v2178
        %2212 = vmatprep.subr.mxu0 %v2181
        %2213 = vmatpush1.msra.mxu0 %v2180
        %2214 = vmatprep.subr.mxu0 %v2183
        %2215 = vmatpush1.msra.mxu0 %v2182
        %2216 = vmatprep.subr.mxu0 %v2185
        %2217 = vmatpush1.msra.mxu0 %v2184
        %2218 = vmatprep.subr.mxu0 %v2187
        %2219 = vmatpush1.msra.mxu0 %v2186
        %2220 = vmatprep.subr.mxu0 %v2189
        %2221 = vmatpush1.msra.mxu0 %v2188
        %2222 = vmatprep.subr.mxu0 %v2191
        %2223 = vmatpush1.msra.mxu0 %v2190
        %2224 = vmatprep.subr.mxu0 %v2193
        %2225 = vmatpush1.msra.mxu0 %v2192
        %2226 = vmatprep.subr.mxu0 %v2195
        %2227 = vmatpush1.msra.mxu0 %v2194
        %2228 = vmatprep.subr.mxu0 %v2197
        %2229 = vmatpush1.msra.mxu0 %v2196
        %2230 = vmatprep.subr.mxu0 %v2199
        %2231 = vmatpush1.msra.mxu0 %v2198
        %2232 = vmatprep.subr.mxu0 %v2201
        %2233 = vmatpush1.msra.mxu0 %v2200
        %2234 = vmatprep.subr.mxu0 %v2203
        %2235 = vmatpush1.msra.mxu0 %v2202
        %2236 = vmatprep.subr.mxu0 0.0
        %2237 = vmatpush1.msra.mxu0 0.0
        %2238 = vmatprep.subr.mxu0 0.0
        %2239 = vmatpush1.msra.mxu0 0.0
        %2240 = vmatprep.subr.mxu0 0.0
        %2241 = vmatpush1.msra.mxu0 0.0
        %2242 = vmatprep.subr.mxu0 0.0
        %2243 = vmatpush1.msra.mxu0 0.0
        %2244 = vmatprep.subr.mxu0 0.0
        %2245 = vmatpush1.msra.mxu0 0.0
        %2246 = vmatprep.subr.mxu0 0.0
        %2247 = vmatpush1.msra.mxu0 0.0
        %2248 = vmatprep.subr.mxu0 0.0
        %2249 = vmatpush1.msra.mxu0 0.0
        %2250 = vmatprep.subr.mxu0 0.0
        %2251 = vmatpush1.msra.mxu0 0.0
        %2252 = vmatprep.subr.mxu0 0.0
        %2253 = vmatpush1.msra.mxu0 0.0
        %2254 = vmatprep.subr.mxu0 0.0
        %2255 = vmatpush1.msra.mxu0 0.0
        %2256 = vmatprep.subr.mxu0 0.0
        %2257 = vmatpush1.msra.mxu0 0.0
        %2258 = vmatprep.subr.mxu0 0.0
        %2259 = vmatpush1.msra.mxu0 0.0
        %2260 = vmatprep.subr.mxu0 0.0
        %2261 = vmatpush1.msra.mxu0 0.0
        %2262 = vmatprep.subr.mxu0 0.0
        %2263 = vmatpush1.msra.mxu0 0.0
        %2264 = vmatprep.subr.mxu0 0.0
        %2265 = vmatpush1.msra.mxu0 0.0
        %2266 = vmatprep.subr.mxu0 0.0
        %2267 = vmatpush1.msra.mxu0 0.0
        %2268 = vmatprep.mubr.f32.mxu0 0.0
        %2269 = vmatmul.mubr.f32.gmra.mrb[0].mxu0 %v2139
        %v2270 = vpop.f32.mrb[0].mxu0
        %v2271 = vadd.f32 0.0, %v2270
        %v2272 = vpop.f32.mrb[0].mxu0
        %v2273 = vadd.f32 0.0, %v2272
        %2274 = vmatprep.mubr.f32.mxu0 0.0
        %2275 = vmatmul.mubr.f32.gmra.mrb[0].mxu0 %v2140
        %v2276 = vpop.f32.mrb[0].mxu0
        %v2277 = vadd.f32 0.0, %v2276
        %v2278 = vpop.f32.mrb[0].mxu0
        %v2279 = vadd.f32 0.0, %v2278
        %2280 = vmatprep.mubr.f32.mxu0 0.0
        %2281 = vmatmul.mubr.f32.gmra.mrb[0].mxu0 %v2141
        %v2282 = vpop.f32.mrb[0].mxu0
        %v2283 = vadd.f32 0.0, %v2282
        %v2284 = vpop.f32.mrb[0].mxu0
        %v2285 = vadd.f32 0.0, %v2284
        %2286 = vmatprep.mubr.f32.mxu0 0.0
        %2287 = vmatmul.mubr.f32.gmra.mrb[0].mxu0 %v2142
        %v2288 = vpop.f32.mrb[0].mxu0
        %v2289 = vadd.f32 0.0, %v2288
        %v2290 = vpop.f32.mrb[0].mxu0
        %v2291 = vadd.f32 0.0, %v2290
        %2292 = vmatprep.mubr.f32.mxu0 0.0
        %2293 = vmatmul.mubr.f32.gmra.mrb[0].mxu0 %v2143
        %v2294 = vpop.f32.mrb[0].mxu0
        %v2295 = vadd.f32 0.0, %v2294
        %v2296 = vpop.f32.mrb[0].mxu0
        %v2297 = vadd.f32 0.0, %v2296
        %2298 = vmatprep.mubr.f32.mxu0 0.0
        %2299 = vmatmul.mubr.f32.gmra.mrb[0].mxu0 %v2144
        %v2300 = vpop.f32.mrb[0].mxu0
        %v2301 = vadd.f32 0.0, %v2300
        %v2302 = vpop.f32.mrb[0].mxu0
        %v2303 = vadd.f32 0.0, %v2302
        %2304 = vmatprep.mubr.f32.mxu0 0.0
        %2305 = vmatmul.mubr.f32.gmra.mrb[0].mxu0 %v2145
        %v2306 = vpop.f32.mrb[0].mxu0
        %v2307 = vadd.f32 0.0, %v2306
        %v2308 = vpop.f32.mrb[0].mxu0
        %v2309 = vadd.f32 0.0, %v2308
        %2310 = vmatprep.mubr.f32.mxu0 0.0
        %2311 = vmatmul.mubr.f32.gmra.mrb[0].mxu0 %v2146
        %v2312 = vpop.f32.mrb[0].mxu0
        %v2313 = vadd.f32 0.0, %v2312
        %v2314 = vpop.f32.mrb[0].mxu0
        %v2315 = vadd.f32 0.0, %v2314
        %2316 = vmatprep.mubr.f32.mxu0 0.0
        %2317 = vmatmul.mubr.f32.gmra.mrb[0].mxu0 %v2147
        %v2318 = vpop.f32.mrb[0].mxu0
        %v2319 = vadd.f32 0.0, %v2318
        %v2320 = vpop.f32.mrb[0].mxu0
        %v2321 = vadd.f32 0.0, %v2320
        %2322 = vmatprep.mubr.f32.mxu0 0.0
        %2323 = vmatmul.mubr.f32.gmra.mrb[0].mxu0 %v2148
        %v2324 = vpop.f32.mrb[0].mxu0
        %v2325 = vadd.f32 0.0, %v2324
        %v2326 = vpop.f32.mrb[0].mxu0
        %v2327 = vadd.f32 0.0, %v2326
        %2328 = vmatprep.mubr.f32.mxu0 0.0
        %2329 = vmatmul.mubr.f32.gmra.mrb[0].mxu0 %v2149
        %v2330 = vpop.f32.mrb[0].mxu0
        %v2331 = vadd.f32 0.0, %v2330
        %v2332 = vpop.f32.mrb[0].mxu0
        %v2333 = vadd.f32 0.0, %v2332
        %2334 = vmatprep.mubr.f32.mxu0 0.0
        %2335 = vmatmul.mubr.f32.gmra.mrb[0].mxu0 %v2150
        %v2336 = vpop.f32.mrb[0].mxu0
        %v2337 = vadd.f32 0.0, %v2336
        %v2338 = vpop.f32.mrb[0].mxu0
        %v2339 = vadd.f32 0.0, %v2338
        %2340 = vmatprep.mubr.f32.mxu0 0.0
        %2341 = vmatmul.mubr.f32.gmra.mrb[0].mxu0 %v2151
        %v2342 = vpop.f32.mrb[0].mxu0
        %v2343 = vadd.f32 0.0, %v2342
        %v2344 = vpop.f32.mrb[0].mxu0
        %v2345 = vadd.f32 0.0, %v2344
        %2346 = vmatprep.mubr.f32.mxu0 0.0
        %2347 = vmatmul.mubr.f32.gmra.mrb[0].mxu0 %v2152
        %v2348 = vpop.f32.mrb[0].mxu0
        %v2349 = vadd.f32 0.0, %v2348
        %v2350 = vpop.f32.mrb[0].mxu0
        %v2351 = vadd.f32 0.0, %v2350
        %2352 = vmatprep.mubr.f32.mxu0 0.0
        %2353 = vmatmul.mubr.f32.gmra.mrb[0].mxu0 %v2153
        %v2354 = vpop.f32.mrb[0].mxu0
        %v2355 = vadd.f32 0.0, %v2354
        %v2356 = vpop.f32.mrb[0].mxu0
        %v2357 = vadd.f32 0.0, %v2356
        %2358 = vmatprep.mubr.f32.mxu0 0.0
        %2359 = vmatmul.mubr.f32.gmra.mrb[0].mxu0 %v2154
        %v2360 = vpop.f32.mrb[0].mxu0
        %v2361 = vadd.f32 0.0, %v2360
        %v2362 = vpop.f32.mrb[0].mxu0
        %v2363 = vadd.f32 0.0, %v2362
        %2364 = vmatprep.mubr.f32.mxu0 0.0
        %2365 = vmatmul.mubr.f32.gmra.mrb[0].mxu0 %v2155
        %v2366 = vpop.f32.mrb[0].mxu0
        %v2367 = vadd.f32 0.0, %v2366
        %v2368 = vpop.f32.mrb[0].mxu0
        %v2369 = vadd.f32 0.0, %v2368
        %2370 = vmatprep.mubr.f32.mxu0 0.0
        %2371 = vmatmul.mubr.f32.gmra.mrb[0].mxu0 %v2156
        %v2372 = vpop.f32.mrb[0].mxu0
        %v2373 = vadd.f32 0.0, %v2372
        %v2374 = vpop.f32.mrb[0].mxu0
        %v2375 = vadd.f32 0.0, %v2374
        %2376 = vmatprep.mubr.f32.mxu0 0.0
        %2377 = vmatmul.mubr.f32.gmra.mrb[0].mxu0 %v2157
        %v2378 = vpop.f32.mrb[0].mxu0
        %v2379 = vadd.f32 0.0, %v2378
        %v2380 = vpop.f32.mrb[0].mxu0
        %v2381 = vadd.f32 0.0, %v2380
        %2382 = vmatprep.mubr.f32.mxu0 0.0
        %2383 = vmatmul.mubr.f32.gmra.mrb[0].mxu0 %v2158
        %v2384 = vpop.f32.mrb[0].mxu0
        %v2385 = vadd.f32 0.0, %v2384
        %v2386 = vpop.f32.mrb[0].mxu0
        %v2387 = vadd.f32 0.0, %v2386
        %2388 = vmatprep.mubr.f32.mxu0 0.0
        %2389 = vmatmul.mubr.f32.gmra.mrb[0].mxu0 %v2159
        %v2390 = vpop.f32.mrb[0].mxu0
        %v2391 = vadd.f32 0.0, %v2390
        %v2392 = vpop.f32.mrb[0].mxu0
        %v2393 = vadd.f32 0.0, %v2392
        %2394 = vmatprep.mubr.f32.mxu0 0.0
        %2395 = vmatmul.mubr.f32.gmra.mrb[0].mxu0 %v2160
        %v2396 = vpop.f32.mrb[0].mxu0
        %v2397 = vadd.f32 0.0, %v2396
        %v2398 = vpop.f32.mrb[0].mxu0
        %v2399 = vadd.f32 0.0, %v2398
        %2400 = vmatprep.mubr.f32.mxu0 0.0
        %2401 = vmatmul.mubr.f32.gmra.mrb[0].mxu0 %v2161
        %v2402 = vpop.f32.mrb[0].mxu0
        %v2403 = vadd.f32 0.0, %v2402
        %v2404 = vpop.f32.mrb[0].mxu0
        %v2405 = vadd.f32 0.0, %v2404
        %2406 = vmatprep.mubr.f32.mxu0 0.0
        %2407 = vmatmul.mubr.f32.gmra.mrb[0].mxu0 %v2162
        %v2408 = vpop.f32.mrb[0].mxu0
        %v2409 = vadd.f32 0.0, %v2408
        %v2410 = vpop.f32.mrb[0].mxu0
        %v2411 = vadd.f32 0.0, %v2410
        %2412 = vmatprep.mubr.f32.mxu0 0.0
        %2413 = vmatmul.mubr.f32.gmra.mrb[0].mxu0 %v2163
        %v2414 = vpop.f32.mrb[0].mxu0
        %v2415 = vadd.f32 0.0, %v2414
        %v2416 = vpop.f32.mrb[0].mxu0
        %v2417 = vadd.f32 0.0, %v2416
        %2418 = vmatprep.mubr.f32.mxu0 0.0
        %2419 = vmatmul.mubr.f32.gmra.mrb[0].mxu0 %v2164
        %v2420 = vpop.f32.mrb[0].mxu0
        %v2421 = vadd.f32 0.0, %v2420
        %v2422 = vpop.f32.mrb[0].mxu0
        %v2423 = vadd.f32 0.0, %v2422
        %2424 = vmatprep.mubr.f32.mxu0 0.0
        %2425 = vmatmul.mubr.f32.gmra.mrb[0].mxu0 %v2165
        %v2426 = vpop.f32.mrb[0].mxu0
        %v2427 = vadd.f32 0.0, %v2426
        %v2428 = vpop.f32.mrb[0].mxu0
        %v2429 = vadd.f32 0.0, %v2428
        %2430 = vmatprep.mubr.f32.mxu0 0.0
        %2431 = vmatmul.mubr.f32.gmra.mrb[0].mxu0 %v2166
        %v2432 = vpop.f32.mrb[0].mxu0
        %v2433 = vadd.f32 0.0, %v2432
        %v2434 = vpop.f32.mrb[0].mxu0
        %v2435 = vadd.f32 0.0, %v2434
        %2436 = vmatprep.mubr.f32.mxu0 0.0
        %2437 = vmatmul.mubr.f32.gmra.mrb[0].mxu0 %v2167
        %v2438 = vpop.f32.mrb[0].mxu0
        %v2439 = vadd.f32 0.0, %v2438
        %v2440 = vpop.f32.mrb[0].mxu0
        %v2441 = vadd.f32 0.0, %v2440
        %2442 = vmatprep.mubr.f32.mxu0 0.0
        %2443 = vmatmul.mubr.f32.gmra.mrb[0].mxu0 %v2168
        %v2444 = vpop.f32.mrb[0].mxu0
        %v2445 = vadd.f32 0.0, %v2444
        %v2446 = vpop.f32.mrb[0].mxu0
        %v2447 = vadd.f32 0.0, %v2446
        %2448 = vmatprep.mubr.f32.mxu0 0.0
        %2449 = vmatmul.mubr.f32.gmra.mrb[0].mxu0 %v2169
        %v2450 = vpop.f32.mrb[0].mxu0
        %v2451 = vadd.f32 0.0, %v2450
        %v2452 = vpop.f32.mrb[0].mxu0
        %v2453 = vadd.f32 0.0, %v2452
        %2454 = vmatprep.mubr.f32.mxu0 0.0
        %2455 = vmatmul.mubr.f32.gmra.mrb[0].mxu0 %v2170
        %v2456 = vpop.f32.mrb[0].mxu0
        %v2457 = vadd.f32 0.0, %v2456
        %v2458 = vpop.f32.mrb[0].mxu0
        %v2459 = vadd.f32 0.0, %v2458
        %2460 = vdwg.mxu0
        %v2461 = vadd.f32 %v2075, %v2271
        %v2462 = vadd.f32 %v2076, %v2273
        %v2463 = vadd.f32 %v2077, %v2277
        %v2464 = vadd.f32 %v2078, %v2279
        %v2465 = vadd.f32 %v2079, %v2283
        %v2466 = vadd.f32 %v2080, %v2285
        %v2467 = vadd.f32 %v2081, %v2289
        %v2468 = vadd.f32 %v2082, %v2291
        %v2469 = vadd.f32 %v2083, %v2295
        %v2470 = vadd.f32 %v2084, %v2297
        %v2471 = vadd.f32 %v2085, %v2301
        %v2472 = vadd.f32 %v2086, %v2303
        %v2473 = vadd.f32 %v2087, %v2307
        %v2474 = vadd.f32 %v2088, %v2309
        %v2475 = vadd.f32 %v2089, %v2313
        %v2476 = vadd.f32 %v2090, %v2315
        %v2477 = vadd.f32 %v2091, %v2319
        %v2478 = vadd.f32 %v2092, %v2321
        %v2479 = vadd.f32 %v2093, %v2325
        %v2480 = vadd.f32 %v2094, %v2327
        %v2481 = vadd.f32 %v2095, %v2331
        %v2482 = vadd.f32 %v2096, %v2333
        %v2483 = vadd.f32 %v2097, %v2337
        %v2484 = vadd.f32 %v2098, %v2339
        %v2485 = vadd.f32 %v2099, %v2343
        %v2486 = vadd.f32 %v2100, %v2345
        %v2487 = vadd.f32 %v2101, %v2349
        %v2488 = vadd.f32 %v2102, %v2351
        %v2489 = vadd.f32 %v2103, %v2355
        %v2490 = vadd.f32 %v2104, %v2357
        %v2491 = vadd.f32 %v2105, %v2361
        %v2492 = vadd.f32 %v2106, %v2363
        %v2493 = vadd.f32 %v2107, %v2367
        %v2494 = vadd.f32 %v2108, %v2369
        %v2495 = vadd.f32 %v2109, %v2373
        %v2496 = vadd.f32 %v2110, %v2375
        %v2497 = vadd.f32 %v2111, %v2379
        %v2498 = vadd.f32 %v2112, %v2381
        %v2499 = vadd.f32 %v2113, %v2385
        %v2500 = vadd.f32 %v2114, %v2387
        %v2501 = vadd.f32 %v2115, %v2391
        %v2502 = vadd.f32 %v2116, %v2393
        %v2503 = vadd.f32 %v2117, %v2397
        %v2504 = vadd.f32 %v2118, %v2399
        %v2505 = vadd.f32 %v2119, %v2403
        %v2506 = vadd.f32 %v2120, %v2405
        %v2507 = vadd.f32 %v2121, %v2409
        %v2508 = vadd.f32 %v2122, %v2411
        %v2509 = vadd.f32 %v2123, %v2415
        %v2510 = vadd.f32 %v2124, %v2417
        %v2511 = vadd.f32 %v2125, %v2421
        %v2512 = vadd.f32 %v2126, %v2423
        %v2513 = vadd.f32 %v2127, %v2427
        %v2514 = vadd.f32 %v2128, %v2429
        %v2515 = vadd.f32 %v2129, %v2433
        %v2516 = vadd.f32 %v2130, %v2435
        %v2517 = vadd.f32 %v2131, %v2439
        %v2518 = vadd.f32 %v2132, %v2441
        %v2519 = vadd.f32 %v2133, %v2445
        %v2520 = vadd.f32 %v2134, %v2447
        %v2521 = vadd.f32 %v2135, %v2451
        %v2522 = vadd.f32 %v2136, %v2453
        %v2523 = vadd.f32 %v2137, %v2457
        %v2524 = vadd.f32 %v2138, %v2459
        %s2525 = sadd.s32 %s332, 2
        %s2526 = smul.u32 %s2525, 24
        %s2527 = scalar_lea.vmem %s330, %s2526
        %v2528 = vld [vmem:[%s2527] sm:$0xff]
        %v2529 = vld [vmem:[%s2527 + $0x8] sm:$0xff]
        %v2530 = vld [vmem:[%s2527 + $0x18] sm:$0xff]
        %v2531 = vld [vmem:[%s2527 + $0x20] sm:$0xff]
        %v2532 = vld [vmem:[%s2527 + $0x30] sm:$0xff]
        %v2533 = vld [vmem:[%s2527 + $0x38] sm:$0xff]
        %v2534 = vld [vmem:[%s2527 + $0x48] sm:$0xff]
        %v2535 = vld [vmem:[%s2527 + $0x50] sm:$0xff]
        %v2536 = vld [vmem:[%s2527 + $0x60] sm:$0xff]
        %v2537 = vld [vmem:[%s2527 + $0x68] sm:$0xff]
        %v2538 = vld [vmem:[%s2527 + $0x78] sm:$0xff]
        %v2539 = vld [vmem:[%s2527 + $0x80] sm:$0xff]
        %v2540 = vld [vmem:[%s2527 + $0x90] sm:$0xff]
        %v2541 = vld [vmem:[%s2527 + $0x98] sm:$0xff]
        %v2542 = vld [vmem:[%s2527 + $0xa8] sm:$0xff]
        %v2543 = vld [vmem:[%s2527 + $0xb0] sm:$0xff]
        %v2544 = vld [vmem:[%s2527 + $0xc0] sm:$0xff]
        %v2545 = vld [vmem:[%s2527 + $0xc8] sm:$0xff]
        %v2546 = vld [vmem:[%s2527 + $0xd8] sm:$0xff]
        %v2547 = vld [vmem:[%s2527 + $0xe0] sm:$0xff]
        %v2548 = vld [vmem:[%s2527 + $0xf0] sm:$0xff]
        %v2549 = vld [vmem:[%s2527 + $0xf8] sm:$0xff]
        %v2550 = vld [vmem:[%s2527 + $0x108] sm:$0xff]
        %v2551 = vld [vmem:[%s2527 + $0x110] sm:$0xff]
        %v2552 = vld [vmem:[%s2527 + $0x120] sm:$0xff]
        %v2553 = vld [vmem:[%s2527 + $0x128] sm:$0xff]
        %v2554 = vld [vmem:[%s2527 + $0x138] sm:$0xff]
        %v2555 = vld [vmem:[%s2527 + $0x140] sm:$0xff]
        %v2556 = vld [vmem:[%s2527 + $0x150] sm:$0xff]
        %v2557 = vld [vmem:[%s2527 + $0x158] sm:$0xff]
        %v2558 = vld [vmem:[%s2527 + $0x168] sm:$0xff]
        %v2559 = vld [vmem:[%s2527 + $0x170] sm:$0xff]
        %s2560 = scalar_lea.vmem [#allocation2], 1536
        %v2561 = vld [vmem:[%s2560] sm:$0xff]
        %v2562 = vld [vmem:[%s2560 + $0x8] sm:$0xff]
        %v2563 = vld [vmem:[%s2560 + $0x10] sm:$0xff]
        %v2564 = vld [vmem:[%s2560 + $0x18] sm:$0xff]
        %v2565 = vld [vmem:[%s2560 + $0x20] sm:$0xff]
        %v2566 = vld [vmem:[%s2560 + $0x28] sm:$0xff]
        %v2567 = vld [vmem:[%s2560 + $0x30] sm:$0xff]
        %v2568 = vld [vmem:[%s2560 + $0x38] sm:$0xff]
        %v2569 = vld [vmem:[%s2560 + $0x40] sm:$0xff]
        %v2570 = vld [vmem:[%s2560 + $0x48] sm:$0xff]
        %v2571 = vld [vmem:[%s2560 + $0x50] sm:$0xff]
        %v2572 = vld [vmem:[%s2560 + $0x58] sm:$0xff]
        %v2573 = vld [vmem:[%s2560 + $0x60] sm:$0xff]
        %v2574 = vld [vmem:[%s2560 + $0x68] sm:$0xff]
        %v2575 = vld [vmem:[%s2560 + $0x70] sm:$0xff]
        %v2576 = vld [vmem:[%s2560 + $0x78] sm:$0xff]
        %v2577 = vld [vmem:[%s2560 + $0x80] sm:$0xff]
        %v2578 = vld [vmem:[%s2560 + $0x88] sm:$0xff]
        %v2579 = vld [vmem:[%s2560 + $0x90] sm:$0xff]
        %v2580 = vld [vmem:[%s2560 + $0x98] sm:$0xff]
        %v2581 = vld [vmem:[%s2560 + $0xa0] sm:$0xff]
        %v2582 = vld [vmem:[%s2560 + $0xa8] sm:$0xff]
        %v2583 = vld [vmem:[%s2560 + $0xb0] sm:$0xff]
        %v2584 = vld [vmem:[%s2560 + $0xb8] sm:$0xff]
        %v2585 = vld [vmem:[%s2560 + $0xc0] sm:$0xff]
        %v2586 = vld [vmem:[%s2560 + $0xc8] sm:$0xff]
        %v2587 = vld [vmem:[%s2560 + $0xd0] sm:$0xff]
        %v2588 = vld [vmem:[%s2560 + $0xd8] sm:$0xff]
        %v2589 = vld [vmem:[%s2560 + $0xe0] sm:$0xff]
        %v2590 = vld [vmem:[%s2560 + $0xe8] sm:$0xff]
        %v2591 = vld [vmem:[%s2560 + $0xf0] sm:$0xff]
        %v2592 = vld [vmem:[%s2560 + $0xf8] sm:$0xff]
        %2593 = vmatprep.subr.mxu0 %v2562
        %2594 = vmatpush1.msra.mxu0 %v2561
        %2595 = vmatprep.subr.mxu0 %v2564
        %2596 = vmatpush1.msra.mxu0 %v2563
        %2597 = vmatprep.subr.mxu0 %v2566
        %2598 = vmatpush1.msra.mxu0 %v2565
        %2599 = vmatprep.subr.mxu0 %v2568
        %2600 = vmatpush1.msra.mxu0 %v2567
        %2601 = vmatprep.subr.mxu0 %v2570
        %2602 = vmatpush1.msra.mxu0 %v2569
        %2603 = vmatprep.subr.mxu0 %v2572
        %2604 = vmatpush1.msra.mxu0 %v2571
        %2605 = vmatprep.subr.mxu0 %v2574
        %2606 = vmatpush1.msra.mxu0 %v2573
        %2607 = vmatprep.subr.mxu0 %v2576
        %2608 = vmatpush1.msra.mxu0 %v2575
        %2609 = vmatprep.subr.mxu0 %v2578
        %2610 = vmatpush1.msra.mxu0 %v2577
        %2611 = vmatprep.subr.mxu0 %v2580
        %2612 = vmatpush1.msra.mxu0 %v2579
        %2613 = vmatprep.subr.mxu0 %v2582
        %2614 = vmatpush1.msra.mxu0 %v2581
        %2615 = vmatprep.subr.mxu0 %v2584
        %2616 = vmatpush1.msra.mxu0 %v2583
        %2617 = vmatprep.subr.mxu0 %v2586
        %2618 = vmatpush1.msra.mxu0 %v2585
        %2619 = vmatprep.subr.mxu0 %v2588
        %2620 = vmatpush1.msra.mxu0 %v2587
        %2621 = vmatprep.subr.mxu0 %v2590
        %2622 = vmatpush1.msra.mxu0 %v2589
        %2623 = vmatprep.subr.mxu0 %v2592
        %2624 = vmatpush1.msra.mxu0 %v2591
        %2625 = vmatprep.subr.mxu0 0.0
        %2626 = vmatpush1.msra.mxu0 0.0
        %2627 = vmatprep.subr.mxu0 0.0
        %2628 = vmatpush1.msra.mxu0 0.0
        %2629 = vmatprep.subr.mxu0 0.0
        %2630 = vmatpush1.msra.mxu0 0.0
        %2631 = vmatprep.subr.mxu0 0.0
        %2632 = vmatpush1.msra.mxu0 0.0
        %2633 = vmatprep.subr.mxu0 0.0
        %2634 = vmatpush1.msra.mxu0 0.0
        %2635 = vmatprep.subr.mxu0 0.0
        %2636 = vmatpush1.msra.mxu0 0.0
        %2637 = vmatprep.subr.mxu0 0.0
        %2638 = vmatpush1.msra.mxu0 0.0
        %2639 = vmatprep.subr.mxu0 0.0
        %2640 = vmatpush1.msra.mxu0 0.0
        %2641 = vmatprep.subr.mxu0 0.0
        %2642 = vmatpush1.msra.mxu0 0.0
        %2643 = vmatprep.subr.mxu0 0.0
        %2644 = vmatpush1.msra.mxu0 0.0
        %2645 = vmatprep.subr.mxu0 0.0
        %2646 = vmatpush1.msra.mxu0 0.0
        %2647 = vmatprep.subr.mxu0 0.0
        %2648 = vmatpush1.msra.mxu0 0.0
        %2649 = vmatprep.subr.mxu0 0.0
        %2650 = vmatpush1.msra.mxu0 0.0
        %2651 = vmatprep.subr.mxu0 0.0
        %2652 = vmatpush1.msra.mxu0 0.0
        %2653 = vmatprep.subr.mxu0 0.0
        %2654 = vmatpush1.msra.mxu0 0.0
        %2655 = vmatprep.subr.mxu0 0.0
        %2656 = vmatpush1.msra.mxu0 0.0
        %2657 = vmatprep.mubr.f32.mxu0 0.0
        %2658 = vmatmul.mubr.f32.gmra.mrb[0].mxu0 %v2528
        %v2659 = vpop.f32.mrb[0].mxu0
        %v2660 = vadd.f32 0.0, %v2659
        %v2661 = vpop.f32.mrb[0].mxu0
        %v2662 = vadd.f32 0.0, %v2661
        %2663 = vmatprep.mubr.f32.mxu0 0.0
        %2664 = vmatmul.mubr.f32.gmra.mrb[0].mxu0 %v2529
        %v2665 = vpop.f32.mrb[0].mxu0
        %v2666 = vadd.f32 0.0, %v2665
        %v2667 = vpop.f32.mrb[0].mxu0
        %v2668 = vadd.f32 0.0, %v2667
        %2669 = vmatprep.mubr.f32.mxu0 0.0
        %2670 = vmatmul.mubr.f32.gmra.mrb[0].mxu0 %v2530
        %v2671 = vpop.f32.mrb[0].mxu0
        %v2672 = vadd.f32 0.0, %v2671
        %v2673 = vpop.f32.mrb[0].mxu0
        %v2674 = vadd.f32 0.0, %v2673
        %2675 = vmatprep.mubr.f32.mxu0 0.0
        %2676 = vmatmul.mubr.f32.gmra.mrb[0].mxu0 %v2531
        %v2677 = vpop.f32.mrb[0].mxu0
        %v2678 = vadd.f32 0.0, %v2677
        %v2679 = vpop.f32.mrb[0].mxu0
        %v2680 = vadd.f32 0.0, %v2679
        %2681 = vmatprep.mubr.f32.mxu0 0.0
        %2682 = vmatmul.mubr.f32.gmra.mrb[0].mxu0 %v2532
        %v2683 = vpop.f32.mrb[0].mxu0
        %v2684 = vadd.f32 0.0, %v2683
        %v2685 = vpop.f32.mrb[0].mxu0
        %v2686 = vadd.f32 0.0, %v2685
        %2687 = vmatprep.mubr.f32.mxu0 0.0
        %2688 = vmatmul.mubr.f32.gmra.mrb[0].mxu0 %v2533
        %v2689 = vpop.f32.mrb[0].mxu0
        %v2690 = vadd.f32 0.0, %v2689
        %v2691 = vpop.f32.mrb[0].mxu0
        %v2692 = vadd.f32 0.0, %v2691
        %2693 = vmatprep.mubr.f32.mxu0 0.0
        %2694 = vmatmul.mubr.f32.gmra.mrb[0].mxu0 %v2534
        %v2695 = vpop.f32.mrb[0].mxu0
        %v2696 = vadd.f32 0.0, %v2695
        %v2697 = vpop.f32.mrb[0].mxu0
        %v2698 = vadd.f32 0.0, %v2697
        %2699 = vmatprep.mubr.f32.mxu0 0.0
        %2700 = vmatmul.mubr.f32.gmra.mrb[0].mxu0 %v2535
        %v2701 = vpop.f32.mrb[0].mxu0
        %v2702 = vadd.f32 0.0, %v2701
        %v2703 = vpop.f32.mrb[0].mxu0
        %v2704 = vadd.f32 0.0, %v2703
        %2705 = vmatprep.mubr.f32.mxu0 0.0
        %2706 = vmatmul.mubr.f32.gmra.mrb[0].mxu0 %v2536
        %v2707 = vpop.f32.mrb[0].mxu0
        %v2708 = vadd.f32 0.0, %v2707
        %v2709 = vpop.f32.mrb[0].mxu0
        %v2710 = vadd.f32 0.0, %v2709
        %2711 = vmatprep.mubr.f32.mxu0 0.0
        %2712 = vmatmul.mubr.f32.gmra.mrb[0].mxu0 %v2537
        %v2713 = vpop.f32.mrb[0].mxu0
        %v2714 = vadd.f32 0.0, %v2713
        %v2715 = vpop.f32.mrb[0].mxu0
        %v2716 = vadd.f32 0.0, %v2715
        %2717 = vmatprep.mubr.f32.mxu0 0.0
        %2718 = vmatmul.mubr.f32.gmra.mrb[0].mxu0 %v2538
        %v2719 = vpop.f32.mrb[0].mxu0
        %v2720 = vadd.f32 0.0, %v2719
        %v2721 = vpop.f32.mrb[0].mxu0
        %v2722 = vadd.f32 0.0, %v2721
        %2723 = vmatprep.mubr.f32.mxu0 0.0
        %2724 = vmatmul.mubr.f32.gmra.mrb[0].mxu0 %v2539
        %v2725 = vpop.f32.mrb[0].mxu0
        %v2726 = vadd.f32 0.0, %v2725
        %v2727 = vpop.f32.mrb[0].mxu0
        %v2728 = vadd.f32 0.0, %v2727
        %2729 = vmatprep.mubr.f32.mxu0 0.0
        %2730 = vmatmul.mubr.f32.gmra.mrb[0].mxu0 %v2540
        %v2731 = vpop.f32.mrb[0].mxu0
        %v2732 = vadd.f32 0.0, %v2731
        %v2733 = vpop.f32.mrb[0].mxu0
        %v2734 = vadd.f32 0.0, %v2733
        %2735 = vmatprep.mubr.f32.mxu0 0.0
        %2736 = vmatmul.mubr.f32.gmra.mrb[0].mxu0 %v2541
        %v2737 = vpop.f32.mrb[0].mxu0
        %v2738 = vadd.f32 0.0, %v2737
        %v2739 = vpop.f32.mrb[0].mxu0
        %v2740 = vadd.f32 0.0, %v2739
        %2741 = vmatprep.mubr.f32.mxu0 0.0
        %2742 = vmatmul.mubr.f32.gmra.mrb[0].mxu0 %v2542
        %v2743 = vpop.f32.mrb[0].mxu0
        %v2744 = vadd.f32 0.0, %v2743
        %v2745 = vpop.f32.mrb[0].mxu0
        %v2746 = vadd.f32 0.0, %v2745
        %2747 = vmatprep.mubr.f32.mxu0 0.0
        %2748 = vmatmul.mubr.f32.gmra.mrb[0].mxu0 %v2543
        %v2749 = vpop.f32.mrb[0].mxu0
        %v2750 = vadd.f32 0.0, %v2749
        %v2751 = vpop.f32.mrb[0].mxu0
        %v2752 = vadd.f32 0.0, %v2751
        %2753 = vmatprep.mubr.f32.mxu0 0.0
        %2754 = vmatmul.mubr.f32.gmra.mrb[0].mxu0 %v2544
        %v2755 = vpop.f32.mrb[0].mxu0
        %v2756 = vadd.f32 0.0, %v2755
        %v2757 = vpop.f32.mrb[0].mxu0
        %v2758 = vadd.f32 0.0, %v2757
        %2759 = vmatprep.mubr.f32.mxu0 0.0
        %2760 = vmatmul.mubr.f32.gmra.mrb[0].mxu0 %v2545
        %v2761 = vpop.f32.mrb[0].mxu0
        %v2762 = vadd.f32 0.0, %v2761
        %v2763 = vpop.f32.mrb[0].mxu0
        %v2764 = vadd.f32 0.0, %v2763
        %2765 = vmatprep.mubr.f32.mxu0 0.0
        %2766 = vmatmul.mubr.f32.gmra.mrb[0].mxu0 %v2546
        %v2767 = vpop.f32.mrb[0].mxu0
        %v2768 = vadd.f32 0.0, %v2767
        %v2769 = vpop.f32.mrb[0].mxu0
        %v2770 = vadd.f32 0.0, %v2769
        %2771 = vmatprep.mubr.f32.mxu0 0.0
        %2772 = vmatmul.mubr.f32.gmra.mrb[0].mxu0 %v2547
        %v2773 = vpop.f32.mrb[0].mxu0
        %v2774 = vadd.f32 0.0, %v2773
        %v2775 = vpop.f32.mrb[0].mxu0
        %v2776 = vadd.f32 0.0, %v2775
        %2777 = vmatprep.mubr.f32.mxu0 0.0
        %2778 = vmatmul.mubr.f32.gmra.mrb[0].mxu0 %v2548
        %v2779 = vpop.f32.mrb[0].mxu0
        %v2780 = vadd.f32 0.0, %v2779
        %v2781 = vpop.f32.mrb[0].mxu0
        %v2782 = vadd.f32 0.0, %v2781
        %2783 = vmatprep.mubr.f32.mxu0 0.0
        %2784 = vmatmul.mubr.f32.gmra.mrb[0].mxu0 %v2549
        %v2785 = vpop.f32.mrb[0].mxu0
        %v2786 = vadd.f32 0.0, %v2785
        %v2787 = vpop.f32.mrb[0].mxu0
        %v2788 = vadd.f32 0.0, %v2787
        %2789 = vmatprep.mubr.f32.mxu0 0.0
        %2790 = vmatmul.mubr.f32.gmra.mrb[0].mxu0 %v2550
        %v2791 = vpop.f32.mrb[0].mxu0
        %v2792 = vadd.f32 0.0, %v2791
        %v2793 = vpop.f32.mrb[0].mxu0
        %v2794 = vadd.f32 0.0, %v2793
        %2795 = vmatprep.mubr.f32.mxu0 0.0
        %2796 = vmatmul.mubr.f32.gmra.mrb[0].mxu0 %v2551
        %v2797 = vpop.f32.mrb[0].mxu0
        %v2798 = vadd.f32 0.0, %v2797
        %v2799 = vpop.f32.mrb[0].mxu0
        %v2800 = vadd.f32 0.0, %v2799
        %2801 = vmatprep.mubr.f32.mxu0 0.0
        %2802 = vmatmul.mubr.f32.gmra.mrb[0].mxu0 %v2552
        %v2803 = vpop.f32.mrb[0].mxu0
        %v2804 = vadd.f32 0.0, %v2803
        %v2805 = vpop.f32.mrb[0].mxu0
        %v2806 = vadd.f32 0.0, %v2805
        %2807 = vmatprep.mubr.f32.mxu0 0.0
        %2808 = vmatmul.mubr.f32.gmra.mrb[0].mxu0 %v2553
        %v2809 = vpop.f32.mrb[0].mxu0
        %v2810 = vadd.f32 0.0, %v2809
        %v2811 = vpop.f32.mrb[0].mxu0
        %v2812 = vadd.f32 0.0, %v2811
        %2813 = vmatprep.mubr.f32.mxu0 0.0
        %2814 = vmatmul.mubr.f32.gmra.mrb[0].mxu0 %v2554
        %v2815 = vpop.f32.mrb[0].mxu0
        %v2816 = vadd.f32 0.0, %v2815
        %v2817 = vpop.f32.mrb[0].mxu0
        %v2818 = vadd.f32 0.0, %v2817
        %2819 = vmatprep.mubr.f32.mxu0 0.0
        %2820 = vmatmul.mubr.f32.gmra.mrb[0].mxu0 %v2555
        %v2821 = vpop.f32.mrb[0].mxu0
        %v2822 = vadd.f32 0.0, %v2821
        %v2823 = vpop.f32.mrb[0].mxu0
        %v2824 = vadd.f32 0.0, %v2823
        %2825 = vmatprep.mubr.f32.mxu0 0.0
        %2826 = vmatmul.mubr.f32.gmra.mrb[0].mxu0 %v2556
        %v2827 = vpop.f32.mrb[0].mxu0
        %v2828 = vadd.f32 0.0, %v2827
        %v2829 = vpop.f32.mrb[0].mxu0
        %v2830 = vadd.f32 0.0, %v2829
        %2831 = vmatprep.mubr.f32.mxu0 0.0
        %2832 = vmatmul.mubr.f32.gmra.mrb[0].mxu0 %v2557
        %v2833 = vpop.f32.mrb[0].mxu0
        %v2834 = vadd.f32 0.0, %v2833
        %v2835 = vpop.f32.mrb[0].mxu0
        %v2836 = vadd.f32 0.0, %v2835
        %2837 = vmatprep.mubr.f32.mxu0 0.0
        %2838 = vmatmul.mubr.f32.gmra.mrb[0].mxu0 %v2558
        %v2839 = vpop.f32.mrb[0].mxu0
        %v2840 = vadd.f32 0.0, %v2839
        %v2841 = vpop.f32.mrb[0].mxu0
        %v2842 = vadd.f32 0.0, %v2841
        %2843 = vmatprep.mubr.f32.mxu0 0.0
        %2844 = vmatmul.mubr.f32.gmra.mrb[0].mxu0 %v2559
        %v2845 = vpop.f32.mrb[0].mxu0
        %v2846 = vadd.f32 0.0, %v2845
        %v2847 = vpop.f32.mrb[0].mxu0
        %v2848 = vadd.f32 0.0, %v2847
        %2849 = vdwg.mxu0
        %v2850 = vadd.f32 %v2461, %v2660
        %v2851 = vadd.f32 %v2462, %v2662
        %v2852 = vadd.f32 %v2463, %v2666
        %v2853 = vadd.f32 %v2464, %v2668
        %v2854 = vadd.f32 %v2465, %v2672
        %v2855 = vadd.f32 %v2466, %v2674
        %v2856 = vadd.f32 %v2467, %v2678
        %v2857 = vadd.f32 %v2468, %v2680
        %v2858 = vadd.f32 %v2469, %v2684
        %v2859 = vadd.f32 %v2470, %v2686
        %v2860 = vadd.f32 %v2471, %v2690
        %v2861 = vadd.f32 %v2472, %v2692
        %v2862 = vadd.f32 %v2473, %v2696
        %v2863 = vadd.f32 %v2474, %v2698
        %v2864 = vadd.f32 %v2475, %v2702
        %v2865 = vadd.f32 %v2476, %v2704
        %v2866 = vadd.f32 %v2477, %v2708
        %v2867 = vadd.f32 %v2478, %v2710
        %v2868 = vadd.f32 %v2479, %v2714
        %v2869 = vadd.f32 %v2480, %v2716
        %v2870 = vadd.f32 %v2481, %v2720
        %v2871 = vadd.f32 %v2482, %v2722
        %v2872 = vadd.f32 %v2483, %v2726
        %v2873 = vadd.f32 %v2484, %v2728
        %v2874 = vadd.f32 %v2485, %v2732
        %v2875 = vadd.f32 %v2486, %v2734
        %v2876 = vadd.f32 %v2487, %v2738
        %v2877 = vadd.f32 %v2488, %v2740
        %v2878 = vadd.f32 %v2489, %v2744
        %v2879 = vadd.f32 %v2490, %v2746
        %v2880 = vadd.f32 %v2491, %v2750
        %v2881 = vadd.f32 %v2492, %v2752
        %v2882 = vadd.f32 %v2493, %v2756
        %v2883 = vadd.f32 %v2494, %v2758
        %v2884 = vadd.f32 %v2495, %v2762
        %v2885 = vadd.f32 %v2496, %v2764
        %v2886 = vadd.f32 %v2497, %v2768
        %v2887 = vadd.f32 %v2498, %v2770
        %v2888 = vadd.f32 %v2499, %v2774
        %v2889 = vadd.f32 %v2500, %v2776
        %v2890 = vadd.f32 %v2501, %v2780
        %v2891 = vadd.f32 %v2502, %v2782
        %v2892 = vadd.f32 %v2503, %v2786
        %v2893 = vadd.f32 %v2504, %v2788
        %v2894 = vadd.f32 %v2505, %v2792
        %v2895 = vadd.f32 %v2506, %v2794
        %v2896 = vadd.f32 %v2507, %v2798
        %v2897 = vadd.f32 %v2508, %v2800
        %v2898 = vadd.f32 %v2509, %v2804
        %v2899 = vadd.f32 %v2510, %v2806
        %v2900 = vadd.f32 %v2511, %v2810
        %v2901 = vadd.f32 %v2512, %v2812
        %v2902 = vadd.f32 %v2513, %v2816
        %v2903 = vadd.f32 %v2514, %v2818
        %v2904 = vadd.f32 %v2515, %v2822
        %v2905 = vadd.f32 %v2516, %v2824
        %v2906 = vadd.f32 %v2517, %v2828
        %v2907 = vadd.f32 %v2518, %v2830
        %v2908 = vadd.f32 %v2519, %v2834
        %v2909 = vadd.f32 %v2520, %v2836
        %v2910 = vadd.f32 %v2521, %v2840
        %v2911 = vadd.f32 %v2522, %v2842
        %v2912 = vadd.f32 %v2523, %v2846
        %v2913 = vadd.f32 %v2524, %v2848
        %v2914 = vld [vmem:[%s2527 + $0x1] sm:$0xff]
        %v2915 = vld [vmem:[%s2527 + $0x9] sm:$0xff]
        %v2916 = vld [vmem:[%s2527 + $0x19] sm:$0xff]
        %v2917 = vld [vmem:[%s2527 + $0x21] sm:$0xff]
        %v2918 = vld [vmem:[%s2527 + $0x31] sm:$0xff]
        %v2919 = vld [vmem:[%s2527 + $0x39] sm:$0xff]
        %v2920 = vld [vmem:[%s2527 + $0x49] sm:$0xff]
        %v2921 = vld [vmem:[%s2527 + $0x51] sm:$0xff]
        %v2922 = vld [vmem:[%s2527 + $0x61] sm:$0xff]
        %v2923 = vld [vmem:[%s2527 + $0x69] sm:$0xff]
        %v2924 = vld [vmem:[%s2527 + $0x79] sm:$0xff]
        %v2925 = vld [vmem:[%s2527 + $0x81] sm:$0xff]
        %v2926 = vld [vmem:[%s2527 + $0x91] sm:$0xff]
        %v2927 = vld [vmem:[%s2527 + $0x99] sm:$0xff]
        %v2928 = vld [vmem:[%s2527 + $0xa9] sm:$0xff]
        %v2929 = vld [vmem:[%s2527 + $0xb1] sm:$0xff]
        %v2930 = vld [vmem:[%s2527 + $0xc1] sm:$0xff]
        %v2931 = vld [vmem:[%s2527 + $0xc9] sm:$0xff]
        %v2932 = vld [vmem:[%s2527 + $0xd9] sm:$0xff]
        %v2933 = vld [vmem:[%s2527 + $0xe1] sm:$0xff]
        %v2934 = vld [vmem:[%s2527 + $0xf1] sm:$0xff]
        %v2935 = vld [vmem:[%s2527 + $0xf9] sm:$0xff]
        %v2936 = vld [vmem:[%s2527 + $0x109] sm:$0xff]
        %v2937 = vld [vmem:[%s2527 + $0x111] sm:$0xff]
        %v2938 = vld [vmem:[%s2527 + $0x121] sm:$0xff]
        %v2939 = vld [vmem:[%s2527 + $0x129] sm:$0xff]
        %v2940 = vld [vmem:[%s2527 + $0x139] sm:$0xff]
        %v2941 = vld [vmem:[%s2527 + $0x141] sm:$0xff]
        %v2942 = vld [vmem:[%s2527 + $0x151] sm:$0xff]
        %v2943 = vld [vmem:[%s2527 + $0x159] sm:$0xff]
        %v2944 = vld [vmem:[%s2527 + $0x169] sm:$0xff]
        %v2945 = vld [vmem:[%s2527 + $0x171] sm:$0xff]
        %s2946 = scalar_lea.vmem [#allocation2], 1792
        %v2947 = vld [vmem:[%s2946] sm:$0xff]
        %v2948 = vld [vmem:[%s2946 + $0x8] sm:$0xff]
        %v2949 = vld [vmem:[%s2946 + $0x10] sm:$0xff]
        %v2950 = vld [vmem:[%s2946 + $0x18] sm:$0xff]
        %v2951 = vld [vmem:[%s2946 + $0x20] sm:$0xff]
        %v2952 = vld [vmem:[%s2946 + $0x28] sm:$0xff]
        %v2953 = vld [vmem:[%s2946 + $0x30] sm:$0xff]
        %v2954 = vld [vmem:[%s2946 + $0x38] sm:$0xff]
        %v2955 = vld [vmem:[%s2946 + $0x40] sm:$0xff]
        %v2956 = vld [vmem:[%s2946 + $0x48] sm:$0xff]
        %v2957 = vld [vmem:[%s2946 + $0x50] sm:$0xff]
        %v2958 = vld [vmem:[%s2946 + $0x58] sm:$0xff]
        %v2959 = vld [vmem:[%s2946 + $0x60] sm:$0xff]
        %v2960 = vld [vmem:[%s2946 + $0x68] sm:$0xff]
        %v2961 = vld [vmem:[%s2946 + $0x70] sm:$0xff]
        %v2962 = vld [vmem:[%s2946 + $0x78] sm:$0xff]
        %v2963 = vld [vmem:[%s2946 + $0x80] sm:$0xff]
        %v2964 = vld [vmem:[%s2946 + $0x88] sm:$0xff]
        %v2965 = vld [vmem:[%s2946 + $0x90] sm:$0xff]
        %v2966 = vld [vmem:[%s2946 + $0x98] sm:$0xff]
        %v2967 = vld [vmem:[%s2946 + $0xa0] sm:$0xff]
        %v2968 = vld [vmem:[%s2946 + $0xa8] sm:$0xff]
        %v2969 = vld [vmem:[%s2946 + $0xb0] sm:$0xff]
        %v2970 = vld [vmem:[%s2946 + $0xb8] sm:$0xff]
        %v2971 = vld [vmem:[%s2946 + $0xc0] sm:$0xff]
        %v2972 = vld [vmem:[%s2946 + $0xc8] sm:$0xff]
        %v2973 = vld [vmem:[%s2946 + $0xd0] sm:$0xff]
        %v2974 = vld [vmem:[%s2946 + $0xd8] sm:$0xff]
        %v2975 = vld [vmem:[%s2946 + $0xe0] sm:$0xff]
        %v2976 = vld [vmem:[%s2946 + $0xe8] sm:$0xff]
        %v2977 = vld [vmem:[%s2946 + $0xf0] sm:$0xff]
        %v2978 = vld [vmem:[%s2946 + $0xf8] sm:$0xff]
        %2979 = vmatprep.subr.mxu0 %v2948
        %2980 = vmatpush1.msra.mxu0 %v2947
        %2981 = vmatprep.subr.mxu0 %v2950
        %2982 = vmatpush1.msra.mxu0 %v2949
        %2983 = vmatprep.subr.mxu0 %v2952
        %2984 = vmatpush1.msra.mxu0 %v2951
        %2985 = vmatprep.subr.mxu0 %v2954
        %2986 = vmatpush1.msra.mxu0 %v2953
        %2987 = vmatprep.subr.mxu0 %v2956
        %2988 = vmatpush1.msra.mxu0 %v2955
        %2989 = vmatprep.subr.mxu0 %v2958
        %2990 = vmatpush1.msra.mxu0 %v2957
        %2991 = vmatprep.subr.mxu0 %v2960
        %2992 = vmatpush1.msra.mxu0 %v2959
        %2993 = vmatprep.subr.mxu0 %v2962
        %2994 = vmatpush1.msra.mxu0 %v2961
        %2995 = vmatprep.subr.mxu0 %v2964
        %2996 = vmatpush1.msra.mxu0 %v2963
        %2997 = vmatprep.subr.mxu0 %v2966
        %2998 = vmatpush1.msra.mxu0 %v2965
        %2999 = vmatprep.subr.mxu0 %v2968
        %3000 = vmatpush1.msra.mxu0 %v2967
        %3001 = vmatprep.subr.mxu0 %v2970
        %3002 = vmatpush1.msra.mxu0 %v2969
        %3003 = vmatprep.subr.mxu0 %v2972
        %3004 = vmatpush1.msra.mxu0 %v2971
        %3005 = vmatprep.subr.mxu0 %v2974
        %3006 = vmatpush1.msra.mxu0 %v2973
        %3007 = vmatprep.subr.mxu0 %v2976
        %3008 = vmatpush1.msra.mxu0 %v2975
        %3009 = vmatprep.subr.mxu0 %v2978
        %3010 = vmatpush1.msra.mxu0 %v2977
        %3011 = vmatprep.subr.mxu0 0.0
        %3012 = vmatpush1.msra.mxu0 0.0
        %3013 = vmatprep.subr.mxu0 0.0
        %3014 = vmatpush1.msra.mxu0 0.0
        %3015 = vmatprep.subr.mxu0 0.0
        %3016 = vmatpush1.msra.mxu0 0.0
        %3017 = vmatprep.subr.mxu0 0.0
        %3018 = vmatpush1.msra.mxu0 0.0
        %3019 = vmatprep.subr.mxu0 0.0
        %3020 = vmatpush1.msra.mxu0 0.0
        %3021 = vmatprep.subr.mxu0 0.0
        %3022 = vmatpush1.msra.mxu0 0.0
        %3023 = vmatprep.subr.mxu0 0.0
        %3024 = vmatpush1.msra.mxu0 0.0
        %3025 = vmatprep.subr.mxu0 0.0
        %3026 = vmatpush1.msra.mxu0 0.0
        %3027 = vmatprep.subr.mxu0 0.0
        %3028 = vmatpush1.msra.mxu0 0.0
        %3029 = vmatprep.subr.mxu0 0.0
        %3030 = vmatpush1.msra.mxu0 0.0
        %3031 = vmatprep.subr.mxu0 0.0
        %3032 = vmatpush1.msra.mxu0 0.0
        %3033 = vmatprep.subr.mxu0 0.0
        %3034 = vmatpush1.msra.mxu0 0.0
        %3035 = vmatprep.subr.mxu0 0.0
        %3036 = vmatpush1.msra.mxu0 0.0
        %3037 = vmatprep.subr.mxu0 0.0
        %3038 = vmatpush1.msra.mxu0 0.0
        %3039 = vmatprep.subr.mxu0 0.0
        %3040 = vmatpush1.msra.mxu0 0.0
        %3041 = vmatprep.subr.mxu0 0.0
        %3042 = vmatpush1.msra.mxu0 0.0
        %3043 = vmatprep.mubr.f32.mxu0 0.0
        %3044 = vmatmul.mubr.f32.gmra.mrb[0].mxu0 %v2914
        %v3045 = vpop.f32.mrb[0].mxu0
        %v3046 = vadd.f32 0.0, %v3045
        %v3047 = vpop.f32.mrb[0].mxu0
        %v3048 = vadd.f32 0.0, %v3047
        %3049 = vmatprep.mubr.f32.mxu0 0.0
        %3050 = vmatmul.mubr.f32.gmra.mrb[0].mxu0 %v2915
        %v3051 = vpop.f32.mrb[0].mxu0
        %v3052 = vadd.f32 0.0, %v3051
        %v3053 = vpop.f32.mrb[0].mxu0
        %v3054 = vadd.f32 0.0, %v3053
        %3055 = vmatprep.mubr.f32.mxu0 0.0
        %3056 = vmatmul.mubr.f32.gmra.mrb[0].mxu0 %v2916
        %v3057 = vpop.f32.mrb[0].mxu0
        %v3058 = vadd.f32 0.0, %v3057
        %v3059 = vpop.f32.mrb[0].mxu0
        %v3060 = vadd.f32 0.0, %v3059
        %3061 = vmatprep.mubr.f32.mxu0 0.0
        %3062 = vmatmul.mubr.f32.gmra.mrb[0].mxu0 %v2917
        %v3063 = vpop.f32.mrb[0].mxu0
        %v3064 = vadd.f32 0.0, %v3063
        %v3065 = vpop.f32.mrb[0].mxu0
        %v3066 = vadd.f32 0.0, %v3065
        %3067 = vmatprep.mubr.f32.mxu0 0.0
        %3068 = vmatmul.mubr.f32.gmra.mrb[0].mxu0 %v2918
        %v3069 = vpop.f32.mrb[0].mxu0
        %v3070 = vadd.f32 0.0, %v3069
        %v3071 = vpop.f32.mrb[0].mxu0
        %v3072 = vadd.f32 0.0, %v3071
        %3073 = vmatprep.mubr.f32.mxu0 0.0
        %3074 = vmatmul.mubr.f32.gmra.mrb[0].mxu0 %v2919
        %v3075 = vpop.f32.mrb[0].mxu0
        %v3076 = vadd.f32 0.0, %v3075
        %v3077 = vpop.f32.mrb[0].mxu0
        %v3078 = vadd.f32 0.0, %v3077
        %3079 = vmatprep.mubr.f32.mxu0 0.0
        %3080 = vmatmul.mubr.f32.gmra.mrb[0].mxu0 %v2920
        %v3081 = vpop.f32.mrb[0].mxu0
        %v3082 = vadd.f32 0.0, %v3081
        %v3083 = vpop.f32.mrb[0].mxu0
        %v3084 = vadd.f32 0.0, %v3083
        %3085 = vmatprep.mubr.f32.mxu0 0.0
        %3086 = vmatmul.mubr.f32.gmra.mrb[0].mxu0 %v2921
        %v3087 = vpop.f32.mrb[0].mxu0
        %v3088 = vadd.f32 0.0, %v3087
        %v3089 = vpop.f32.mrb[0].mxu0
        %v3090 = vadd.f32 0.0, %v3089
        %3091 = vmatprep.mubr.f32.mxu0 0.0
        %3092 = vmatmul.mubr.f32.gmra.mrb[0].mxu0 %v2922
        %v3093 = vpop.f32.mrb[0].mxu0
        %v3094 = vadd.f32 0.0, %v3093
        %v3095 = vpop.f32.mrb[0].mxu0
        %v3096 = vadd.f32 0.0, %v3095
        %3097 = vmatprep.mubr.f32.mxu0 0.0
        %3098 = vmatmul.mubr.f32.gmra.mrb[0].mxu0 %v2923
        %v3099 = vpop.f32.mrb[0].mxu0
        %v3100 = vadd.f32 0.0, %v3099
        %v3101 = vpop.f32.mrb[0].mxu0
        %v3102 = vadd.f32 0.0, %v3101
        %3103 = vmatprep.mubr.f32.mxu0 0.0
        %3104 = vmatmul.mubr.f32.gmra.mrb[0].mxu0 %v2924
        %v3105 = vpop.f32.mrb[0].mxu0
        %v3106 = vadd.f32 0.0, %v3105
        %v3107 = vpop.f32.mrb[0].mxu0
        %v3108 = vadd.f32 0.0, %v3107
        %3109 = vmatprep.mubr.f32.mxu0 0.0
        %3110 = vmatmul.mubr.f32.gmra.mrb[0].mxu0 %v2925
        %v3111 = vpop.f32.mrb[0].mxu0
        %v3112 = vadd.f32 0.0, %v3111
        %v3113 = vpop.f32.mrb[0].mxu0
        %v3114 = vadd.f32 0.0, %v3113
        %3115 = vmatprep.mubr.f32.mxu0 0.0
        %3116 = vmatmul.mubr.f32.gmra.mrb[0].mxu0 %v2926
        %v3117 = vpop.f32.mrb[0].mxu0
        %v3118 = vadd.f32 0.0, %v3117
        %v3119 = vpop.f32.mrb[0].mxu0
        %v3120 = vadd.f32 0.0, %v3119
        %3121 = vmatprep.mubr.f32.mxu0 0.0
        %3122 = vmatmul.mubr.f32.gmra.mrb[0].mxu0 %v2927
        %v3123 = vpop.f32.mrb[0].mxu0
        %v3124 = vadd.f32 0.0, %v3123
        %v3125 = vpop.f32.mrb[0].mxu0
        %v3126 = vadd.f32 0.0, %v3125
        %3127 = vmatprep.mubr.f32.mxu0 0.0
        %3128 = vmatmul.mubr.f32.gmra.mrb[0].mxu0 %v2928
        %v3129 = vpop.f32.mrb[0].mxu0
        %v3130 = vadd.f32 0.0, %v3129
        %v3131 = vpop.f32.mrb[0].mxu0
        %v3132 = vadd.f32 0.0, %v3131
        %3133 = vmatprep.mubr.f32.mxu0 0.0
        %3134 = vmatmul.mubr.f32.gmra.mrb[0].mxu0 %v2929
        %v3135 = vpop.f32.mrb[0].mxu0
        %v3136 = vadd.f32 0.0, %v3135
        %v3137 = vpop.f32.mrb[0].mxu0
        %v3138 = vadd.f32 0.0, %v3137
        %3139 = vmatprep.mubr.f32.mxu0 0.0
        %3140 = vmatmul.mubr.f32.gmra.mrb[0].mxu0 %v2930
        %v3141 = vpop.f32.mrb[0].mxu0
        %v3142 = vadd.f32 0.0, %v3141
        %v3143 = vpop.f32.mrb[0].mxu0
        %v3144 = vadd.f32 0.0, %v3143
        %3145 = vmatprep.mubr.f32.mxu0 0.0
        %3146 = vmatmul.mubr.f32.gmra.mrb[0].mxu0 %v2931
        %v3147 = vpop.f32.mrb[0].mxu0
        %v3148 = vadd.f32 0.0, %v3147
        %v3149 = vpop.f32.mrb[0].mxu0
        %v3150 = vadd.f32 0.0, %v3149
        %3151 = vmatprep.mubr.f32.mxu0 0.0
        %3152 = vmatmul.mubr.f32.gmra.mrb[0].mxu0 %v2932
        %v3153 = vpop.f32.mrb[0].mxu0
        %v3154 = vadd.f32 0.0, %v3153
        %v3155 = vpop.f32.mrb[0].mxu0
        %v3156 = vadd.f32 0.0, %v3155
        %3157 = vmatprep.mubr.f32.mxu0 0.0
        %3158 = vmatmul.mubr.f32.gmra.mrb[0].mxu0 %v2933
        %v3159 = vpop.f32.mrb[0].mxu0
        %v3160 = vadd.f32 0.0, %v3159
        %v3161 = vpop.f32.mrb[0].mxu0
        %v3162 = vadd.f32 0.0, %v3161
        %3163 = vmatprep.mubr.f32.mxu0 0.0
        %3164 = vmatmul.mubr.f32.gmra.mrb[0].mxu0 %v2934
        %v3165 = vpop.f32.mrb[0].mxu0
        %v3166 = vadd.f32 0.0, %v3165
        %v3167 = vpop.f32.mrb[0].mxu0
        %v3168 = vadd.f32 0.0, %v3167
        %3169 = vmatprep.mubr.f32.mxu0 0.0
        %3170 = vmatmul.mubr.f32.gmra.mrb[0].mxu0 %v2935
        %v3171 = vpop.f32.mrb[0].mxu0
        %v3172 = vadd.f32 0.0, %v3171
        %v3173 = vpop.f32.mrb[0].mxu0
        %v3174 = vadd.f32 0.0, %v3173
        %3175 = vmatprep.mubr.f32.mxu0 0.0
        %3176 = vmatmul.mubr.f32.gmra.mrb[0].mxu0 %v2936
        %v3177 = vpop.f32.mrb[0].mxu0
        %v3178 = vadd.f32 0.0, %v3177
        %v3179 = vpop.f32.mrb[0].mxu0
        %v3180 = vadd.f32 0.0, %v3179
        %3181 = vmatprep.mubr.f32.mxu0 0.0
        %3182 = vmatmul.mubr.f32.gmra.mrb[0].mxu0 %v2937
        %v3183 = vpop.f32.mrb[0].mxu0
        %v3184 = vadd.f32 0.0, %v3183
        %v3185 = vpop.f32.mrb[0].mxu0
        %v3186 = vadd.f32 0.0, %v3185
        %3187 = vmatprep.mubr.f32.mxu0 0.0
        %3188 = vmatmul.mubr.f32.gmra.mrb[0].mxu0 %v2938
        %v3189 = vpop.f32.mrb[0].mxu0
        %v3190 = vadd.f32 0.0, %v3189
        %v3191 = vpop.f32.mrb[0].mxu0
        %v3192 = vadd.f32 0.0, %v3191
        %3193 = vmatprep.mubr.f32.mxu0 0.0
        %3194 = vmatmul.mubr.f32.gmra.mrb[0].mxu0 %v2939
        %v3195 = vpop.f32.mrb[0].mxu0
        %v3196 = vadd.f32 0.0, %v3195
        %v3197 = vpop.f32.mrb[0].mxu0
        %v3198 = vadd.f32 0.0, %v3197
        %3199 = vmatprep.mubr.f32.mxu0 0.0
        %3200 = vmatmul.mubr.f32.gmra.mrb[0].mxu0 %v2940
        %v3201 = vpop.f32.mrb[0].mxu0
        %v3202 = vadd.f32 0.0, %v3201
        %v3203 = vpop.f32.mrb[0].mxu0
        %v3204 = vadd.f32 0.0, %v3203
        %3205 = vmatprep.mubr.f32.mxu0 0.0
        %3206 = vmatmul.mubr.f32.gmra.mrb[0].mxu0 %v2941
        %v3207 = vpop.f32.mrb[0].mxu0
        %v3208 = vadd.f32 0.0, %v3207
        %v3209 = vpop.f32.mrb[0].mxu0
        %v3210 = vadd.f32 0.0, %v3209
        %3211 = vmatprep.mubr.f32.mxu0 0.0
        %3212 = vmatmul.mubr.f32.gmra.mrb[0].mxu0 %v2942
        %v3213 = vpop.f32.mrb[0].mxu0
        %v3214 = vadd.f32 0.0, %v3213
        %v3215 = vpop.f32.mrb[0].mxu0
        %v3216 = vadd.f32 0.0, %v3215
        %3217 = vmatprep.mubr.f32.mxu0 0.0
        %3218 = vmatmul.mubr.f32.gmra.mrb[0].mxu0 %v2943
        %v3219 = vpop.f32.mrb[0].mxu0
        %v3220 = vadd.f32 0.0, %v3219
        %v3221 = vpop.f32.mrb[0].mxu0
        %v3222 = vadd.f32 0.0, %v3221
        %3223 = vmatprep.mubr.f32.mxu0 0.0
        %3224 = vmatmul.mubr.f32.gmra.mrb[0].mxu0 %v2944
        %v3225 = vpop.f32.mrb[0].mxu0
        %v3226 = vadd.f32 0.0, %v3225
        %v3227 = vpop.f32.mrb[0].mxu0
        %v3228 = vadd.f32 0.0, %v3227
        %3229 = vmatprep.mubr.f32.mxu0 0.0
        %3230 = vmatmul.mubr.f32.gmra.mrb[0].mxu0 %v2945
        %v3231 = vpop.f32.mrb[0].mxu0
        %v3232 = vadd.f32 0.0, %v3231
        %v3233 = vpop.f32.mrb[0].mxu0
        %v3234 = vadd.f32 0.0, %v3233
        %3235 = vdwg.mxu0
        %v3236 = vadd.f32 %v2850, %v3046
        %v3237 = vadd.f32 %v2851, %v3048
        %v3238 = vadd.f32 %v2852, %v3052
        %v3239 = vadd.f32 %v2853, %v3054
        %v3240 = vadd.f32 %v2854, %v3058
        %v3241 = vadd.f32 %v2855, %v3060
        %v3242 = vadd.f32 %v2856, %v3064
        %v3243 = vadd.f32 %v2857, %v3066
        %v3244 = vadd.f32 %v2858, %v3070
        %v3245 = vadd.f32 %v2859, %v3072
        %v3246 = vadd.f32 %v2860, %v3076
        %v3247 = vadd.f32 %v2861, %v3078
        %v3248 = vadd.f32 %v2862, %v3082
        %v3249 = vadd.f32 %v2863, %v3084
        %v3250 = vadd.f32 %v2864, %v3088
        %v3251 = vadd.f32 %v2865, %v3090
        %v3252 = vadd.f32 %v2866, %v3094
        %v3253 = vadd.f32 %v2867, %v3096
        %v3254 = vadd.f32 %v2868, %v3100
        %v3255 = vadd.f32 %v2869, %v3102
        %v3256 = vadd.f32 %v2870, %v3106
        %v3257 = vadd.f32 %v2871, %v3108
        %v3258 = vadd.f32 %v2872, %v3112
        %v3259 = vadd.f32 %v2873, %v3114
        %v3260 = vadd.f32 %v2874, %v3118
        %v3261 = vadd.f32 %v2875, %v3120
        %v3262 = vadd.f32 %v2876, %v3124
        %v3263 = vadd.f32 %v2877, %v3126
        %v3264 = vadd.f32 %v2878, %v3130
        %v3265 = vadd.f32 %v2879, %v3132
        %v3266 = vadd.f32 %v2880, %v3136
        %v3267 = vadd.f32 %v2881, %v3138
        %v3268 = vadd.f32 %v2882, %v3142
        %v3269 = vadd.f32 %v2883, %v3144
        %v3270 = vadd.f32 %v2884, %v3148
        %v3271 = vadd.f32 %v2885, %v3150
        %v3272 = vadd.f32 %v2886, %v3154
        %v3273 = vadd.f32 %v2887, %v3156
        %v3274 = vadd.f32 %v2888, %v3160
        %v3275 = vadd.f32 %v2889, %v3162
        %v3276 = vadd.f32 %v2890, %v3166
        %v3277 = vadd.f32 %v2891, %v3168
        %v3278 = vadd.f32 %v2892, %v3172
        %v3279 = vadd.f32 %v2893, %v3174
        %v3280 = vadd.f32 %v2894, %v3178
        %v3281 = vadd.f32 %v2895, %v3180
        %v3282 = vadd.f32 %v2896, %v3184
        %v3283 = vadd.f32 %v2897, %v3186
        %v3284 = vadd.f32 %v2898, %v3190
        %v3285 = vadd.f32 %v2899, %v3192
        %v3286 = vadd.f32 %v2900, %v3196
        %v3287 = vadd.f32 %v2901, %v3198
        %v3288 = vadd.f32 %v2902, %v3202
        %v3289 = vadd.f32 %v2903, %v3204
        %v3290 = vadd.f32 %v2904, %v3208
        %v3291 = vadd.f32 %v2905, %v3210
        %v3292 = vadd.f32 %v2906, %v3214
        %v3293 = vadd.f32 %v2907, %v3216
        %v3294 = vadd.f32 %v2908, %v3220
        %v3295 = vadd.f32 %v2909, %v3222
        %v3296 = vadd.f32 %v2910, %v3226
        %v3297 = vadd.f32 %v2911, %v3228
        %v3298 = vadd.f32 %v2912, %v3232
        %v3299 = vadd.f32 %v2913, %v3234
        %v3300 = vld [vmem:[%s2527 + $0x2] sm:$0xff]
        %v3301 = vld [vmem:[%s2527 + $0xa] sm:$0xff]
        %v3302 = vld [vmem:[%s2527 + $0x1a] sm:$0xff]
        %v3303 = vld [vmem:[%s2527 + $0x22] sm:$0xff]
        %v3304 = vld [vmem:[%s2527 + $0x32] sm:$0xff]
        %v3305 = vld [vmem:[%s2527 + $0x3a] sm:$0xff]
        %v3306 = vld [vmem:[%s2527 + $0x4a] sm:$0xff]
        %v3307 = vld [vmem:[%s2527 + $0x52] sm:$0xff]
        %v3308 = vld [vmem:[%s2527 + $0x62] sm:$0xff]
        %v3309 = vld [vmem:[%s2527 + $0x6a] sm:$0xff]
        %v3310 = vld [vmem:[%s2527 + $0x7a] sm:$0xff]
        %v3311 = vld [vmem:[%s2527 + $0x82] sm:$0xff]
        %v3312 = vld [vmem:[%s2527 + $0x92] sm:$0xff]
        %v3313 = vld [vmem:[%s2527 + $0x9a] sm:$0xff]
        %v3314 = vld [vmem:[%s2527 + $0xaa] sm:$0xff]
        %v3315 = vld [vmem:[%s2527 + $0xb2] sm:$0xff]
        %v3316 = vld [vmem:[%s2527 + $0xc2] sm:$0xff]
        %v3317 = vld [vmem:[%s2527 + $0xca] sm:$0xff]
        %v3318 = vld [vmem:[%s2527 + $0xda] sm:$0xff]
        %v3319 = vld [vmem:[%s2527 + $0xe2] sm:$0xff]
        %v3320 = vld [vmem:[%s2527 + $0xf2] sm:$0xff]
        %v3321 = vld [vmem:[%s2527 + $0xfa] sm:$0xff]
        %v3322 = vld [vmem:[%s2527 + $0x10a] sm:$0xff]
        %v3323 = vld [vmem:[%s2527 + $0x112] sm:$0xff]
        %v3324 = vld [vmem:[%s2527 + $0x122] sm:$0xff]
        %v3325 = vld [vmem:[%s2527 + $0x12a] sm:$0xff]
        %v3326 = vld [vmem:[%s2527 + $0x13a] sm:$0xff]
        %v3327 = vld [vmem:[%s2527 + $0x142] sm:$0xff]
        %v3328 = vld [vmem:[%s2527 + $0x152] sm:$0xff]
        %v3329 = vld [vmem:[%s2527 + $0x15a] sm:$0xff]
        %v3330 = vld [vmem:[%s2527 + $0x16a] sm:$0xff]
        %v3331 = vld [vmem:[%s2527 + $0x172] sm:$0xff]
        %s3332 = scalar_lea.vmem [#allocation2], 2048
        %v3333 = vld [vmem:[%s3332] sm:$0xff]
        %v3334 = vld [vmem:[%s3332 + $0x8] sm:$0xff]
        %v3335 = vld [vmem:[%s3332 + $0x10] sm:$0xff]
        %v3336 = vld [vmem:[%s3332 + $0x18] sm:$0xff]
        %v3337 = vld [vmem:[%s3332 + $0x20] sm:$0xff]
        %v3338 = vld [vmem:[%s3332 + $0x28] sm:$0xff]
        %v3339 = vld [vmem:[%s3332 + $0x30] sm:$0xff]
        %v3340 = vld [vmem:[%s3332 + $0x38] sm:$0xff]
        %v3341 = vld [vmem:[%s3332 + $0x40] sm:$0xff]
        %v3342 = vld [vmem:[%s3332 + $0x48] sm:$0xff]
        %v3343 = vld [vmem:[%s3332 + $0x50] sm:$0xff]
        %v3344 = vld [vmem:[%s3332 + $0x58] sm:$0xff]
        %v3345 = vld [vmem:[%s3332 + $0x60] sm:$0xff]
        %v3346 = vld [vmem:[%s3332 + $0x68] sm:$0xff]
        %v3347 = vld [vmem:[%s3332 + $0x70] sm:$0xff]
        %v3348 = vld [vmem:[%s3332 + $0x78] sm:$0xff]
        %v3349 = vld [vmem:[%s3332 + $0x80] sm:$0xff]
        %v3350 = vld [vmem:[%s3332 + $0x88] sm:$0xff]
        %v3351 = vld [vmem:[%s3332 + $0x90] sm:$0xff]
        %v3352 = vld [vmem:[%s3332 + $0x98] sm:$0xff]
        %v3353 = vld [vmem:[%s3332 + $0xa0] sm:$0xff]
        %v3354 = vld [vmem:[%s3332 + $0xa8] sm:$0xff]
        %v3355 = vld [vmem:[%s3332 + $0xb0] sm:$0xff]
        %v3356 = vld [vmem:[%s3332 + $0xb8] sm:$0xff]
        %v3357 = vld [vmem:[%s3332 + $0xc0] sm:$0xff]
        %v3358 = vld [vmem:[%s3332 + $0xc8] sm:$0xff]
        %v3359 = vld [vmem:[%s3332 + $0xd0] sm:$0xff]
        %v3360 = vld [vmem:[%s3332 + $0xd8] sm:$0xff]
        %v3361 = vld [vmem:[%s3332 + $0xe0] sm:$0xff]
        %v3362 = vld [vmem:[%s3332 + $0xe8] sm:$0xff]
        %v3363 = vld [vmem:[%s3332 + $0xf0] sm:$0xff]
        %v3364 = vld [vmem:[%s3332 + $0xf8] sm:$0xff]
        %3365 = vmatprep.subr.mxu0 %v3334
        %3366 = vmatpush1.msra.mxu0 %v3333
        %3367 = vmatprep.subr.mxu0 %v3336
        %3368 = vmatpush1.msra.mxu0 %v3335
        %3369 = vmatprep.subr.mxu0 %v3338
        %3370 = vmatpush1.msra.mxu0 %v3337
        %3371 = vmatprep.subr.mxu0 %v3340
        %3372 = vmatpush1.msra.mxu0 %v3339
        %3373 = vmatprep.subr.mxu0 %v3342
        %3374 = vmatpush1.msra.mxu0 %v3341
        %3375 = vmatprep.subr.mxu0 %v3344
        %3376 = vmatpush1.msra.mxu0 %v3343
        %3377 = vmatprep.subr.mxu0 %v3346
        %3378 = vmatpush1.msra.mxu0 %v3345
        %3379 = vmatprep.subr.mxu0 %v3348
        %3380 = vmatpush1.msra.mxu0 %v3347
        %3381 = vmatprep.subr.mxu0 %v3350
        %3382 = vmatpush1.msra.mxu0 %v3349
        %3383 = vmatprep.subr.mxu0 %v3352
        %3384 = vmatpush1.msra.mxu0 %v3351
        %3385 = vmatprep.subr.mxu0 %v3354
        %3386 = vmatpush1.msra.mxu0 %v3353
        %3387 = vmatprep.subr.mxu0 %v3356
        %3388 = vmatpush1.msra.mxu0 %v3355
        %3389 = vmatprep.subr.mxu0 %v3358
        %3390 = vmatpush1.msra.mxu0 %v3357
        %3391 = vmatprep.subr.mxu0 %v3360
        %3392 = vmatpush1.msra.mxu0 %v3359
        %3393 = vmatprep.subr.mxu0 %v3362
        %3394 = vmatpush1.msra.mxu0 %v3361
        %3395 = vmatprep.subr.mxu0 %v3364
        %3396 = vmatpush1.msra.mxu0 %v3363
        %3397 = vmatprep.subr.mxu0 0.0
        %3398 = vmatpush1.msra.mxu0 0.0
        %3399 = vmatprep.subr.mxu0 0.0
        %3400 = vmatpush1.msra.mxu0 0.0
        %3401 = vmatprep.subr.mxu0 0.0
        %3402 = vmatpush1.msra.mxu0 0.0
        %3403 = vmatprep.subr.mxu0 0.0
        %3404 = vmatpush1.msra.mxu0 0.0
        %3405 = vmatprep.subr.mxu0 0.0
        %3406 = vmatpush1.msra.mxu0 0.0
        %3407 = vmatprep.subr.mxu0 0.0
        %3408 = vmatpush1.msra.mxu0 0.0
        %3409 = vmatprep.subr.mxu0 0.0
        %3410 = vmatpush1.msra.mxu0 0.0
        %3411 = vmatprep.subr.mxu0 0.0
        %3412 = vmatpush1.msra.mxu0 0.0
        %3413 = vmatprep.subr.mxu0 0.0
        %3414 = vmatpush1.msra.mxu0 0.0
        %3415 = vmatprep.subr.mxu0 0.0
        %3416 = vmatpush1.msra.mxu0 0.0
        %3417 = vmatprep.subr.mxu0 0.0
        %3418 = vmatpush1.msra.mxu0 0.0
        %3419 = vmatprep.subr.mxu0 0.0
        %3420 = vmatpush1.msra.mxu0 0.0
        %3421 = vmatprep.subr.mxu0 0.0
        %3422 = vmatpush1.msra.mxu0 0.0
        %3423 = vmatprep.subr.mxu0 0.0
        %3424 = vmatpush1.msra.mxu0 0.0
        %3425 = vmatprep.subr.mxu0 0.0
        %3426 = vmatpush1.msra.mxu0 0.0
        %3427 = vmatprep.subr.mxu0 0.0
        %3428 = vmatpush1.msra.mxu0 0.0
        %3429 = vmatprep.mubr.f32.mxu0 0.0
        %3430 = vmatmul.mubr.f32.gmra.mrb[0].mxu0 %v3300
        %v3431 = vpop.f32.mrb[0].mxu0
        %v3432 = vadd.f32 0.0, %v3431
        %v3433 = vpop.f32.mrb[0].mxu0
        %v3434 = vadd.f32 0.0, %v3433
        %3435 = vmatprep.mubr.f32.mxu0 0.0
        %3436 = vmatmul.mubr.f32.gmra.mrb[0].mxu0 %v3301
        %v3437 = vpop.f32.mrb[0].mxu0
        %v3438 = vadd.f32 0.0, %v3437
        %v3439 = vpop.f32.mrb[0].mxu0
        %v3440 = vadd.f32 0.0, %v3439
        %3441 = vmatprep.mubr.f32.mxu0 0.0
        %3442 = vmatmul.mubr.f32.gmra.mrb[0].mxu0 %v3302
        %v3443 = vpop.f32.mrb[0].mxu0
        %v3444 = vadd.f32 0.0, %v3443
        %v3445 = vpop.f32.mrb[0].mxu0
        %v3446 = vadd.f32 0.0, %v3445
        %3447 = vmatprep.mubr.f32.mxu0 0.0
        %3448 = vmatmul.mubr.f32.gmra.mrb[0].mxu0 %v3303
        %v3449 = vpop.f32.mrb[0].mxu0
        %v3450 = vadd.f32 0.0, %v3449
        %v3451 = vpop.f32.mrb[0].mxu0
        %v3452 = vadd.f32 0.0, %v3451
        %3453 = vmatprep.mubr.f32.mxu0 0.0
        %3454 = vmatmul.mubr.f32.gmra.mrb[0].mxu0 %v3304
        %v3455 = vpop.f32.mrb[0].mxu0
        %v3456 = vadd.f32 0.0, %v3455
        %v3457 = vpop.f32.mrb[0].mxu0
        %v3458 = vadd.f32 0.0, %v3457
        %3459 = vmatprep.mubr.f32.mxu0 0.0
        %3460 = vmatmul.mubr.f32.gmra.mrb[0].mxu0 %v3305
        %v3461 = vpop.f32.mrb[0].mxu0
        %v3462 = vadd.f32 0.0, %v3461
        %v3463 = vpop.f32.mrb[0].mxu0
        %v3464 = vadd.f32 0.0, %v3463
        %3465 = vmatprep.mubr.f32.mxu0 0.0
        %3466 = vmatmul.mubr.f32.gmra.mrb[0].mxu0 %v3306
        %v3467 = vpop.f32.mrb[0].mxu0
        %v3468 = vadd.f32 0.0, %v3467
        %v3469 = vpop.f32.mrb[0].mxu0
        %v3470 = vadd.f32 0.0, %v3469
        %3471 = vmatprep.mubr.f32.mxu0 0.0
        %3472 = vmatmul.mubr.f32.gmra.mrb[0].mxu0 %v3307
        %v3473 = vpop.f32.mrb[0].mxu0
        %v3474 = vadd.f32 0.0, %v3473
        %v3475 = vpop.f32.mrb[0].mxu0
        %v3476 = vadd.f32 0.0, %v3475
        %3477 = vmatprep.mubr.f32.mxu0 0.0
        %3478 = vmatmul.mubr.f32.gmra.mrb[0].mxu0 %v3308
        %v3479 = vpop.f32.mrb[0].mxu0
        %v3480 = vadd.f32 0.0, %v3479
        %v3481 = vpop.f32.mrb[0].mxu0
        %v3482 = vadd.f32 0.0, %v3481
        %3483 = vmatprep.mubr.f32.mxu0 0.0
        %3484 = vmatmul.mubr.f32.gmra.mrb[0].mxu0 %v3309
        %v3485 = vpop.f32.mrb[0].mxu0
        %v3486 = vadd.f32 0.0, %v3485
        %v3487 = vpop.f32.mrb[0].mxu0
        %v3488 = vadd.f32 0.0, %v3487
        %3489 = vmatprep.mubr.f32.mxu0 0.0
        %3490 = vmatmul.mubr.f32.gmra.mrb[0].mxu0 %v3310
        %v3491 = vpop.f32.mrb[0].mxu0
        %v3492 = vadd.f32 0.0, %v3491
        %v3493 = vpop.f32.mrb[0].mxu0
        %v3494 = vadd.f32 0.0, %v3493
        %3495 = vmatprep.mubr.f32.mxu0 0.0
        %3496 = vmatmul.mubr.f32.gmra.mrb[0].mxu0 %v3311
        %v3497 = vpop.f32.mrb[0].mxu0
        %v3498 = vadd.f32 0.0, %v3497
        %v3499 = vpop.f32.mrb[0].mxu0
        %v3500 = vadd.f32 0.0, %v3499
        %3501 = vmatprep.mubr.f32.mxu0 0.0
        %3502 = vmatmul.mubr.f32.gmra.mrb[0].mxu0 %v3312
        %v3503 = vpop.f32.mrb[0].mxu0
        %v3504 = vadd.f32 0.0, %v3503
        %v3505 = vpop.f32.mrb[0].mxu0
        %v3506 = vadd.f32 0.0, %v3505
        %3507 = vmatprep.mubr.f32.mxu0 0.0
        %3508 = vmatmul.mubr.f32.gmra.mrb[0].mxu0 %v3313
        %v3509 = vpop.f32.mrb[0].mxu0
        %v3510 = vadd.f32 0.0, %v3509
        %v3511 = vpop.f32.mrb[0].mxu0
        %v3512 = vadd.f32 0.0, %v3511
        %3513 = vmatprep.mubr.f32.mxu0 0.0
        %3514 = vmatmul.mubr.f32.gmra.mrb[0].mxu0 %v3314
        %v3515 = vpop.f32.mrb[0].mxu0
        %v3516 = vadd.f32 0.0, %v3515
        %v3517 = vpop.f32.mrb[0].mxu0
        %v3518 = vadd.f32 0.0, %v3517
        %3519 = vmatprep.mubr.f32.mxu0 0.0
        %3520 = vmatmul.mubr.f32.gmra.mrb[0].mxu0 %v3315
        %v3521 = vpop.f32.mrb[0].mxu0
        %v3522 = vadd.f32 0.0, %v3521
        %v3523 = vpop.f32.mrb[0].mxu0
        %v3524 = vadd.f32 0.0, %v3523
        %3525 = vmatprep.mubr.f32.mxu0 0.0
        %3526 = vmatmul.mubr.f32.gmra.mrb[0].mxu0 %v3316
        %v3527 = vpop.f32.mrb[0].mxu0
        %v3528 = vadd.f32 0.0, %v3527
        %v3529 = vpop.f32.mrb[0].mxu0
        %v3530 = vadd.f32 0.0, %v3529
        %3531 = vmatprep.mubr.f32.mxu0 0.0
        %3532 = vmatmul.mubr.f32.gmra.mrb[0].mxu0 %v3317
        %v3533 = vpop.f32.mrb[0].mxu0
        %v3534 = vadd.f32 0.0, %v3533
        %v3535 = vpop.f32.mrb[0].mxu0
        %v3536 = vadd.f32 0.0, %v3535
        %3537 = vmatprep.mubr.f32.mxu0 0.0
        %3538 = vmatmul.mubr.f32.gmra.mrb[0].mxu0 %v3318
        %v3539 = vpop.f32.mrb[0].mxu0
        %v3540 = vadd.f32 0.0, %v3539
        %v3541 = vpop.f32.mrb[0].mxu0
        %v3542 = vadd.f32 0.0, %v3541
        %3543 = vmatprep.mubr.f32.mxu0 0.0
        %3544 = vmatmul.mubr.f32.gmra.mrb[0].mxu0 %v3319
        %v3545 = vpop.f32.mrb[0].mxu0
        %v3546 = vadd.f32 0.0, %v3545
        %v3547 = vpop.f32.mrb[0].mxu0
        %v3548 = vadd.f32 0.0, %v3547
        %3549 = vmatprep.mubr.f32.mxu0 0.0
        %3550 = vmatmul.mubr.f32.gmra.mrb[0].mxu0 %v3320
        %v3551 = vpop.f32.mrb[0].mxu0
        %v3552 = vadd.f32 0.0, %v3551
        %v3553 = vpop.f32.mrb[0].mxu0
        %v3554 = vadd.f32 0.0, %v3553
        %3555 = vmatprep.mubr.f32.mxu0 0.0
        %3556 = vmatmul.mubr.f32.gmra.mrb[0].mxu0 %v3321
        %v3557 = vpop.f32.mrb[0].mxu0
        %v3558 = vadd.f32 0.0, %v3557
        %v3559 = vpop.f32.mrb[0].mxu0
        %v3560 = vadd.f32 0.0, %v3559
        %3561 = vmatprep.mubr.f32.mxu0 0.0
        %3562 = vmatmul.mubr.f32.gmra.mrb[0].mxu0 %v3322
        %v3563 = vpop.f32.mrb[0].mxu0
        %v3564 = vadd.f32 0.0, %v3563
        %v3565 = vpop.f32.mrb[0].mxu0
        %v3566 = vadd.f32 0.0, %v3565
        %3567 = vmatprep.mubr.f32.mxu0 0.0
        %3568 = vmatmul.mubr.f32.gmra.mrb[0].mxu0 %v3323
        %v3569 = vpop.f32.mrb[0].mxu0
        %v3570 = vadd.f32 0.0, %v3569
        %v3571 = vpop.f32.mrb[0].mxu0
        %v3572 = vadd.f32 0.0, %v3571
        %3573 = vmatprep.mubr.f32.mxu0 0.0
        %3574 = vmatmul.mubr.f32.gmra.mrb[0].mxu0 %v3324
        %v3575 = vpop.f32.mrb[0].mxu0
        %v3576 = vadd.f32 0.0, %v3575
        %v3577 = vpop.f32.mrb[0].mxu0
        %v3578 = vadd.f32 0.0, %v3577
        %3579 = vmatprep.mubr.f32.mxu0 0.0
        %3580 = vmatmul.mubr.f32.gmra.mrb[0].mxu0 %v3325
        %v3581 = vpop.f32.mrb[0].mxu0
        %v3582 = vadd.f32 0.0, %v3581
        %v3583 = vpop.f32.mrb[0].mxu0
        %v3584 = vadd.f32 0.0, %v3583
        %3585 = vmatprep.mubr.f32.mxu0 0.0
        %3586 = vmatmul.mubr.f32.gmra.mrb[0].mxu0 %v3326
        %v3587 = vpop.f32.mrb[0].mxu0
        %v3588 = vadd.f32 0.0, %v3587
        %v3589 = vpop.f32.mrb[0].mxu0
        %v3590 = vadd.f32 0.0, %v3589
        %3591 = vmatprep.mubr.f32.mxu0 0.0
        %3592 = vmatmul.mubr.f32.gmra.mrb[0].mxu0 %v3327
        %v3593 = vpop.f32.mrb[0].mxu0
        %v3594 = vadd.f32 0.0, %v3593
        %v3595 = vpop.f32.mrb[0].mxu0
        %v3596 = vadd.f32 0.0, %v3595
        %3597 = vmatprep.mubr.f32.mxu0 0.0
        %3598 = vmatmul.mubr.f32.gmra.mrb[0].mxu0 %v3328
        %v3599 = vpop.f32.mrb[0].mxu0
        %v3600 = vadd.f32 0.0, %v3599
        %v3601 = vpop.f32.mrb[0].mxu0
        %v3602 = vadd.f32 0.0, %v3601
        %3603 = vmatprep.mubr.f32.mxu0 0.0
        %3604 = vmatmul.mubr.f32.gmra.mrb[0].mxu0 %v3329
        %v3605 = vpop.f32.mrb[0].mxu0
        %v3606 = vadd.f32 0.0, %v3605
        %v3607 = vpop.f32.mrb[0].mxu0
        %v3608 = vadd.f32 0.0, %v3607
        %3609 = vmatprep.mubr.f32.mxu0 0.0
        %3610 = vmatmul.mubr.f32.gmra.mrb[0].mxu0 %v3330
        %v3611 = vpop.f32.mrb[0].mxu0
        %v3612 = vadd.f32 0.0, %v3611
        %v3613 = vpop.f32.mrb[0].mxu0
        %v3614 = vadd.f32 0.0, %v3613
        %3615 = vmatprep.mubr.f32.mxu0 0.0
        %3616 = vmatmul.mubr.f32.gmra.mrb[0].mxu0 %v3331
        %v3617 = vpop.f32.mrb[0].mxu0
        %v3618 = vadd.f32 0.0, %v3617
        %v3619 = vpop.f32.mrb[0].mxu0
        %v3620 = vadd.f32 0.0, %v3619
        %3621 = vdwg.mxu0
        %v3622 = vadd.f32 %v3236, %v3432
        %v3623 = vadd.f32 %v3237, %v3434
        %v3624 = vadd.f32 %v3238, %v3438
        %v3625 = vadd.f32 %v3239, %v3440
        %v3626 = vadd.f32 %v3240, %v3444
        %v3627 = vadd.f32 %v3241, %v3446
        %v3628 = vadd.f32 %v3242, %v3450
        %v3629 = vadd.f32 %v3243, %v3452
        %v3630 = vadd.f32 %v3244, %v3456
        %v3631 = vadd.f32 %v3245, %v3458
        %v3632 = vadd.f32 %v3246, %v3462
        %v3633 = vadd.f32 %v3247, %v3464
        %v3634 = vadd.f32 %v3248, %v3468
        %v3635 = vadd.f32 %v3249, %v3470
        %v3636 = vadd.f32 %v3250, %v3474
        %v3637 = vadd.f32 %v3251, %v3476
        %v3638 = vadd.f32 %v3252, %v3480
        %v3639 = vadd.f32 %v3253, %v3482
        %v3640 = vadd.f32 %v3254, %v3486
        %v3641 = vadd.f32 %v3255, %v3488
        %v3642 = vadd.f32 %v3256, %v3492
        %v3643 = vadd.f32 %v3257, %v3494
        %v3644 = vadd.f32 %v3258, %v3498
        %v3645 = vadd.f32 %v3259, %v3500
        %v3646 = vadd.f32 %v3260, %v3504
        %v3647 = vadd.f32 %v3261, %v3506
        %v3648 = vadd.f32 %v3262, %v3510
        %v3649 = vadd.f32 %v3263, %v3512
        %v3650 = vadd.f32 %v3264, %v3516
        %v3651 = vadd.f32 %v3265, %v3518
        %v3652 = vadd.f32 %v3266, %v3522
        %v3653 = vadd.f32 %v3267, %v3524
        %v3654 = vadd.f32 %v3268, %v3528
        %v3655 = vadd.f32 %v3269, %v3530
        %v3656 = vadd.f32 %v3270, %v3534
        %v3657 = vadd.f32 %v3271, %v3536
        %v3658 = vadd.f32 %v3272, %v3540
        %v3659 = vadd.f32 %v3273, %v3542
        %v3660 = vadd.f32 %v3274, %v3546
        %v3661 = vadd.f32 %v3275, %v3548
        %v3662 = vadd.f32 %v3276, %v3552
        %v3663 = vadd.f32 %v3277, %v3554
        %v3664 = vadd.f32 %v3278, %v3558
        %v3665 = vadd.f32 %v3279, %v3560
        %v3666 = vadd.f32 %v3280, %v3564
        %v3667 = vadd.f32 %v3281, %v3566
        %v3668 = vadd.f32 %v3282, %v3570
        %v3669 = vadd.f32 %v3283, %v3572
        %v3670 = vadd.f32 %v3284, %v3576
        %v3671 = vadd.f32 %v3285, %v3578
        %v3672 = vadd.f32 %v3286, %v3582
        %v3673 = vadd.f32 %v3287, %v3584
        %v3674 = vadd.f32 %v3288, %v3588
        %v3675 = vadd.f32 %v3289, %v3590
        %v3676 = vadd.f32 %v3290, %v3594
        %v3677 = vadd.f32 %v3291, %v3596
        %v3678 = vadd.f32 %v3292, %v3600
        %v3679 = vadd.f32 %v3293, %v3602
        %v3680 = vadd.f32 %v3294, %v3606
        %v3681 = vadd.f32 %v3295, %v3608
        %v3682 = vadd.f32 %v3296, %v3612
        %v3683 = vadd.f32 %v3297, %v3614
        %v3684 = vadd.f32 %v3298, %v3618
        %v3685 = vadd.f32 %v3299, %v3620
        %v3686 = vld [vmem:[#allocation5] sm:$0x3]
        %v3688 = vlaneseq
        %v3689 = vshrl.u32 %v3688, 7
        %v3690 = vsub.s32 0, %v3689
        %v3691 = vrot.slane %v3686, %v3690
        %v3692 = vlaneseq
        %v3693 = vshrl.u32 %v3692, 7
        %v3694 = vsub.s32 1, %v3693
        %v3695 = vrot.slane %v3686, %v3694
        %v3698 = vmul.f32 %v3622, %v3691
        %v3699 = vmul.f32 %v3623, %v3695
        %v3700 = vmul.f32 %v3624, %v3691
        %v3701 = vmul.f32 %v3625, %v3695
        %v3702 = vmul.f32 %v3626, %v3691
        %v3703 = vmul.f32 %v3627, %v3695
        %v3704 = vmul.f32 %v3628, %v3691
        %v3705 = vmul.f32 %v3629, %v3695
        %v3706 = vmul.f32 %v3630, %v3691
        %v3707 = vmul.f32 %v3631, %v3695
        %v3708 = vmul.f32 %v3632, %v3691
        %v3709 = vmul.f32 %v3633, %v3695
        %v3710 = vmul.f32 %v3634, %v3691
        %v3711 = vmul.f32 %v3635, %v3695
        %v3712 = vmul.f32 %v3636, %v3691
        %v3713 = vmul.f32 %v3637, %v3695
        %v3714 = vmul.f32 %v3638, %v3691
        %v3715 = vmul.f32 %v3639, %v3695
        %v3716 = vmul.f32 %v3640, %v3691
        %v3717 = vmul.f32 %v3641, %v3695
        %v3718 = vmul.f32 %v3642, %v3691
        %v3719 = vmul.f32 %v3643, %v3695
        %v3720 = vmul.f32 %v3644, %v3691
        %v3721 = vmul.f32 %v3645, %v3695
        %v3722 = vmul.f32 %v3646, %v3691
        %v3723 = vmul.f32 %v3647, %v3695
        %v3724 = vmul.f32 %v3648, %v3691
        %v3725 = vmul.f32 %v3649, %v3695
        %v3726 = vmul.f32 %v3650, %v3691
        %v3727 = vmul.f32 %v3651, %v3695
        %v3728 = vmul.f32 %v3652, %v3691
        %v3729 = vmul.f32 %v3653, %v3695
        %v3730 = vmul.f32 %v3654, %v3691
        %v3731 = vmul.f32 %v3655, %v3695
        %v3732 = vmul.f32 %v3656, %v3691
        %v3733 = vmul.f32 %v3657, %v3695
        %v3734 = vmul.f32 %v3658, %v3691
        %v3735 = vmul.f32 %v3659, %v3695
        %v3736 = vmul.f32 %v3660, %v3691
        %v3737 = vmul.f32 %v3661, %v3695
        %v3738 = vmul.f32 %v3662, %v3691
        %v3739 = vmul.f32 %v3663, %v3695
        %v3740 = vmul.f32 %v3664, %v3691
        %v3741 = vmul.f32 %v3665, %v3695
        %v3742 = vmul.f32 %v3666, %v3691
        %v3743 = vmul.f32 %v3667, %v3695
        %v3744 = vmul.f32 %v3668, %v3691
        %v3745 = vmul.f32 %v3669, %v3695
        %v3746 = vmul.f32 %v3670, %v3691
        %v3747 = vmul.f32 %v3671, %v3695
        %v3748 = vmul.f32 %v3672, %v3691
        %v3749 = vmul.f32 %v3673, %v3695
        %v3750 = vmul.f32 %v3674, %v3691
        %v3751 = vmul.f32 %v3675, %v3695
        %v3752 = vmul.f32 %v3676, %v3691
        %v3753 = vmul.f32 %v3677, %v3695
        %v3754 = vmul.f32 %v3678, %v3691
        %v3755 = vmul.f32 %v3679, %v3695
        %v3756 = vmul.f32 %v3680, %v3691
        %v3757 = vmul.f32 %v3681, %v3695
        %v3758 = vmul.f32 %v3682, %v3691
        %v3759 = vmul.f32 %v3683, %v3695
        %v3760 = vmul.f32 %v3684, %v3691
        %v3761 = vmul.f32 %v3685, %v3695
        %v3762 = vld [vmem:[#allocation7] sm:$0x3]
        %v3764 = vlaneseq
        %v3765 = vshrl.u32 %v3764, 7
        %v3766 = vsub.s32 0, %v3765
        %v3767 = vrot.slane %v3762, %v3766
        %v3768 = vlaneseq
        %v3769 = vshrl.u32 %v3768, 7
        %v3770 = vsub.s32 1, %v3769
        %v3771 = vrot.slane %v3762, %v3770
        %v3774 = vadd.f32 %v3698, %v3767
        %v3775 = vadd.f32 %v3699, %v3771
        %v3776 = vadd.f32 %v3700, %v3767
        %v3777 = vadd.f32 %v3701, %v3771
        %v3778 = vadd.f32 %v3702, %v3767
        %v3779 = vadd.f32 %v3703, %v3771
        %v3780 = vadd.f32 %v3704, %v3767
        %v3781 = vadd.f32 %v3705, %v3771
        %v3782 = vadd.f32 %v3706, %v3767
        %v3783 = vadd.f32 %v3707, %v3771
        %v3784 = vadd.f32 %v3708, %v3767
        %v3785 = vadd.f32 %v3709, %v3771
        %v3786 = vadd.f32 %v3710, %v3767
        %v3787 = vadd.f32 %v3711, %v3771
        %v3788 = vadd.f32 %v3712, %v3767
        %v3789 = vadd.f32 %v3713, %v3771
        %v3790 = vadd.f32 %v3714, %v3767
        %v3791 = vadd.f32 %v3715, %v3771
        %v3792 = vadd.f32 %v3716, %v3767
        %v3793 = vadd.f32 %v3717, %v3771
        %v3794 = vadd.f32 %v3718, %v3767
        %v3795 = vadd.f32 %v3719, %v3771
        %v3796 = vadd.f32 %v3720, %v3767
        %v3797 = vadd.f32 %v3721, %v3771
        %v3798 = vadd.f32 %v3722, %v3767
        %v3799 = vadd.f32 %v3723, %v3771
        %v3800 = vadd.f32 %v3724, %v3767
        %v3801 = vadd.f32 %v3725, %v3771
        %v3802 = vadd.f32 %v3726, %v3767
        %v3803 = vadd.f32 %v3727, %v3771
        %v3804 = vadd.f32 %v3728, %v3767
        %v3805 = vadd.f32 %v3729, %v3771
        %v3806 = vadd.f32 %v3730, %v3767
        %v3807 = vadd.f32 %v3731, %v3771
        %v3808 = vadd.f32 %v3732, %v3767
        %v3809 = vadd.f32 %v3733, %v3771
        %v3810 = vadd.f32 %v3734, %v3767
        %v3811 = vadd.f32 %v3735, %v3771
        %v3812 = vadd.f32 %v3736, %v3767
        %v3813 = vadd.f32 %v3737, %v3771
        %v3814 = vadd.f32 %v3738, %v3767
        %v3815 = vadd.f32 %v3739, %v3771
        %v3816 = vadd.f32 %v3740, %v3767
        %v3817 = vadd.f32 %v3741, %v3771
        %v3818 = vadd.f32 %v3742, %v3767
        %v3819 = vadd.f32 %v3743, %v3771
        %v3820 = vadd.f32 %v3744, %v3767
        %v3821 = vadd.f32 %v3745, %v3771
        %v3822 = vadd.f32 %v3746, %v3767
        %v3823 = vadd.f32 %v3747, %v3771
        %v3824 = vadd.f32 %v3748, %v3767
        %v3825 = vadd.f32 %v3749, %v3771
        %v3826 = vadd.f32 %v3750, %v3767
        %v3827 = vadd.f32 %v3751, %v3771
        %v3828 = vadd.f32 %v3752, %v3767
        %v3829 = vadd.f32 %v3753, %v3771
        %v3830 = vadd.f32 %v3754, %v3767
        %v3831 = vadd.f32 %v3755, %v3771
        %v3832 = vadd.f32 %v3756, %v3767
        %v3833 = vadd.f32 %v3757, %v3771
        %v3834 = vadd.f32 %v3758, %v3767
        %v3835 = vadd.f32 %v3759, %v3771
        %v3836 = vadd.f32 %v3760, %v3767
        %v3837 = vadd.f32 %v3761, %v3771
        %v3838 = vmax.f32 %v3774, 0.0
        %v3839 = vmax.f32 %v3775, 0.0
        %v3840 = vmax.f32 %v3776, 0.0
        %v3841 = vmax.f32 %v3777, 0.0
        %v3842 = vmax.f32 %v3778, 0.0
        %v3843 = vmax.f32 %v3779, 0.0
        %v3844 = vmax.f32 %v3780, 0.0
        %v3845 = vmax.f32 %v3781, 0.0
        %v3846 = vmax.f32 %v3782, 0.0
        %v3847 = vmax.f32 %v3783, 0.0
        %v3848 = vmax.f32 %v3784, 0.0
        %v3849 = vmax.f32 %v3785, 0.0
        %v3850 = vmax.f32 %v3786, 0.0
        %v3851 = vmax.f32 %v3787, 0.0
        %v3852 = vmax.f32 %v3788, 0.0
        %v3853 = vmax.f32 %v3789, 0.0
        %v3854 = vmax.f32 %v3790, 0.0
        %v3855 = vmax.f32 %v3791, 0.0
        %v3856 = vmax.f32 %v3792, 0.0
        %v3857 = vmax.f32 %v3793, 0.0
        %v3858 = vmax.f32 %v3794, 0.0
        %v3859 = vmax.f32 %v3795, 0.0
        %v3860 = vmax.f32 %v3796, 0.0
        %v3861 = vmax.f32 %v3797, 0.0
        %v3862 = vmax.f32 %v3798, 0.0
        %v3863 = vmax.f32 %v3799, 0.0
        %v3864 = vmax.f32 %v3800, 0.0
        %v3865 = vmax.f32 %v3801, 0.0
        %v3866 = vmax.f32 %v3802, 0.0
        %v3867 = vmax.f32 %v3803, 0.0
        %v3868 = vmax.f32 %v3804, 0.0
        %v3869 = vmax.f32 %v3805, 0.0
        %v3870 = vmax.f32 %v3806, 0.0
        %v3871 = vmax.f32 %v3807, 0.0
        %v3872 = vmax.f32 %v3808, 0.0
        %v3873 = vmax.f32 %v3809, 0.0
        %v3874 = vmax.f32 %v3810, 0.0
        %v3875 = vmax.f32 %v3811, 0.0
        %v3876 = vmax.f32 %v3812, 0.0
        %v3877 = vmax.f32 %v3813, 0.0
        %v3878 = vmax.f32 %v3814, 0.0
        %v3879 = vmax.f32 %v3815, 0.0
        %v3880 = vmax.f32 %v3816, 0.0
        %v3881 = vmax.f32 %v3817, 0.0
        %v3882 = vmax.f32 %v3818, 0.0
        %v3883 = vmax.f32 %v3819, 0.0
        %v3884 = vmax.f32 %v3820, 0.0
        %v3885 = vmax.f32 %v3821, 0.0
        %v3886 = vmax.f32 %v3822, 0.0
        %v3887 = vmax.f32 %v3823, 0.0
        %v3888 = vmax.f32 %v3824, 0.0
        %v3889 = vmax.f32 %v3825, 0.0
        %v3890 = vmax.f32 %v3826, 0.0
        %v3891 = vmax.f32 %v3827, 0.0
        %v3892 = vmax.f32 %v3828, 0.0
        %v3893 = vmax.f32 %v3829, 0.0
        %v3894 = vmax.f32 %v3830, 0.0
        %v3895 = vmax.f32 %v3831, 0.0
        %v3896 = vmax.f32 %v3832, 0.0
        %v3897 = vmax.f32 %v3833, 0.0
        %v3898 = vmax.f32 %v3834, 0.0
        %v3899 = vmax.f32 %v3835, 0.0
        %v3900 = vmax.f32 %v3836, 0.0
        %v3901 = vmax.f32 %v3837, 0.0
        %v3902 = vld [vmem:[#allocation8] sm:$0xff]
        %v3903 = vld [vmem:[#allocation8 + $0x8] sm:$0xff]
        %v3904 = vld [vmem:[#allocation8 + $0x10] sm:$0xff]
        %v3905 = vld [vmem:[#allocation8 + $0x18] sm:$0xff]
        %v3906 = vld [vmem:[#allocation8 + $0x20] sm:$0xff]
        %v3907 = vld [vmem:[#allocation8 + $0x28] sm:$0xff]
        %v3908 = vld [vmem:[#allocation8 + $0x30] sm:$0xff]
        %v3909 = vld [vmem:[#allocation8 + $0x38] sm:$0xff]
        %v3910 = vld [vmem:[#allocation8 + $0x40] sm:$0xff]
        %v3911 = vld [vmem:[#allocation8 + $0x48] sm:$0xff]
        %v3912 = vld [vmem:[#allocation8 + $0x50] sm:$0xff]
        %v3913 = vld [vmem:[#allocation8 + $0x58] sm:$0xff]
        %v3914 = vld [vmem:[#allocation8 + $0x60] sm:$0xff]
        %v3915 = vld [vmem:[#allocation8 + $0x68] sm:$0xff]
        %v3916 = vld [vmem:[#allocation8 + $0x70] sm:$0xff]
        %v3917 = vld [vmem:[#allocation8 + $0x78] sm:$0xff]
        %v3918 = vld [vmem:[#allocation8 + $0x80] sm:$0xff]
        %v3919 = vld [vmem:[#allocation8 + $0x88] sm:$0xff]
        %v3920 = vld [vmem:[#allocation8 + $0x90] sm:$0xff]
        %v3921 = vld [vmem:[#allocation8 + $0x98] sm:$0xff]
        %v3922 = vld [vmem:[#allocation8 + $0xa0] sm:$0xff]
        %v3923 = vld [vmem:[#allocation8 + $0xa8] sm:$0xff]
        %v3924 = vld [vmem:[#allocation8 + $0xb0] sm:$0xff]
        %v3925 = vld [vmem:[#allocation8 + $0xb8] sm:$0xff]
        %v3926 = vld [vmem:[#allocation8 + $0xc0] sm:$0xff]
        %v3927 = vld [vmem:[#allocation8 + $0xc8] sm:$0xff]
        %v3928 = vld [vmem:[#allocation8 + $0xd0] sm:$0xff]
        %v3929 = vld [vmem:[#allocation8 + $0xd8] sm:$0xff]
        %v3930 = vld [vmem:[#allocation8 + $0xe0] sm:$0xff]
        %v3931 = vld [vmem:[#allocation8 + $0xe8] sm:$0xff]
        %v3932 = vld [vmem:[#allocation8 + $0xf0] sm:$0xff]
        %v3933 = vld [vmem:[#allocation8 + $0xf8] sm:$0xff]
        %v3934 = vld [vmem:[#allocation10] sm:$0x1]
        %v3936 = vlaneseq
        %v3937 = vshrl.u32 %v3936, 7
        %v3938 = vsub.s32 0, %v3937
        %v3939 = vrot.slane %v3934, %v3938
        %3941 = vmatprep.subr.mxu0 0.0
        %3942 = vmatpush1.msra.mxu0 %v3902
        %3943 = vmatprep.subr.mxu0 0.0
        %3944 = vmatpush1.msra.mxu0 %v3903
        %3945 = vmatprep.subr.mxu0 0.0
        %3946 = vmatpush1.msra.mxu0 %v3904
        %3947 = vmatprep.subr.mxu0 0.0
        %3948 = vmatpush1.msra.mxu0 %v3905
        %3949 = vmatprep.subr.mxu0 0.0
        %3950 = vmatpush1.msra.mxu0 %v3906
        %3951 = vmatprep.subr.mxu0 0.0
        %3952 = vmatpush1.msra.mxu0 %v3907
        %3953 = vmatprep.subr.mxu0 0.0
        %3954 = vmatpush1.msra.mxu0 %v3908
        %3955 = vmatprep.subr.mxu0 0.0
        %3956 = vmatpush1.msra.mxu0 %v3909
        %3957 = vmatprep.subr.mxu0 0.0
        %3958 = vmatpush1.msra.mxu0 %v3910
        %3959 = vmatprep.subr.mxu0 0.0
        %3960 = vmatpush1.msra.mxu0 %v3911
        %3961 = vmatprep.subr.mxu0 0.0
        %3962 = vmatpush1.msra.mxu0 %v3912
        %3963 = vmatprep.subr.mxu0 0.0
        %3964 = vmatpush1.msra.mxu0 %v3913
        %3965 = vmatprep.subr.mxu0 0.0
        %3966 = vmatpush1.msra.mxu0 %v3914
        %3967 = vmatprep.subr.mxu0 0.0
        %3968 = vmatpush1.msra.mxu0 %v3915
        %3969 = vmatprep.subr.mxu0 0.0
        %3970 = vmatpush1.msra.mxu0 %v3916
        %3971 = vmatprep.subr.mxu0 0.0
        %3972 = vmatpush1.msra.mxu0 %v3917
        %3973 = vmatprep.subr.mxu0 0.0
        %3974 = vmatpush1.msra.mxu0 %v3918
        %3975 = vmatprep.subr.mxu0 0.0
        %3976 = vmatpush1.msra.mxu0 %v3919
        %3977 = vmatprep.subr.mxu0 0.0
        %3978 = vmatpush1.msra.mxu0 %v3920
        %3979 = vmatprep.subr.mxu0 0.0
        %3980 = vmatpush1.msra.mxu0 %v3921
        %3981 = vmatprep.subr.mxu0 0.0
        %3982 = vmatpush1.msra.mxu0 %v3922
        %3983 = vmatprep.subr.mxu0 0.0
        %3984 = vmatpush1.msra.mxu0 %v3923
        %3985 = vmatprep.subr.mxu0 0.0
        %3986 = vmatpush1.msra.mxu0 %v3924
        %3987 = vmatprep.subr.mxu0 0.0
        %3988 = vmatpush1.msra.mxu0 %v3925
        %3989 = vmatprep.subr.mxu0 0.0
        %3990 = vmatpush1.msra.mxu0 %v3926
        %3991 = vmatprep.subr.mxu0 0.0
        %3992 = vmatpush1.msra.mxu0 %v3927
        %3993 = vmatprep.subr.mxu0 0.0
        %3994 = vmatpush1.msra.mxu0 %v3928
        %3995 = vmatprep.subr.mxu0 0.0
        %3996 = vmatpush1.msra.mxu0 %v3929
        %3997 = vmatprep.subr.mxu0 0.0
        %3998 = vmatpush1.msra.mxu0 %v3930
        %3999 = vmatprep.subr.mxu0 0.0
        %4000 = vmatpush1.msra.mxu0 %v3931
        %4001 = vmatprep.subr.mxu0 0.0
        %4002 = vmatpush1.msra.mxu0 %v3932
        %4003 = vmatprep.subr.mxu0 0.0
        %4004 = vmatpush1.msra.mxu0 %v3933
        %4005 = vmatprep.mubr.f32.mxu0 %v3839
        %4006 = vmatmul.mubr.f32.gmra.mrb[0].mxu0 %v3838
        %v4007 = vpop.f32.mrb[0].mxu0
        %v4008 = vadd.f32 %v3939, %v4007
        %v4009 = vpop.f32.mrb[0].mxu0
        %4010 = vmatprep.mubr.f32.mxu0 %v3841
        %4011 = vmatmul.mubr.f32.gmra.mrb[0].mxu0 %v3840
        %v4012 = vpop.f32.mrb[0].mxu0
        %v4013 = vadd.f32 %v3939, %v4012
        %v4014 = vpop.f32.mrb[0].mxu0
        %4015 = vmatprep.mubr.f32.mxu0 %v3843
        %4016 = vmatmul.mubr.f32.gmra.mrb[0].mxu0 %v3842
        %v4017 = vpop.f32.mrb[0].mxu0
        %v4018 = vadd.f32 %v3939, %v4017
        %v4019 = vpop.f32.mrb[0].mxu0
        %4020 = vmatprep.mubr.f32.mxu0 %v3845
        %4021 = vmatmul.mubr.f32.gmra.mrb[0].mxu0 %v3844
        %v4022 = vpop.f32.mrb[0].mxu0
        %v4023 = vadd.f32 %v3939, %v4022
        %v4024 = vpop.f32.mrb[0].mxu0
        %4025 = vmatprep.mubr.f32.mxu0 %v3847
        %4026 = vmatmul.mubr.f32.gmra.mrb[0].mxu0 %v3846
        %v4027 = vpop.f32.mrb[0].mxu0
        %v4028 = vadd.f32 %v3939, %v4027
        %v4029 = vpop.f32.mrb[0].mxu0
        %4030 = vmatprep.mubr.f32.mxu0 %v3849
        %4031 = vmatmul.mubr.f32.gmra.mrb[0].mxu0 %v3848
        %v4032 = vpop.f32.mrb[0].mxu0
        %v4033 = vadd.f32 %v3939, %v4032
        %v4034 = vpop.f32.mrb[0].mxu0
        %4035 = vmatprep.mubr.f32.mxu0 %v3851
        %4036 = vmatmul.mubr.f32.gmra.mrb[0].mxu0 %v3850
        %v4037 = vpop.f32.mrb[0].mxu0
        %v4038 = vadd.f32 %v3939, %v4037
        %v4039 = vpop.f32.mrb[0].mxu0
        %4040 = vmatprep.mubr.f32.mxu0 %v3853
        %4041 = vmatmul.mubr.f32.gmra.mrb[0].mxu0 %v3852
        %v4042 = vpop.f32.mrb[0].mxu0
        %v4043 = vadd.f32 %v3939, %v4042
        %v4044 = vpop.f32.mrb[0].mxu0
        %4045 = vmatprep.mubr.f32.mxu0 %v3855
        %4046 = vmatmul.mubr.f32.gmra.mrb[0].mxu0 %v3854
        %v4047 = vpop.f32.mrb[0].mxu0
        %v4048 = vadd.f32 %v3939, %v4047
        %v4049 = vpop.f32.mrb[0].mxu0
        %4050 = vmatprep.mubr.f32.mxu0 %v3857
        %4051 = vmatmul.mubr.f32.gmra.mrb[0].mxu0 %v3856
        %v4052 = vpop.f32.mrb[0].mxu0
        %v4053 = vadd.f32 %v3939, %v4052
        %v4054 = vpop.f32.mrb[0].mxu0
        %4055 = vmatprep.mubr.f32.mxu0 %v3859
        %4056 = vmatmul.mubr.f32.gmra.mrb[0].mxu0 %v3858
        %v4057 = vpop.f32.mrb[0].mxu0
        %v4058 = vadd.f32 %v3939, %v4057
        %v4059 = vpop.f32.mrb[0].mxu0
        %4060 = vmatprep.mubr.f32.mxu0 %v3861
        %4061 = vmatmul.mubr.f32.gmra.mrb[0].mxu0 %v3860
        %v4062 = vpop.f32.mrb[0].mxu0
        %v4063 = vadd.f32 %v3939, %v4062
        %v4064 = vpop.f32.mrb[0].mxu0
        %4065 = vmatprep.mubr.f32.mxu0 %v3863
        %4066 = vmatmul.mubr.f32.gmra.mrb[0].mxu0 %v3862
        %v4067 = vpop.f32.mrb[0].mxu0
        %v4068 = vadd.f32 %v3939, %v4067
        %v4069 = vpop.f32.mrb[0].mxu0
        %4070 = vmatprep.mubr.f32.mxu0 %v3865
        %4071 = vmatmul.mubr.f32.gmra.mrb[0].mxu0 %v3864
        %v4072 = vpop.f32.mrb[0].mxu0
        %v4073 = vadd.f32 %v3939, %v4072
        %v4074 = vpop.f32.mrb[0].mxu0
        %4075 = vmatprep.mubr.f32.mxu0 %v3867
        %4076 = vmatmul.mubr.f32.gmra.mrb[0].mxu0 %v3866
        %v4077 = vpop.f32.mrb[0].mxu0
        %v4078 = vadd.f32 %v3939, %v4077
        %v4079 = vpop.f32.mrb[0].mxu0
        %4080 = vmatprep.mubr.f32.mxu0 %v3869
        %4081 = vmatmul.mubr.f32.gmra.mrb[0].mxu0 %v3868
        %v4082 = vpop.f32.mrb[0].mxu0
        %v4083 = vadd.f32 %v3939, %v4082
        %v4084 = vpop.f32.mrb[0].mxu0
        %4085 = vmatprep.mubr.f32.mxu0 %v3871
        %4086 = vmatmul.mubr.f32.gmra.mrb[0].mxu0 %v3870
        %v4087 = vpop.f32.mrb[0].mxu0
        %v4088 = vadd.f32 %v3939, %v4087
        %v4089 = vpop.f32.mrb[0].mxu0
        %4090 = vmatprep.mubr.f32.mxu0 %v3873
        %4091 = vmatmul.mubr.f32.gmra.mrb[0].mxu0 %v3872
        %v4092 = vpop.f32.mrb[0].mxu0
        %v4093 = vadd.f32 %v3939, %v4092
        %v4094 = vpop.f32.mrb[0].mxu0
        %4095 = vmatprep.mubr.f32.mxu0 %v3875
        %4096 = vmatmul.mubr.f32.gmra.mrb[0].mxu0 %v3874
        %v4097 = vpop.f32.mrb[0].mxu0
        %v4098 = vadd.f32 %v3939, %v4097
        %v4099 = vpop.f32.mrb[0].mxu0
        %4100 = vmatprep.mubr.f32.mxu0 %v3877
        %4101 = vmatmul.mubr.f32.gmra.mrb[0].mxu0 %v3876
        %v4102 = vpop.f32.mrb[0].mxu0
        %v4103 = vadd.f32 %v3939, %v4102
        %v4104 = vpop.f32.mrb[0].mxu0
        %4105 = vmatprep.mubr.f32.mxu0 %v3879
        %4106 = vmatmul.mubr.f32.gmra.mrb[0].mxu0 %v3878
        %v4107 = vpop.f32.mrb[0].mxu0
        %v4108 = vadd.f32 %v3939, %v4107
        %v4109 = vpop.f32.mrb[0].mxu0
        %4110 = vmatprep.mubr.f32.mxu0 %v3881
        %4111 = vmatmul.mubr.f32.gmra.mrb[0].mxu0 %v3880
        %v4112 = vpop.f32.mrb[0].mxu0
        %v4113 = vadd.f32 %v3939, %v4112
        %v4114 = vpop.f32.mrb[0].mxu0
        %4115 = vmatprep.mubr.f32.mxu0 %v3883
        %4116 = vmatmul.mubr.f32.gmra.mrb[0].mxu0 %v3882
        %v4117 = vpop.f32.mrb[0].mxu0
        %v4118 = vadd.f32 %v3939, %v4117
        %v4119 = vpop.f32.mrb[0].mxu0
        %4120 = vmatprep.mubr.f32.mxu0 %v3885
        %4121 = vmatmul.mubr.f32.gmra.mrb[0].mxu0 %v3884
        %v4122 = vpop.f32.mrb[0].mxu0
        %v4123 = vadd.f32 %v3939, %v4122
        %v4124 = vpop.f32.mrb[0].mxu0
        %4125 = vmatprep.mubr.f32.mxu0 %v3887
        %4126 = vmatmul.mubr.f32.gmra.mrb[0].mxu0 %v3886
        %v4127 = vpop.f32.mrb[0].mxu0
        %v4128 = vadd.f32 %v3939, %v4127
        %v4129 = vpop.f32.mrb[0].mxu0
        %4130 = vmatprep.mubr.f32.mxu0 %v3889
        %4131 = vmatmul.mubr.f32.gmra.mrb[0].mxu0 %v3888
        %v4132 = vpop.f32.mrb[0].mxu0
        %v4133 = vadd.f32 %v3939, %v4132
        %v4134 = vpop.f32.mrb[0].mxu0
        %4135 = vmatprep.mubr.f32.mxu0 %v3891
        %4136 = vmatmul.mubr.f32.gmra.mrb[0].mxu0 %v3890
        %v4137 = vpop.f32.mrb[0].mxu0
        %v4138 = vadd.f32 %v3939, %v4137
        %v4139 = vpop.f32.mrb[0].mxu0
        %4140 = vmatprep.mubr.f32.mxu0 %v3893
        %4141 = vmatmul.mubr.f32.gmra.mrb[0].mxu0 %v3892
        %v4142 = vpop.f32.mrb[0].mxu0
        %v4143 = vadd.f32 %v3939, %v4142
        %v4144 = vpop.f32.mrb[0].mxu0
        %4145 = vmatprep.mubr.f32.mxu0 %v3895
        %4146 = vmatmul.mubr.f32.gmra.mrb[0].mxu0 %v3894
        %v4147 = vpop.f32.mrb[0].mxu0
        %v4148 = vadd.f32 %v3939, %v4147
        %v4149 = vpop.f32.mrb[0].mxu0
        %4150 = vmatprep.mubr.f32.mxu0 %v3897
        %4151 = vmatmul.mubr.f32.gmra.mrb[0].mxu0 %v3896
        %v4152 = vpop.f32.mrb[0].mxu0
        %v4153 = vadd.f32 %v3939, %v4152
        %v4154 = vpop.f32.mrb[0].mxu0
        %4155 = vmatprep.mubr.f32.mxu0 %v3899
        %4156 = vmatmul.mubr.f32.gmra.mrb[0].mxu0 %v3898
        %v4157 = vpop.f32.mrb[0].mxu0
        %v4158 = vadd.f32 %v3939, %v4157
        %v4159 = vpop.f32.mrb[0].mxu0
        %4160 = vmatprep.mubr.f32.mxu0 %v3901
        %4161 = vmatmul.mubr.f32.gmra.mrb[0].mxu0 %v3900
        %v4162 = vpop.f32.mrb[0].mxu0
        %v4163 = vadd.f32 %v3939, %v4162
        %v4164 = vpop.f32.mrb[0].mxu0
        %4165 = vdwg.mxu0
        %4166 = vst [vmem:[%s325] sm:$0xff] %v4008
        %4167 = vst [vmem:[%s325 + $0x8] sm:$0xff] %v4013
        %4168 = vst [vmem:[%s325 + $0x10] sm:$0xff] %v4018
        %4169 = vst [vmem:[%s325 + $0x18] sm:$0xff] %v4023
        %4170 = vst [vmem:[%s325 + $0x20] sm:$0xff] %v4028
        %4171 = vst [vmem:[%s325 + $0x28] sm:$0xff] %v4033
        %4172 = vst [vmem:[%s325 + $0x30] sm:$0xff] %v4038
        %4173 = vst [vmem:[%s325 + $0x38] sm:$0xff] %v4043
        %4174 = vst [vmem:[%s325 + $0x40] sm:$0xff] %v4048
        %4175 = vst [vmem:[%s325 + $0x48] sm:$0xff] %v4053
        %4176 = vst [vmem:[%s325 + $0x50] sm:$0xff] %v4058
        %4177 = vst [vmem:[%s325 + $0x58] sm:$0xff] %v4063
        %4178 = vst [vmem:[%s325 + $0x60] sm:$0xff] %v4068
        %4179 = vst [vmem:[%s325 + $0x68] sm:$0xff] %v4073
        %4180 = vst [vmem:[%s325 + $0x70] sm:$0xff] %v4078
        %4181 = vst [vmem:[%s325 + $0x78] sm:$0xff] %v4083
        %4182 = vst [vmem:[%s325 + $0x80] sm:$0xff] %v4088
        %4183 = vst [vmem:[%s325 + $0x88] sm:$0xff] %v4093
        %4184 = vst [vmem:[%s325 + $0x90] sm:$0xff] %v4098
        %4185 = vst [vmem:[%s325 + $0x98] sm:$0xff] %v4103
        %4186 = vst [vmem:[%s325 + $0xa0] sm:$0xff] %v4108
        %4187 = vst [vmem:[%s325 + $0xa8] sm:$0xff] %v4113
        %4188 = vst [vmem:[%s325 + $0xb0] sm:$0xff] %v4118
        %4189 = vst [vmem:[%s325 + $0xb8] sm:$0xff] %v4123
        %4190 = vst [vmem:[%s325 + $0xc0] sm:$0xff] %v4128
        %4191 = vst [vmem:[%s325 + $0xc8] sm:$0xff] %v4133
        %4192 = vst [vmem:[%s325 + $0xd0] sm:$0xff] %v4138
        %4193 = vst [vmem:[%s325 + $0xd8] sm:$0xff] %v4143
        %4194 = vst [vmem:[%s325 + $0xe0] sm:$0xff] %v4148
        %4195 = vst [vmem:[%s325 + $0xe8] sm:$0xff] %v4153
        %4196 = vst [vmem:[%s325 + $0xf0] sm:$0xff] %v4158
        %4197 = vst [vmem:[%s325 + $0xf8] sm:$0xff] %v4163
        %s4198 = sand.u32 %s176, 1
        %s4199 = scalar_lea.sflag [#allocation4], %s4198
        %s4200 = sand.u32 %s176, 1
        %s4201 = smul.addr %s4200, 256
        %s4202 = scalar_lea.vmem [#allocation11], %s4201
        // Predicated region
        $region65: #{tpu_custom_call.1} parent=43 // pred_check
          %p4203 = pneg %p186
        $region66: #{tpu_custom_call.1} parent=43 // pred_check_branch
          %4205 = sbr.rel (%p4203) target = $region68
        $region67: #{tpu_custom_call.1} parent=43 // pred_region
          %s4206 = smul.u32 32, %s28
          %s4208 = ssub.s32 4096, 4096
          %4209 = vsyncadd %s4199, %s4208
          %s4210 = smul.addr %s27, 32
          %s4211 = sadd.s32 %s4206, %s4210
          %s4212 = smul.addr %s4211, 128
          %s4213 = scalar_lea.hbm %s6, %s4212
          %s4214 = sshll.u32 %s4202, 4
          %s4215 = int_to_ptr.vmem [resolvable:$true] %s4214
          %4220 = dma.vmem_to_hbm [thread:$0]  %s4215, 4096, %s4213, %s4199, 128, 128, 8
        $region68: #{tpu_custom_call.1} parent=43 // pred_fallthru
          _
      $region44: #{tpu_custom_call.1} parent=5 // pred_fallthru
        _
      %p4221 = scmp.le.s32.totalorder 2, %s18
      // Predicated region
      $region69: #{tpu_custom_call.1} parent=5 // pred_check
        %p4222 = pneg %p4221
      $region70: #{tpu_custom_call.1} parent=5 // pred_check_branch
        %4224 = sbr.rel (%p4222) target = $region72
      $region71: #{tpu_custom_call.1} parent=5 // pred_region
        %s4225 = ssub.s32 %s18, 2
        // Predicated region
        $region73: #{tpu_custom_call.1} parent=71 // pred_check
          %p4226 = pneg %p192
        $region74: #{tpu_custom_call.1} parent=71 // pred_check_branch
          %4228 = sbr.rel (%p4226) target = $region76
        $region75: #{tpu_custom_call.1} parent=71 // pred_region
          %s4229 = sand.u32 %s177, 1
          %s4230 = scalar_lea.sflag [#allocation4], %s4229
          %s4231 = sand.u32 %s177, 1
          %s4232 = smul.addr %s4231, 256
          %s4233 = scalar_lea.vmem [#allocation11], %s4232
          %4234 = dma.done %s4230, 4096
        $region76: #{tpu_custom_call.1} parent=71 // pred_fallthru
          _
      $region72: #{tpu_custom_call.1} parent=5 // pred_fallthru
        _
    $region6: #{tpu_custom_call.1} parent=1 // loop_footer
      %s22 = sadd.s32 1, %s18
    $region7: #{tpu_custom_call.1} parent=1 // loop_footer_branch
      %17 = sbr.rel target = $region3
    $region8: #{tpu_custom_call.1} parent=1 // loop_exit
      _
    %4235 = vsyncpa [#allocation3], 1
    %s4236 = scalar_lea.sflag [#allocation3], 1
    %4237 = vsyncpa %s4236, 1
    %4238 = vsyncpa [#allocation6], 1
    %4239 = vsyncpa [#allocation9], 1
    %4240 = vsyncpa [#allocation4], 1
    %s4241 = scalar_lea.sflag [#allocation4], 1
    %4242 = vsyncpa %s4241, 1

</llo_original>
